<compile_context>
chip_gen: v5e
topology: v5e:2x2
jax: 0.10.0
libtpu: 0.0.40
codegen_flags: <defaults>
</compile_context>

<pallas_src>
import functools

import jax
import jax.numpy as jnp
import numpy as np
from jax import lax
from jax.experimental import pallas as pl
from jax.experimental.pallas import tpu as pltpu


# ----------------------------- Pallas kernel ------------------------------- #
def conv_bn_relu_kernel(x_ref, w_ref, b_ref, o_ref, *, k, s, OH, OW):
    """Fused im2col Conv2d + BatchNorm(eval) + ReLU for one batch element.

    x_ref: (Hp, Wp, C)   zero-padded NHWC input slab, bf16
    w_ref: (k*k, C, OC)  conv weight with the BN scale folded in, bf16
    b_ref: (1, OC)       folded bias ((conv_b - mean) * scale + beta), f32
    o_ref: (OH, OW, OC)  f32
    """
    C = x_ref.shape[-1]
    OC = o_ref.shape[-1]
    acc = jnp.zeros((OH * OW, OC), jnp.float32)
    # k*k shifted windows -> accumulating (OH*OW, C) x (C, OC) MXU dots (f32 acc).
    for i in range(k):
        for j in range(k):
            if s == 1:
                win = x_ref[pl.ds(i, OH), pl.ds(j, OW), :]
            else:  # strided output windows (not exercised by the s=1 test config)
                win = x_ref[pl.ds(i, OH, s), pl.ds(j, OW, s), :]
            acc = acc + jnp.dot(win.reshape(OH * OW, C), w_ref[i * k + j],
                                preferred_element_type=jnp.float32)
    out = jnp.maximum(acc + b_ref[...], 0.0)
    o_ref[...] = out.reshape(OH, OW, OC).astype(o_ref.dtype)


# ------------------------------- helpers ------------------------------------ #
def _vmem_limit_bytes():
    """Hardware-derived VMEM limit: half of physical, capped at 64 MiB."""
    try:
        cap = pltpu.get_tpu_info().vmem_capacity_bytes
    except Exception:
        cap = 128 * 1024 * 1024
    return int(min(64 * 1024 * 1024, cap // 2))


# -------------------------------- wrapper ----------------------------------- #
@functools.partial(jax.jit, static_argnames=("k", "s", "p"))
def conv2d_bn_relu(x, weight, conv_bias, bn_gamma, bn_beta, bn_mean, bn_var,
                   *, k, s, p, eps=1e-5):
    """Conv2d(k, s, p) + BatchNorm2d(eval) + ReLU.  x: (N, C, H, W) f32, out NCHW f32."""
    N, C, H, W = x.shape
    OC = weight.shape[0]
    OH = (H + 2 * p - k) // s + 1
    OW = (W + 2 * p - k) // s + 1
    Hp, Wp = H + 2 * p, W + 2 * p

    # NHWC, bf16, spatial zero-pad.  No im2col patch matrix is ever materialized in HBM.
    xn = jnp.transpose(x, (0, 2, 3, 1)).astype(jnp.bfloat16)          # (N, H, W, C)
    xp = jnp.pad(xn, ((0, 0), (p, p), (p, p), (0, 0)))                # (N, Hp, Wp, C)

    # Fold conv bias + BN (eval mode).  Scale fold done in f32; bf16 cast only at the end.
    scale = bn_gamma / jnp.sqrt(bn_var + eps)                          # (OC,) f32
    bias = ((conv_bias - bn_mean) * scale + bn_beta).reshape(1, OC).astype(jnp.float32)
    w_kkco = jnp.transpose(weight, (2, 3, 1, 0)) * scale.reshape(1, 1, 1, OC)
    w_kkco = w_kkco.reshape(k * k, C, OC).astype(jnp.bfloat16)         # (k*k, C, OC)

    cost = pl.CostEstimate(
        flops=2 * N * OH * OW * k * k * C * OC,
        transcendentals=0,
        bytes_accessed=(xp.size * 2 + w_kkco.size * 2 + bias.size * 4
                        + N * OH * OW * OC * 4),
    )

    kernel = functools.partial(conv_bn_relu_kernel, k=k, s=s, OH=OH, OW=OW)
    out_nhwc = pl.pallas_call(
        kernel,
        out_shape=jax.ShapeDtypeStruct((N, OH, OW, OC), jnp.float32),
        grid_spec=pltpu.PrefetchScalarGridSpec(
            num_scalar_prefetch=0,
            grid=(N,),
            in_specs=[
                # One padded NHWC slab per batch element (full-extent trailing dims).
                pl.BlockSpec((None, Hp, Wp, C), lambda n: (n, 0, 0, 0)),
                # Grid-invariant weight / bias: constant index_map -> fetched once.
                pl.BlockSpec((k * k, C, OC), lambda n: (0, 0, 0)),
                pl.BlockSpec((1, OC), lambda n: (0, 0)),
            ],
            out_specs=pl.BlockSpec((None, OH, OW, OC), lambda n: (n, 0, 0, 0)),
        ),
        compiler_params=pltpu.CompilerParams(
            dimension_semantics=("parallel",),
            vmem_limit_bytes=_vmem_limit_bytes(),
        ),
        cost_estimate=cost,
    )(xp, w_kkco, bias)

    # Module interface is NCHW f32 (keeping NHWC across layers would drop this transpose).
    return jnp.transpose(out_nhwc, (0, 3, 1, 2))


# ------------------------------ reference ---------------------------------- #
def _reference(x, weight, conv_bias, bn_gamma, bn_beta, bn_mean, bn_var, k, s, p, eps=1e-5):
    y = lax.conv_general_dilated(
        x, weight, window_strides=(s, s), padding=[(p, p), (p, p)],
        dimension_numbers=("NCHW", "OIHW", "NCHW"))
    y = y + conv_bias.reshape(1, -1, 1, 1)
    scale = bn_gamma / jnp.sqrt(bn_var + eps)
    y = (y - bn_mean.reshape(1, -1, 1, 1)) * scale.reshape(1, -1, 1, 1) + bn_beta.reshape(1, -1, 1, 1)
    return jnp.maximum(y, 0.0)


# --------------------------------- main ------------------------------------ #
if __name__ == "__main__":
    # Module config: Conv2d(in_channels=4, out_channels=8, k=3, s=1, p=1,
    #                       activation=True, batch_norm=True)
    N, C, H, W = 2, 4, 16, 16
    OC, K_SIZE, STRIDE, PAD = 8, 3, 1, 1

    key = jax.random.PRNGKey(0)
    kx, kw, kb = jax.random.split(key, 3)
    x = jax.random.normal(kx, (N, C, H, W), dtype=jnp.float32)
    weight = jax.random.normal(kw, (OC, C, K_SIZE, K_SIZE), dtype=jnp.float32) * 0.1
    conv_bias = jax.random.normal(kb, (OC,), dtype=jnp.float32) * 0.1

    # Deterministic BatchNorm2d params (PyTorch default init, eval-mode running stats).
    bn_gamma = jnp.ones((OC,), jnp.float32)
    bn_beta = jnp.zeros((OC,), jnp.float32)
    bn_mean = jnp.zeros((OC,), jnp.float32)
    bn_var = jnp.ones((OC,), jnp.float32)

    out = conv2d_bn_relu(x, weight, conv_bias, bn_gamma, bn_beta, bn_mean, bn_var,
                         k=K_SIZE, s=STRIDE, p=PAD)
    out = jax.block_until_ready(out)

    ref = _reference(x, weight, conv_bias, bn_gamma, bn_beta, bn_mean, bn_var,
                     K_SIZE, STRIDE, PAD)
    # bf16 matmul operands with f32 accumulation: relaxed tolerance vs f32 reference.
    np.testing.assert_allclose(np.asarray(out), np.asarray(ref), rtol=3e-2, atol=3e-2)

    print("KERNEL_OK")
</pallas_src>

<mosaic_0001>
module attributes {stable_mosaic.version = 11 : i64} {
  func.func @conv_bn_relu_kernel(%arg0: i32, %arg1: memref<1x18x18x4xbf16, #tpu.memory_space<vmem>>, %arg2: memref<9x4x8xbf16, #tpu.memory_space<vmem>>, %arg3: memref<1x8xf32, #tpu.memory_space<vmem>>, %arg4: memref<1x16x16x8xf32, #tpu.memory_space<vmem>>) attributes {dimension_semantics = [#tpu.dimension_semantics<parallel>], iteration_bounds = array<i64: 2>, scalar_prefetch = 0 : i64, scratch_operands = 0 : i64, tpu.core_type = #tpu.core_type<tc>, window_params = [{transform_indices = @transform_0, window_bounds = array<i64: 1, 18, 18, 4>}, {pipeline_mode = #tpu.pipeline_mode<synchronous>, transform_indices = @transform_1, window_bounds = array<i64: 9, 4, 8>}, {pipeline_mode = #tpu.pipeline_mode<synchronous>, transform_indices = @transform_2, window_bounds = array<i64: 1, 8>}, {transform_indices = @transform_3, window_bounds = array<i64: 1, 16, 16, 8>}]} {
    %cst = arith.constant 0.000000e+00 : f32
    %0 = vector.broadcast %cst : f32 to vector<256x8xf32>
    %c0 = arith.constant 0 : index
    %c0_0 = arith.constant 0 : index
    %c0_1 = arith.constant 0 : index
    %c0_2 = arith.constant 0 : index
    %1 = vector.load %arg1[%c0, %c0_0, %c0_1, %c0_2] : memref<1x18x18x4xbf16, #tpu.memory_space<vmem>>, vector<1x16x16x4xbf16>
    %2 = vector.shape_cast %1 : vector<1x16x16x4xbf16> to vector<16x16x4xbf16>
    %3 = vector.shape_cast %2 : vector<16x16x4xbf16> to vector<256x4xbf16>
    %c0_3 = arith.constant 0 : index
    %c0_4 = arith.constant 0 : index
    %c0_5 = arith.constant 0 : index
    %4 = vector.load %arg2[%c0_3, %c0_4, %c0_5] : memref<9x4x8xbf16, #tpu.memory_space<vmem>>, vector<1x4x8xbf16>
    %5 = vector.shape_cast %4 : vector<1x4x8xbf16> to vector<4x8xbf16>
    %cst_6 = arith.constant dense<0.000000e+00> : vector<256x8xf32>
    %6 = tpu.matmul %3, %5, %cst_6 {dimension_numbers = #tpu.dot_dimension_numbers<[1], [0], [0], [1], [0, 0, 1, 1], [], []>} : vector<256x4xbf16>, vector<4x8xbf16>, vector<256x8xf32> -> vector<256x8xf32>
    %7 = arith.addf %0, %6 : vector<256x8xf32>
    %c0_7 = arith.constant 0 : index
    %c0_8 = arith.constant 0 : index
    %c1 = arith.constant 1 : index
    %c0_9 = arith.constant 0 : index
    %8 = vector.load %arg1[%c0_7, %c0_8, %c1, %c0_9] : memref<1x18x18x4xbf16, #tpu.memory_space<vmem>>, vector<1x16x16x4xbf16>
    %9 = vector.shape_cast %8 : vector<1x16x16x4xbf16> to vector<16x16x4xbf16>
    %10 = vector.shape_cast %9 : vector<16x16x4xbf16> to vector<256x4xbf16>
    %c1_10 = arith.constant 1 : index
    %c0_11 = arith.constant 0 : index
    %c0_12 = arith.constant 0 : index
    %11 = vector.load %arg2[%c1_10, %c0_11, %c0_12] : memref<9x4x8xbf16, #tpu.memory_space<vmem>>, vector<1x4x8xbf16>
    %12 = vector.shape_cast %11 : vector<1x4x8xbf16> to vector<4x8xbf16>
    %cst_13 = arith.constant dense<0.000000e+00> : vector<256x8xf32>
    %13 = tpu.matmul %10, %12, %cst_13 {dimension_numbers = #tpu.dot_dimension_numbers<[1], [0], [0], [1], [0, 0, 1, 1], [], []>} : vector<256x4xbf16>, vector<4x8xbf16>, vector<256x8xf32> -> vector<256x8xf32>
    %14 = arith.addf %7, %13 : vector<256x8xf32>
    %c0_14 = arith.constant 0 : index
    %c0_15 = arith.constant 0 : index
    %c2 = arith.constant 2 : index
    %c0_16 = arith.constant 0 : index
    %15 = vector.load %arg1[%c0_14, %c0_15, %c2, %c0_16] : memref<1x18x18x4xbf16, #tpu.memory_space<vmem>>, vector<1x16x16x4xbf16>
    %16 = vector.shape_cast %15 : vector<1x16x16x4xbf16> to vector<16x16x4xbf16>
    %17 = vector.shape_cast %16 : vector<16x16x4xbf16> to vector<256x4xbf16>
    %c2_17 = arith.constant 2 : index
    %c0_18 = arith.constant 0 : index
    %c0_19 = arith.constant 0 : index
    %18 = vector.load %arg2[%c2_17, %c0_18, %c0_19] : memref<9x4x8xbf16, #tpu.memory_space<vmem>>, vector<1x4x8xbf16>
    %19 = vector.shape_cast %18 : vector<1x4x8xbf16> to vector<4x8xbf16>
    %cst_20 = arith.constant dense<0.000000e+00> : vector<256x8xf32>
    %20 = tpu.matmul %17, %19, %cst_20 {dimension_numbers = #tpu.dot_dimension_numbers<[1], [0], [0], [1], [0, 0, 1, 1], [], []>} : vector<256x4xbf16>, vector<4x8xbf16>, vector<256x8xf32> -> vector<256x8xf32>
    %21 = arith.addf %14, %20 : vector<256x8xf32>
    %c0_21 = arith.constant 0 : index
    %c1_22 = arith.constant 1 : index
    %c0_23 = arith.constant 0 : index
    %c0_24 = arith.constant 0 : index
    %22 = vector.load %arg1[%c0_21, %c1_22, %c0_23, %c0_24] : memref<1x18x18x4xbf16, #tpu.memory_space<vmem>>, vector<1x16x16x4xbf16>
    %23 = vector.shape_cast %22 : vector<1x16x16x4xbf16> to vector<16x16x4xbf16>
    %24 = vector.shape_cast %23 : vector<16x16x4xbf16> to vector<256x4xbf16>
    %c3 = arith.constant 3 : index
    %c0_25 = arith.constant 0 : index
    %c0_26 = arith.constant 0 : index
    %25 = vector.load %arg2[%c3, %c0_25, %c0_26] : memref<9x4x8xbf16, #tpu.memory_space<vmem>>, vector<1x4x8xbf16>
    %26 = vector.shape_cast %25 : vector<1x4x8xbf16> to vector<4x8xbf16>
    %cst_27 = arith.constant dense<0.000000e+00> : vector<256x8xf32>
    %27 = tpu.matmul %24, %26, %cst_27 {dimension_numbers = #tpu.dot_dimension_numbers<[1], [0], [0], [1], [0, 0, 1, 1], [], []>} : vector<256x4xbf16>, vector<4x8xbf16>, vector<256x8xf32> -> vector<256x8xf32>
    %28 = arith.addf %21, %27 : vector<256x8xf32>
    %c0_28 = arith.constant 0 : index
    %c1_29 = arith.constant 1 : index
    %c1_30 = arith.constant 1 : index
    %c0_31 = arith.constant 0 : index
    %29 = vector.load %arg1[%c0_28, %c1_29, %c1_30, %c0_31] : memref<1x18x18x4xbf16, #tpu.memory_space<vmem>>, vector<1x16x16x4xbf16>
    %30 = vector.shape_cast %29 : vector<1x16x16x4xbf16> to vector<16x16x4xbf16>
    %31 = vector.shape_cast %30 : vector<16x16x4xbf16> to vector<256x4xbf16>
    %c4 = arith.constant 4 : index
    %c0_32 = arith.constant 0 : index
    %c0_33 = arith.constant 0 : index
    %32 = vector.load %arg2[%c4, %c0_32, %c0_33] : memref<9x4x8xbf16, #tpu.memory_space<vmem>>, vector<1x4x8xbf16>
    %33 = vector.shape_cast %32 : vector<1x4x8xbf16> to vector<4x8xbf16>
    %cst_34 = arith.constant dense<0.000000e+00> : vector<256x8xf32>
    %34 = tpu.matmul %31, %33, %cst_34 {dimension_numbers = #tpu.dot_dimension_numbers<[1], [0], [0], [1], [0, 0, 1, 1], [], []>} : vector<256x4xbf16>, vector<4x8xbf16>, vector<256x8xf32> -> vector<256x8xf32>
    %35 = arith.addf %28, %34 : vector<256x8xf32>
    %c0_35 = arith.constant 0 : index
    %c1_36 = arith.constant 1 : index
    %c2_37 = arith.constant 2 : index
    %c0_38 = arith.constant 0 : index
    %36 = vector.load %arg1[%c0_35, %c1_36, %c2_37, %c0_38] : memref<1x18x18x4xbf16, #tpu.memory_space<vmem>>, vector<1x16x16x4xbf16>
    %37 = vector.shape_cast %36 : vector<1x16x16x4xbf16> to vector<16x16x4xbf16>
    %38 = vector.shape_cast %37 : vector<16x16x4xbf16> to vector<256x4xbf16>
    %c5 = arith.constant 5 : index
    %c0_39 = arith.constant 0 : index
    %c0_40 = arith.constant 0 : index
    %39 = vector.load %arg2[%c5, %c0_39, %c0_40] : memref<9x4x8xbf16, #tpu.memory_space<vmem>>, vector<1x4x8xbf16>
    %40 = vector.shape_cast %39 : vector<1x4x8xbf16> to vector<4x8xbf16>
    %cst_41 = arith.constant dense<0.000000e+00> : vector<256x8xf32>
    %41 = tpu.matmul %38, %40, %cst_41 {dimension_numbers = #tpu.dot_dimension_numbers<[1], [0], [0], [1], [0, 0, 1, 1], [], []>} : vector<256x4xbf16>, vector<4x8xbf16>, vector<256x8xf32> -> vector<256x8xf32>
    %42 = arith.addf %35, %41 : vector<256x8xf32>
    %c0_42 = arith.constant 0 : index
    %c2_43 = arith.constant 2 : index
    %c0_44 = arith.constant 0 : index
    %c0_45 = arith.constant 0 : index
    %43 = vector.load %arg1[%c0_42, %c2_43, %c0_44, %c0_45] : memref<1x18x18x4xbf16, #tpu.memory_space<vmem>>, vector<1x16x16x4xbf16>
    %44 = vector.shape_cast %43 : vector<1x16x16x4xbf16> to vector<16x16x4xbf16>
    %45 = vector.shape_cast %44 : vector<16x16x4xbf16> to vector<256x4xbf16>
    %c6 = arith.constant 6 : index
    %c0_46 = arith.constant 0 : index
    %c0_47 = arith.constant 0 : index
    %46 = vector.load %arg2[%c6, %c0_46, %c0_47] : memref<9x4x8xbf16, #tpu.memory_space<vmem>>, vector<1x4x8xbf16>
    %47 = vector.shape_cast %46 : vector<1x4x8xbf16> to vector<4x8xbf16>
    %cst_48 = arith.constant dense<0.000000e+00> : vector<256x8xf32>
    %48 = tpu.matmul %45, %47, %cst_48 {dimension_numbers = #tpu.dot_dimension_numbers<[1], [0], [0], [1], [0, 0, 1, 1], [], []>} : vector<256x4xbf16>, vector<4x8xbf16>, vector<256x8xf32> -> vector<256x8xf32>
    %49 = arith.addf %42, %48 : vector<256x8xf32>
    %c0_49 = arith.constant 0 : index
    %c2_50 = arith.constant 2 : index
    %c1_51 = arith.constant 1 : index
    %c0_52 = arith.constant 0 : index
    %50 = vector.load %arg1[%c0_49, %c2_50, %c1_51, %c0_52] : memref<1x18x18x4xbf16, #tpu.memory_space<vmem>>, vector<1x16x16x4xbf16>
    %51 = vector.shape_cast %50 : vector<1x16x16x4xbf16> to vector<16x16x4xbf16>
    %52 = vector.shape_cast %51 : vector<16x16x4xbf16> to vector<256x4xbf16>
    %c7 = arith.constant 7 : index
    %c0_53 = arith.constant 0 : index
    %c0_54 = arith.constant 0 : index
    %53 = vector.load %arg2[%c7, %c0_53, %c0_54] : memref<9x4x8xbf16, #tpu.memory_space<vmem>>, vector<1x4x8xbf16>
    %54 = vector.shape_cast %53 : vector<1x4x8xbf16> to vector<4x8xbf16>
    %cst_55 = arith.constant dense<0.000000e+00> : vector<256x8xf32>
    %55 = tpu.matmul %52, %54, %cst_55 {dimension_numbers = #tpu.dot_dimension_numbers<[1], [0], [0], [1], [0, 0, 1, 1], [], []>} : vector<256x4xbf16>, vector<4x8xbf16>, vector<256x8xf32> -> vector<256x8xf32>
    %56 = arith.addf %49, %55 : vector<256x8xf32>
    %c0_56 = arith.constant 0 : index
    %c2_57 = arith.constant 2 : index
    %c2_58 = arith.constant 2 : index
    %c0_59 = arith.constant 0 : index
    %57 = vector.load %arg1[%c0_56, %c2_57, %c2_58, %c0_59] : memref<1x18x18x4xbf16, #tpu.memory_space<vmem>>, vector<1x16x16x4xbf16>
    %58 = vector.shape_cast %57 : vector<1x16x16x4xbf16> to vector<16x16x4xbf16>
    %59 = vector.shape_cast %58 : vector<16x16x4xbf16> to vector<256x4xbf16>
    %c8 = arith.constant 8 : index
    %c0_60 = arith.constant 0 : index
    %c0_61 = arith.constant 0 : index
    %60 = vector.load %arg2[%c8, %c0_60, %c0_61] : memref<9x4x8xbf16, #tpu.memory_space<vmem>>, vector<1x4x8xbf16>
    %61 = vector.shape_cast %60 : vector<1x4x8xbf16> to vector<4x8xbf16>
    %cst_62 = arith.constant dense<0.000000e+00> : vector<256x8xf32>
    %62 = tpu.matmul %59, %61, %cst_62 {dimension_numbers = #tpu.dot_dimension_numbers<[1], [0], [0], [1], [0, 0, 1, 1], [], []>} : vector<256x4xbf16>, vector<4x8xbf16>, vector<256x8xf32> -> vector<256x8xf32>
    %63 = arith.addf %56, %62 : vector<256x8xf32>
    %c0_63 = arith.constant 0 : index
    %c0_64 = arith.constant 0 : index
    %64 = vector.load %arg3[%c0_63, %c0_64] : memref<1x8xf32, #tpu.memory_space<vmem>>, vector<1x8xf32>
    %65 = vector.broadcast %64 : vector<1x8xf32> to vector<256x8xf32>
    %66 = arith.addf %63, %65 : vector<256x8xf32>
    %cst_65 = arith.constant 0.000000e+00 : f32
    %67 = vector.broadcast %cst_65 : f32 to vector<256x8xf32>
    %68 = arith.maximumf %66, %67 : vector<256x8xf32>
    %69 = vector.shape_cast %68 : vector<256x8xf32> to vector<16x16x8xf32>
    %c0_66 = arith.constant 0 : index
    %c0_67 = arith.constant 0 : index
    %c0_68 = arith.constant 0 : index
    %c0_69 = arith.constant 0 : index
    %70 = vector.load %arg4[%c0_66, %c0_67, %c0_68, %c0_69] : memref<1x16x16x8xf32, #tpu.memory_space<vmem>>, vector<1x16x16x8xf32>
    %71 = vector.shape_cast %70 : vector<1x16x16x8xf32> to vector<16x16x8xf32>
    %72 = vector.shape_cast %69 : vector<16x16x8xf32> to vector<1x16x16x8xf32>
    tpu.vector_store %arg4[%c0_66, %c0_67, %c0_68, %c0_69], %72 {strides = array<i32>} : memref<1x16x16x8xf32, #tpu.memory_space<vmem>>, vector<1x16x16x8xf32>,
    return
  }
  func.func @transform_0(%arg0: i32) -> (i32, i32, i32, i32) {
    %c0_i32 = arith.constant 0 : i32
    %c0_i32_0 = arith.constant 0 : i32
    %c0_i32_1 = arith.constant 0 : i32
    %c0_i32_2 = arith.constant 0 : i32
    return %arg0, %c0_i32, %c0_i32_0, %c0_i32_1 : i32, i32, i32, i32
  }
  func.func @transform_1(%arg0: i32) -> (i32, i32, i32) {
    %c0_i32 = arith.constant 0 : i32
    %c0_i32_0 = arith.constant 0 : i32
    %c0_i32_1 = arith.constant 0 : i32
    %c0_i32_2 = arith.constant 0 : i32
    return %c0_i32, %c0_i32_0, %c0_i32_1 : i32, i32, i32
  }
  func.func @transform_2(%arg0: i32) -> (i32, i32) {
    %c0_i32 = arith.constant 0 : i32
    %c0_i32_0 = arith.constant 0 : i32
    %c0_i32_1 = arith.constant 0 : i32
    return %c0_i32, %c0_i32_0 : i32, i32
  }
  func.func @transform_3(%arg0: i32) -> (i32, i32, i32, i32) {
    %c0_i32 = arith.constant 0 : i32
    %c0_i32_0 = arith.constant 0 : i32
    %c0_i32_1 = arith.constant 0 : i32
    %c0_i32_2 = arith.constant 0 : i32
    return %arg0, %c0_i32, %c0_i32_0, %c0_i32_1 : i32, i32, i32, i32
  }
}

</mosaic_0001>

<llo_original>
// kernel: conv2d_bn_relu.1
$region0: #{conv2d_bn_relu.1}
  #allocation0 [shape = 'u32[]', space=smem, size = 0x4, offset = 0x4, fixed_abs, tag = 'smem constant byte address 0x4 - core index']
  #allocation1 [shape = 'u32[72,128]{1,0:T(1,128)}', space=vmem, size = 0x9000, scoped, tag = 'internal scratch']
  %s0 = inlined_call_operand.vmem [shape: bf16[2,18,18,4], index: 0, kind: input, shape index: {}]
  %s1 = inlined_call_operand.vmem [shape: bf16[9,4,8], index: 1, kind: input, shape index: {}]
  %s2 = inlined_call_operand.vmem [shape: f32[1,8], index: 2, kind: input, shape index: {}]
  %s3 = inlined_call_operand.vmem [shape: f32[2,16,16,8], index: 3, kind: output, shape index: {}]
  %s4 = sld [smem:[#allocation0]]
  $region45: #{conv2d_bn_relu.1} parent=0
    _
  %s6 = ssub.s32 1, %s4
  %s7 = scalar_select 0, %s6, %s4
  loop: start=0, step=1, limit=4
  $region2: #{conv2d_bn_relu.1} parent=0 // loop_pre_header
    _
  $region3: #{conv2d_bn_relu.1} parent=0 // loop_header
    %s9 = sphi 0, %s13
    %p10 = scmp.ge.s32.totalorder %s9, 4
    %s19 = sphi 0, %s21
    %s22 = sphi 0, %s19
    %s23 = sphi 0, %s22
    %s39 = sphi 0, %s23
    %s43 = sphi 0, %s43
    %s45 = sphi 0, %s43
    %s46 = sphi 0, %s45
    %s60 = sphi 0, %s46
    %s64 = sphi 0, %s64
    %s66 = sphi 0, %s64
    %s67 = sphi 0, %s66
    %s81 = sphi 0, %s67
    %s87 = sphi 0, %s89
    %s90 = sphi 0, %s87
    %s91 = sphi 0, %s90
    %s107 = sphi 0, %s91
  $region4: #{conv2d_bn_relu.1} parent=0 // loop_header_branch
    %12 = sbr.rel (%p10) target = $region8
  $region5: #{conv2d_bn_relu.1} parent=0 // loop_body
    %s14 = ssub.s32 %s9, 1
    %s15 = ssub.s32 %s9, 2
    %s16 = sadd.s32 %s9, 1
    %s17 = ssub.s32 %s9, %s16
    %p18 = scmp.eq.s32.totalorder %s17, 0
    %s20 = sadd.s32 %s19, 1
    %s21 = scalar_select %p18, %s19, %s20
    %p24 = pneg %p18
    %p25 = scmp.eq.s32.totalorder %s9, 1
    %p26 = por %p24, %p25
    %p27 = scmp.ne.s32.totalorder %s19, %s22
    %p28 = scmp.eq.s32.totalorder %s9, 0
    %p29 = por %p27, %p28
    %p30 = scmp.ne.s32.totalorder %s19, %s22
    %p31 = scmp.eq.s32.totalorder %s14, 1
    %p32 = por %p30, %p31
    %p33 = scmp.ne.s32.totalorder %s22, %s23
    %p34 = scmp.eq.s32.totalorder %s14, 0
    %p35 = por %p33, %p34
    %p36 = scmp.ne.s32.totalorder %s22, %s23
    %p37 = scmp.eq.s32.totalorder %s15, 1
    %p38 = por %p36, %p37
    %p40 = scmp.ne.s32.totalorder %s23, %s39
    %p41 = scmp.eq.s32.totalorder %s15, 0
    %p42 = por %p40, %p41
    %s44 = sadd.s32 %s43, 1
    %p47 = scmp.eq.s32.totalorder %s9, 1
    %p48 = scmp.ne.s32.totalorder %s43, %s45
    %p49 = scmp.eq.s32.totalorder %s9, 0
    %p50 = por %p48, %p49
    %p51 = scmp.ne.s32.totalorder %s43, %s45
    %p52 = scmp.eq.s32.totalorder %s14, 1
    %p53 = por %p51, %p52
    %p54 = scmp.ne.s32.totalorder %s45, %s46
    %p55 = scmp.eq.s32.totalorder %s14, 0
    %p56 = por %p54, %p55
    %p57 = scmp.ne.s32.totalorder %s45, %s46
    %p58 = scmp.eq.s32.totalorder %s15, 1
    %p59 = por %p57, %p58
    %p61 = scmp.ne.s32.totalorder %s46, %s60
    %p62 = scmp.eq.s32.totalorder %s15, 0
    %p63 = por %p61, %p62
    %s65 = sadd.s32 %s64, 1
    %p68 = scmp.eq.s32.totalorder %s9, 1
    %p69 = scmp.ne.s32.totalorder %s64, %s66
    %p70 = scmp.eq.s32.totalorder %s9, 0
    %p71 = por %p69, %p70
    %p72 = scmp.ne.s32.totalorder %s64, %s66
    %p73 = scmp.eq.s32.totalorder %s14, 1
    %p74 = por %p72, %p73
    %p75 = scmp.ne.s32.totalorder %s66, %s67
    %p76 = scmp.eq.s32.totalorder %s14, 0
    %p77 = por %p75, %p76
    %p78 = scmp.ne.s32.totalorder %s66, %s67
    %p79 = scmp.eq.s32.totalorder %s15, 1
    %p80 = por %p78, %p79
    %p82 = scmp.ne.s32.totalorder %s67, %s81
    %p83 = scmp.eq.s32.totalorder %s15, 0
    %p84 = por %p82, %p83
    %s85 = ssub.s32 %s9, %s16
    %p86 = scmp.eq.s32.totalorder %s85, 0
    %s88 = sadd.s32 %s87, 1
    %s89 = scalar_select %p86, %s87, %s88
    %p92 = pneg %p86
    %p93 = scmp.eq.s32.totalorder %s9, 1
    %p94 = por %p92, %p93
    %p95 = scmp.ne.s32.totalorder %s87, %s90
    %p96 = scmp.eq.s32.totalorder %s9, 0
    %p97 = por %p95, %p96
    %p98 = scmp.ne.s32.totalorder %s87, %s90
    %p99 = scmp.eq.s32.totalorder %s14, 1
    %p100 = por %p98, %p99
    %p101 = scmp.ne.s32.totalorder %s90, %s91
    %p102 = scmp.eq.s32.totalorder %s14, 0
    %p103 = por %p101, %p102
    %p104 = scmp.ne.s32.totalorder %s90, %s91
    %p105 = scmp.eq.s32.totalorder %s15, 1
    %p106 = por %p104, %p105
    %p108 = scmp.ne.s32.totalorder %s91, %s107
    %p109 = scmp.eq.s32.totalorder %s15, 0
    %p110 = por %p108, %p109
    %p111 = scmp.le.s32.totalorder 1, %s9
    %p112 = scmp.lt.s32.totalorder %s9, 3
    %p113 = pnand %p111, %p112
    %p114 = pneg %p113
    // Predicated region
    $region9: #{conv2d_bn_relu.1} parent=5 // pred_check
      _
    $region10: #{conv2d_bn_relu.1} parent=5 // pred_check_branch
      %116 = sbr.rel (%p113) target = $region12
    $region11: #{conv2d_bn_relu.1} parent=5 // pred_region
      %s117 = ssub.s32 %s9, 1
      // Predicated region
      $region13: #{conv2d_bn_relu.1} parent=11 // pred_check
        %p118 = pneg %p56
      $region14: #{conv2d_bn_relu.1} parent=11 // pred_check_branch
        %120 = sbr.rel (%p118) target = $region16
      $region15: #{conv2d_bn_relu.1} parent=11 // pred_region
        _
      $region16: #{conv2d_bn_relu.1} parent=11 // pred_fallthru
        _
      // Predicated region
      $region17: #{conv2d_bn_relu.1} parent=11 // pred_check
        %p121 = pneg %p77
      $region18: #{conv2d_bn_relu.1} parent=11 // pred_check_branch
        %123 = sbr.rel (%p121) target = $region20
      $region19: #{conv2d_bn_relu.1} parent=11 // pred_region
        _
      $region20: #{conv2d_bn_relu.1} parent=11 // pred_fallthru
        _
    $region12: #{conv2d_bn_relu.1} parent=5 // pred_fallthru
      _
    %p124 = scmp.lt.s32.totalorder %s9, 2
    // Predicated region
    $region21: #{conv2d_bn_relu.1} parent=5 // pred_check
      %p125 = pneg %p124
    $region22: #{conv2d_bn_relu.1} parent=5 // pred_check_branch
      %127 = sbr.rel (%p125) target = $region24
    $region23: #{conv2d_bn_relu.1} parent=5 // pred_region
      // Predicated region
      $region25: #{conv2d_bn_relu.1} parent=23 // pred_check
        %p128 = pneg %p29
      $region26: #{conv2d_bn_relu.1} parent=23 // pred_check_branch
        %130 = sbr.rel (%p128) target = $region28
      $region27: #{conv2d_bn_relu.1} parent=23 // pred_region
        %p131 = scmp.lt.s32.totalorder %s9, 1
        %s132 = scalar_select %p131, %s9, 1
        %s133 = smul.addr %s132, 54
        %s134 = smul.addr %s133, 4
        %s135 = scalar_lea.vmem %s0, %s134
      $region28: #{conv2d_bn_relu.1} parent=23 // pred_fallthru
        _
    $region24: #{conv2d_bn_relu.1} parent=5 // pred_fallthru
      _
    %p136 = scmp.le.s32.totalorder 1, %s9
    %p137 = scmp.lt.s32.totalorder %s9, 3
    %p138 = pnand %p136, %p137
    %p139 = pneg %p138
    // Predicated region
    $region29: #{conv2d_bn_relu.1} parent=5 // pred_check
      _
    $region30: #{conv2d_bn_relu.1} parent=5 // pred_check_branch
      %141 = sbr.rel (%p138) target = $region32
    $region31: #{conv2d_bn_relu.1} parent=5 // pred_region
      %s142 = ssub.s32 %s9, 1
      %p143 = scmp.lt.s32.totalorder %s14, 1
      %s144 = scalar_select %p143, %s14, 1
      %s145 = smul.addr %s144, 54
      %s146 = smul.addr %s145, 4
      %s147 = scalar_lea.vmem %s0, %s146
      %p148 = pneg %p35
      %p149 = pneg %p32
      %p150 = pneg %p56
      %p151 = pneg %p53
      %p152 = pneg %p77
      %p153 = pneg %p74
      %p154 = pneg %p103
      %p155 = pneg %p100
      %p156 = scmp.lt.s32.totalorder %s14, 1
      %s157 = scalar_select %p156, %s14, 1
      %s158 = smul.addr %s157, 32
      %s159 = smul.addr %s158, 8
      %s160 = scalar_lea.vmem %s3, %s159
      %p161 = scmp.lt.s32.totalorder %s14, 1
      %s162 = scalar_select %p161, %s14, 1
      %s163 = smul.addr %s162, 54
      %s164 = smul.addr %s163, 4
      %s165 = scalar_lea.vmem %s0, %s164
      %p166 = scmp.lt.s32.totalorder %s14, 1
      %s167 = scalar_select %p166, %s14, 1
      %s168 = smul.addr %s167, 32
      %s169 = smul.addr %s168, 8
      %s170 = scalar_lea.vmem %s3, %s169
      %v172 = vld [vmem:[%s165] sm:$0xf]
      %v173 = vld [vmem:[%s165 + $0x4] sm:$0xf]
      %v174 = vld [vmem:[%s165 + $0xc] sm:$0xf]
      %v175 = vld [vmem:[%s165 + $0x10] sm:$0xf]
      %v176 = vld [vmem:[%s165 + $0x18] sm:$0xf]
      %v177 = vld [vmem:[%s165 + $0x1c] sm:$0xf]
      %v178 = vld [vmem:[%s165 + $0x24] sm:$0xf]
      %v179 = vld [vmem:[%s165 + $0x28] sm:$0xf]
      %v180 = vld [vmem:[%s165 + $0x30] sm:$0xf]
      %v181 = vld [vmem:[%s165 + $0x34] sm:$0xf]
      %v182 = vld [vmem:[%s165 + $0x3c] sm:$0xf]
      %v183 = vld [vmem:[%s165 + $0x40] sm:$0xf]
      %v184 = vld [vmem:[%s165 + $0x48] sm:$0xf]
      %v185 = vld [vmem:[%s165 + $0x4c] sm:$0xf]
      %v186 = vld [vmem:[%s165 + $0x54] sm:$0xf]
      %v187 = vld [vmem:[%s165 + $0x58] sm:$0xf]
      %v188 = vld [vmem:[%s165 + $0x60] sm:$0xf]
      %v189 = vld [vmem:[%s165 + $0x64] sm:$0xf]
      %v190 = vld [vmem:[%s165 + $0x6c] sm:$0xf]
      %v191 = vld [vmem:[%s165 + $0x70] sm:$0xf]
      %v192 = vld [vmem:[%s165 + $0x78] sm:$0xf]
      %v193 = vld [vmem:[%s165 + $0x7c] sm:$0xf]
      %v194 = vld [vmem:[%s165 + $0x84] sm:$0xf]
      %v195 = vld [vmem:[%s165 + $0x88] sm:$0xf]
      %v196 = vld [vmem:[%s165 + $0x90] sm:$0xf]
      %v197 = vld [vmem:[%s165 + $0x94] sm:$0xf]
      %v198 = vld [vmem:[%s165 + $0x9c] sm:$0xf]
      %v199 = vld [vmem:[%s165 + $0xa0] sm:$0xf]
      %v200 = vld [vmem:[%s165 + $0xa8] sm:$0xf]
      %v201 = vld [vmem:[%s165 + $0xac] sm:$0xf]
      %v202 = vld [vmem:[%s165 + $0xb4] sm:$0xf]
      %v203 = vld [vmem:[%s165 + $0xb8] sm:$0xf]
      %v204 = vld [vmem:[%s1] sm:$0x3]
      %v205 = vld [vmem:[%s165 + $0x8] sm:$0x1]
      %v206 = vld [vmem:[%s165 + $0x14] sm:$0x1]
      %v207 = vld [vmem:[%s165 + $0x20] sm:$0x1]
      %v208 = vld [vmem:[%s165 + $0x2c] sm:$0x1]
      %v209 = vld [vmem:[%s165 + $0x38] sm:$0x1]
      %v210 = vld [vmem:[%s165 + $0x44] sm:$0x1]
      %v211 = vld [vmem:[%s165 + $0x50] sm:$0x1]
      %v212 = vld [vmem:[%s165 + $0x5c] sm:$0x1]
      %v213 = vld [vmem:[%s165 + $0x68] sm:$0x1]
      %v214 = vld [vmem:[%s165 + $0x74] sm:$0x1]
      %v215 = vld [vmem:[%s165 + $0x80] sm:$0x1]
      %v216 = vld [vmem:[%s165 + $0x8c] sm:$0x1]
      %v217 = vld [vmem:[%s165 + $0x98] sm:$0x1]
      %v218 = vld [vmem:[%s165 + $0xa4] sm:$0x1]
      %v219 = vld [vmem:[%s165 + $0xb0] sm:$0x1]
      %v220 = vld [vmem:[%s165 + $0xbc] sm:$0x1]
      %vm221 = vsmask.f32 3328
      %vm222 = vsmask.f32 7440
      %vm223 = vmor %vm221, %vm222
      %v225 = vshrl.u32 %v172, 16
      %v227 = vrot.slane %v225, 4
      %v228 = vshll.u32 %v172, 16
      %v230 = vrot.slane %v228, 5
      %v231 = vor.u32 %v227, %v230
      %v232 = vrot.slane %v231, 4
      %v234 = vshll.u32 %v173, 16
      %v236 = vrot.slane %v234, 5
      %v237 = vsel %vm223, %v232, %v236
      %v238 = vshrl.u32 %v173, 16
      %v240 = vrot.slane %v238, 4
      %v241 = vor.u32 %v240, %v236
      %v242 = vrot.slane %v241, 4
      %v244 = vshll.u32 %v205, 16
      %v246 = vrot.slane %v244, 5
      %v247 = vsel %vm223, %v242, %v246
      %v249 = vshrl.u32 %v174, 16
      %v251 = vrot.slane %v249, 4
      %v252 = vshll.u32 %v174, 16
      %v254 = vrot.slane %v252, 5
      %v255 = vor.u32 %v251, %v254
      %v256 = vrot.slane %v255, 4
      %v258 = vshll.u32 %v175, 16
      %v260 = vrot.slane %v258, 5
      %v261 = vsel %vm223, %v256, %v260
      %v262 = vshrl.u32 %v175, 16
      %v264 = vrot.slane %v262, 4
      %v265 = vor.u32 %v264, %v260
      %v266 = vrot.slane %v265, 4
      %v268 = vshll.u32 %v206, 16
      %v270 = vrot.slane %v268, 5
      %v271 = vsel %vm223, %v266, %v270
      %v273 = vshrl.u32 %v176, 16
      %v275 = vrot.slane %v273, 4
      %v276 = vshll.u32 %v176, 16
      %v278 = vrot.slane %v276, 5
      %v279 = vor.u32 %v275, %v278
      %v280 = vrot.slane %v279, 4
      %v282 = vshll.u32 %v177, 16
      %v284 = vrot.slane %v282, 5
      %v285 = vsel %vm223, %v280, %v284
      %v286 = vshrl.u32 %v177, 16
      %v288 = vrot.slane %v286, 4
      %v289 = vor.u32 %v288, %v284
      %v290 = vrot.slane %v289, 4
      %v292 = vshll.u32 %v207, 16
      %v294 = vrot.slane %v292, 5
      %v295 = vsel %vm223, %v290, %v294
      %v297 = vshrl.u32 %v178, 16
      %v299 = vrot.slane %v297, 4
      %v300 = vshll.u32 %v178, 16
      %v302 = vrot.slane %v300, 5
      %v303 = vor.u32 %v299, %v302
      %v304 = vrot.slane %v303, 4
      %v306 = vshll.u32 %v179, 16
      %v308 = vrot.slane %v306, 5
      %v309 = vsel %vm223, %v304, %v308
      %v310 = vshrl.u32 %v179, 16
      %v312 = vrot.slane %v310, 4
      %v313 = vor.u32 %v312, %v308
      %v314 = vrot.slane %v313, 4
      %v316 = vshll.u32 %v208, 16
      %v318 = vrot.slane %v316, 5
      %v319 = vsel %vm223, %v314, %v318
      %v321 = vshrl.u32 %v180, 16
      %v323 = vrot.slane %v321, 4
      %v324 = vshll.u32 %v180, 16
      %v326 = vrot.slane %v324, 5
      %v327 = vor.u32 %v323, %v326
      %v328 = vrot.slane %v327, 4
      %v330 = vshll.u32 %v181, 16
      %v332 = vrot.slane %v330, 5
      %v333 = vsel %vm223, %v328, %v332
      %v334 = vshrl.u32 %v181, 16
      %v336 = vrot.slane %v334, 4
      %v337 = vor.u32 %v336, %v332
      %v338 = vrot.slane %v337, 4
      %v340 = vshll.u32 %v209, 16
      %v342 = vrot.slane %v340, 5
      %v343 = vsel %vm223, %v338, %v342
      %v345 = vshrl.u32 %v182, 16
      %v347 = vrot.slane %v345, 4
      %v348 = vshll.u32 %v182, 16
      %v350 = vrot.slane %v348, 5
      %v351 = vor.u32 %v347, %v350
      %v352 = vrot.slane %v351, 4
      %v354 = vshll.u32 %v183, 16
      %v356 = vrot.slane %v354, 5
      %v357 = vsel %vm223, %v352, %v356
      %v358 = vshrl.u32 %v183, 16
      %v360 = vrot.slane %v358, 4
      %v361 = vor.u32 %v360, %v356
      %v362 = vrot.slane %v361, 4
      %v364 = vshll.u32 %v210, 16
      %v366 = vrot.slane %v364, 5
      %v367 = vsel %vm223, %v362, %v366
      %v369 = vshrl.u32 %v184, 16
      %v371 = vrot.slane %v369, 4
      %v372 = vshll.u32 %v184, 16
      %v374 = vrot.slane %v372, 5
      %v375 = vor.u32 %v371, %v374
      %v376 = vrot.slane %v375, 4
      %v378 = vshll.u32 %v185, 16
      %v380 = vrot.slane %v378, 5
      %v381 = vsel %vm223, %v376, %v380
      %v382 = vshrl.u32 %v185, 16
      %v384 = vrot.slane %v382, 4
      %v385 = vor.u32 %v384, %v380
      %v386 = vrot.slane %v385, 4
      %v388 = vshll.u32 %v211, 16
      %v390 = vrot.slane %v388, 5
      %v391 = vsel %vm223, %v386, %v390
      %v393 = vshrl.u32 %v186, 16
      %v395 = vrot.slane %v393, 4
      %v396 = vshll.u32 %v186, 16
      %v398 = vrot.slane %v396, 5
      %v399 = vor.u32 %v395, %v398
      %v400 = vrot.slane %v399, 4
      %v402 = vshll.u32 %v187, 16
      %v404 = vrot.slane %v402, 5
      %v405 = vsel %vm223, %v400, %v404
      %v406 = vshrl.u32 %v187, 16
      %v408 = vrot.slane %v406, 4
      %v409 = vor.u32 %v408, %v404
      %v410 = vrot.slane %v409, 4
      %v412 = vshll.u32 %v212, 16
      %v414 = vrot.slane %v412, 5
      %v415 = vsel %vm223, %v410, %v414
      %v417 = vshrl.u32 %v188, 16
      %v419 = vrot.slane %v417, 4
      %v420 = vshll.u32 %v188, 16
      %v422 = vrot.slane %v420, 5
      %v423 = vor.u32 %v419, %v422
      %v424 = vrot.slane %v423, 4
      %v426 = vshll.u32 %v189, 16
      %v428 = vrot.slane %v426, 5
      %v429 = vsel %vm223, %v424, %v428
      %v430 = vshrl.u32 %v189, 16
      %v432 = vrot.slane %v430, 4
      %v433 = vor.u32 %v432, %v428
      %v434 = vrot.slane %v433, 4
      %v436 = vshll.u32 %v213, 16
      %v438 = vrot.slane %v436, 5
      %v439 = vsel %vm223, %v434, %v438
      %v441 = vshrl.u32 %v190, 16
      %v443 = vrot.slane %v441, 4
      %v444 = vshll.u32 %v190, 16
      %v446 = vrot.slane %v444, 5
      %v447 = vor.u32 %v443, %v446
      %v448 = vrot.slane %v447, 4
      %v450 = vshll.u32 %v191, 16
      %v452 = vrot.slane %v450, 5
      %v453 = vsel %vm223, %v448, %v452
      %v454 = vshrl.u32 %v191, 16
      %v456 = vrot.slane %v454, 4
      %v457 = vor.u32 %v456, %v452
      %v458 = vrot.slane %v457, 4
      %v460 = vshll.u32 %v214, 16
      %v462 = vrot.slane %v460, 5
      %v463 = vsel %vm223, %v458, %v462
      %v465 = vshrl.u32 %v192, 16
      %v467 = vrot.slane %v465, 4
      %v468 = vshll.u32 %v192, 16
      %v470 = vrot.slane %v468, 5
      %v471 = vor.u32 %v467, %v470
      %v472 = vrot.slane %v471, 4
      %v474 = vshll.u32 %v193, 16
      %v476 = vrot.slane %v474, 5
      %v477 = vsel %vm223, %v472, %v476
      %v478 = vshrl.u32 %v193, 16
      %v480 = vrot.slane %v478, 4
      %v481 = vor.u32 %v480, %v476
      %v482 = vrot.slane %v481, 4
      %v484 = vshll.u32 %v215, 16
      %v486 = vrot.slane %v484, 5
      %v487 = vsel %vm223, %v482, %v486
      %v489 = vshrl.u32 %v194, 16
      %v491 = vrot.slane %v489, 4
      %v492 = vshll.u32 %v194, 16
      %v494 = vrot.slane %v492, 5
      %v495 = vor.u32 %v491, %v494
      %v496 = vrot.slane %v495, 4
      %v498 = vshll.u32 %v195, 16
      %v500 = vrot.slane %v498, 5
      %v501 = vsel %vm223, %v496, %v500
      %v502 = vshrl.u32 %v195, 16
      %v504 = vrot.slane %v502, 4
      %v505 = vor.u32 %v504, %v500
      %v506 = vrot.slane %v505, 4
      %v508 = vshll.u32 %v216, 16
      %v510 = vrot.slane %v508, 5
      %v511 = vsel %vm223, %v506, %v510
      %v513 = vshrl.u32 %v196, 16
      %v515 = vrot.slane %v513, 4
      %v516 = vshll.u32 %v196, 16
      %v518 = vrot.slane %v516, 5
      %v519 = vor.u32 %v515, %v518
      %v520 = vrot.slane %v519, 4
      %v522 = vshll.u32 %v197, 16
      %v524 = vrot.slane %v522, 5
      %v525 = vsel %vm223, %v520, %v524
      %v526 = vshrl.u32 %v197, 16
      %v528 = vrot.slane %v526, 4
      %v529 = vor.u32 %v528, %v524
      %v530 = vrot.slane %v529, 4
      %v532 = vshll.u32 %v217, 16
      %v534 = vrot.slane %v532, 5
      %v535 = vsel %vm223, %v530, %v534
      %v537 = vshrl.u32 %v198, 16
      %v539 = vrot.slane %v537, 4
      %v540 = vshll.u32 %v198, 16
      %v542 = vrot.slane %v540, 5
      %v543 = vor.u32 %v539, %v542
      %v544 = vrot.slane %v543, 4
      %v546 = vshll.u32 %v199, 16
      %v548 = vrot.slane %v546, 5
      %v549 = vsel %vm223, %v544, %v548
      %v550 = vshrl.u32 %v199, 16
      %v552 = vrot.slane %v550, 4
      %v553 = vor.u32 %v552, %v548
      %v554 = vrot.slane %v553, 4
      %v556 = vshll.u32 %v218, 16
      %v558 = vrot.slane %v556, 5
      %v559 = vsel %vm223, %v554, %v558
      %v561 = vshrl.u32 %v200, 16
      %v563 = vrot.slane %v561, 4
      %v564 = vshll.u32 %v200, 16
      %v566 = vrot.slane %v564, 5
      %v567 = vor.u32 %v563, %v566
      %v568 = vrot.slane %v567, 4
      %v570 = vshll.u32 %v201, 16
      %v572 = vrot.slane %v570, 5
      %v573 = vsel %vm223, %v568, %v572
      %v574 = vshrl.u32 %v201, 16
      %v576 = vrot.slane %v574, 4
      %v577 = vor.u32 %v576, %v572
      %v578 = vrot.slane %v577, 4
      %v580 = vshll.u32 %v219, 16
      %v582 = vrot.slane %v580, 5
      %v583 = vsel %vm223, %v578, %v582
      %v585 = vshrl.u32 %v202, 16
      %v587 = vrot.slane %v585, 4
      %v588 = vshll.u32 %v202, 16
      %v590 = vrot.slane %v588, 5
      %v591 = vor.u32 %v587, %v590
      %v592 = vrot.slane %v591, 4
      %v594 = vshll.u32 %v203, 16
      %v596 = vrot.slane %v594, 5
      %v597 = vsel %vm223, %v592, %v596
      %v598 = vshrl.u32 %v203, 16
      %v600 = vrot.slane %v598, 4
      %v601 = vor.u32 %v600, %v596
      %v602 = vrot.slane %v601, 4
      %v604 = vshll.u32 %v220, 16
      %v606 = vrot.slane %v604, 5
      %v607 = vsel %vm223, %v602, %v606
      %s608 = scalar_lea.vmem %s1, 2
      %v609 = vld [vmem:[%s608] sm:$0x3]
      %v610 = vunpack.c.l.b16 %v237
      %v611 = vunpack.c.l.b16 %v247
      %v612 = vunpack.c.l.b16 %v261
      %v613 = vunpack.c.l.b16 %v271
      %v614 = vunpack.c.l.b16 %v285
      %v615 = vunpack.c.l.b16 %v295
      %v616 = vunpack.c.l.b16 %v309
      %v617 = vunpack.c.l.b16 %v319
      %v618 = vunpack.c.l.b16 %v333
      %v619 = vunpack.c.l.b16 %v343
      %v620 = vunpack.c.l.b16 %v357
      %v621 = vunpack.c.l.b16 %v367
      %v622 = vunpack.c.l.b16 %v381
      %v623 = vunpack.c.l.b16 %v391
      %v624 = vunpack.c.l.b16 %v405
      %v625 = vunpack.c.l.b16 %v415
      %v626 = vunpack.c.l.b16 %v429
      %v627 = vunpack.c.l.b16 %v439
      %v628 = vunpack.c.l.b16 %v453
      %v629 = vunpack.c.l.b16 %v463
      %v630 = vunpack.c.l.b16 %v477
      %v631 = vunpack.c.l.b16 %v487
      %v632 = vunpack.c.l.b16 %v501
      %v633 = vunpack.c.l.b16 %v511
      %v634 = vunpack.c.l.b16 %v525
      %v635 = vunpack.c.l.b16 %v535
      %v636 = vunpack.c.l.b16 %v549
      %v637 = vunpack.c.l.b16 %v559
      %v638 = vunpack.c.l.b16 %v573
      %v639 = vunpack.c.l.b16 %v583
      %v640 = vunpack.c.l.b16 %v597
      %v641 = vunpack.c.l.b16 %v607
      %v642 = vpack.c.b16 %v611, %v610
      %v643 = vpack.c.b16 %v613, %v612
      %v644 = vpack.c.b16 %v615, %v614
      %v645 = vpack.c.b16 %v617, %v616
      %v646 = vpack.c.b16 %v619, %v618
      %v647 = vpack.c.b16 %v621, %v620
      %v648 = vpack.c.b16 %v623, %v622
      %v649 = vpack.c.b16 %v625, %v624
      %v650 = vpack.c.b16 %v627, %v626
      %v651 = vpack.c.b16 %v629, %v628
      %v652 = vpack.c.b16 %v631, %v630
      %v653 = vpack.c.b16 %v633, %v632
      %v654 = vpack.c.b16 %v635, %v634
      %v655 = vpack.c.b16 %v637, %v636
      %v656 = vpack.c.b16 %v639, %v638
      %v657 = vpack.c.b16 %v641, %v640
      %vm658 = vcmask 31744
      %v660 = vsel %vm658, %v642, 0
      %v663 = vsel %vm658, %v643, 0
      %v666 = vsel %vm658, %v644, 0
      %v669 = vsel %vm658, %v645, 0
      %v672 = vsel %vm658, %v646, 0
      %v675 = vsel %vm658, %v647, 0
      %v678 = vsel %vm658, %v648, 0
      %v681 = vsel %vm658, %v649, 0
      %v684 = vsel %vm658, %v650, 0
      %v687 = vsel %vm658, %v651, 0
      %v690 = vsel %vm658, %v652, 0
      %v693 = vsel %vm658, %v653, 0
      %v696 = vsel %vm658, %v654, 0
      %v699 = vsel %vm658, %v655, 0
      %v702 = vsel %vm658, %v656, 0
      %v705 = vsel %vm658, %v657, 0
      %vm707 = vcmask 1041408
      %v709 = vsel %vm707, %v609, 0
      %711 = vmatpush.bf16.msra.mxu0 0
      %712 = vmatpush.bf16.msra.mxu0 0
      %713 = vmatpush.bf16.msra.mxu0 0
      %714 = vmatpush.bf16.msra.mxu0 0
      %715 = vmatpush.bf16.msra.mxu0 0
      %716 = vmatpush.bf16.msra.mxu0 0
      %717 = vmatpush.bf16.msra.mxu0 0
      %718 = vmatpush.bf16.msra.mxu0 %v709
      %719 = vmatmul.bf16.gmra.mxu0 %v660
      %v720 = vpop.f32.mrf.mxu0
      %v721 = vadd.f32 0.0, %v720
      %v722 = vpop.f32.mrf.mxu0
      %v723 = vadd.f32 0.0, %v722
      %724 = vmatmul.bf16.gmra.mxu0 %v663
      %v725 = vpop.f32.mrf.mxu0
      %v726 = vadd.f32 0.0, %v725
      %v727 = vpop.f32.mrf.mxu0
      %v728 = vadd.f32 0.0, %v727
      %729 = vmatmul.bf16.gmra.mxu0 %v666
      %v730 = vpop.f32.mrf.mxu0
      %v731 = vadd.f32 0.0, %v730
      %v732 = vpop.f32.mrf.mxu0
      %v733 = vadd.f32 0.0, %v732
      %734 = vmatmul.bf16.gmra.mxu0 %v669
      %v735 = vpop.f32.mrf.mxu0
      %v736 = vadd.f32 0.0, %v735
      %v737 = vpop.f32.mrf.mxu0
      %v738 = vadd.f32 0.0, %v737
      %739 = vmatmul.bf16.gmra.mxu0 %v672
      %v740 = vpop.f32.mrf.mxu0
      %v741 = vadd.f32 0.0, %v740
      %v742 = vpop.f32.mrf.mxu0
      %v743 = vadd.f32 0.0, %v742
      %744 = vmatmul.bf16.gmra.mxu0 %v675
      %v745 = vpop.f32.mrf.mxu0
      %v746 = vadd.f32 0.0, %v745
      %v747 = vpop.f32.mrf.mxu0
      %v748 = vadd.f32 0.0, %v747
      %749 = vmatmul.bf16.gmra.mxu0 %v678
      %v750 = vpop.f32.mrf.mxu0
      %v751 = vadd.f32 0.0, %v750
      %v752 = vpop.f32.mrf.mxu0
      %v753 = vadd.f32 0.0, %v752
      %754 = vmatmul.bf16.gmra.mxu0 %v681
      %v755 = vpop.f32.mrf.mxu0
      %v756 = vadd.f32 0.0, %v755
      %v757 = vpop.f32.mrf.mxu0
      %v758 = vadd.f32 0.0, %v757
      %759 = vmatmul.bf16.gmra.mxu0 %v684
      %v760 = vpop.f32.mrf.mxu0
      %v761 = vadd.f32 0.0, %v760
      %v762 = vpop.f32.mrf.mxu0
      %v763 = vadd.f32 0.0, %v762
      %764 = vmatmul.bf16.gmra.mxu0 %v687
      %v765 = vpop.f32.mrf.mxu0
      %v766 = vadd.f32 0.0, %v765
      %v767 = vpop.f32.mrf.mxu0
      %v768 = vadd.f32 0.0, %v767
      %769 = vmatmul.bf16.gmra.mxu0 %v690
      %v770 = vpop.f32.mrf.mxu0
      %v771 = vadd.f32 0.0, %v770
      %v772 = vpop.f32.mrf.mxu0
      %v773 = vadd.f32 0.0, %v772
      %774 = vmatmul.bf16.gmra.mxu0 %v693
      %v775 = vpop.f32.mrf.mxu0
      %v776 = vadd.f32 0.0, %v775
      %v777 = vpop.f32.mrf.mxu0
      %v778 = vadd.f32 0.0, %v777
      %779 = vmatmul.bf16.gmra.mxu0 %v696
      %v780 = vpop.f32.mrf.mxu0
      %v781 = vadd.f32 0.0, %v780
      %v782 = vpop.f32.mrf.mxu0
      %v783 = vadd.f32 0.0, %v782
      %784 = vmatmul.bf16.gmra.mxu0 %v699
      %v785 = vpop.f32.mrf.mxu0
      %v786 = vadd.f32 0.0, %v785
      %v787 = vpop.f32.mrf.mxu0
      %v788 = vadd.f32 0.0, %v787
      %789 = vmatmul.bf16.gmra.mxu0 %v702
      %v790 = vpop.f32.mrf.mxu0
      %v791 = vadd.f32 0.0, %v790
      %v792 = vpop.f32.mrf.mxu0
      %v793 = vadd.f32 0.0, %v792
      %794 = vmatmul.bf16.gmra.mxu0 %v705
      %v795 = vpop.f32.mrf.mxu0
      %v796 = vadd.f32 0.0, %v795
      %v797 = vpop.f32.mrf.mxu0
      %v798 = vadd.f32 0.0, %v797
      %799 = vdwg.mxu0
      %v832 = vunpack.c.l.b16 %v172
      %v833 = vunpack.c.l.b16 %v173
      %v834 = vunpack.c.l.b16 %v174
      %v835 = vunpack.c.l.b16 %v175
      %v836 = vunpack.c.l.b16 %v176
      %v837 = vunpack.c.l.b16 %v177
      %v838 = vunpack.c.l.b16 %v178
      %v839 = vunpack.c.l.b16 %v179
      %v840 = vunpack.c.l.b16 %v180
      %v841 = vunpack.c.l.b16 %v181
      %v842 = vunpack.c.l.b16 %v182
      %v843 = vunpack.c.l.b16 %v183
      %v844 = vunpack.c.l.b16 %v184
      %v845 = vunpack.c.l.b16 %v185
      %v846 = vunpack.c.l.b16 %v186
      %v847 = vunpack.c.l.b16 %v187
      %v848 = vunpack.c.l.b16 %v188
      %v849 = vunpack.c.l.b16 %v189
      %v850 = vunpack.c.l.b16 %v190
      %v851 = vunpack.c.l.b16 %v191
      %v852 = vunpack.c.l.b16 %v192
      %v853 = vunpack.c.l.b16 %v193
      %v854 = vunpack.c.l.b16 %v194
      %v855 = vunpack.c.l.b16 %v195
      %v856 = vunpack.c.l.b16 %v196
      %v857 = vunpack.c.l.b16 %v197
      %v858 = vunpack.c.l.b16 %v198
      %v859 = vunpack.c.l.b16 %v199
      %v860 = vunpack.c.l.b16 %v200
      %v861 = vunpack.c.l.b16 %v201
      %v862 = vunpack.c.l.b16 %v202
      %v863 = vunpack.c.l.b16 %v203
      %v864 = vpack.c.b16 %v833, %v832
      %v865 = vpack.c.b16 %v835, %v834
      %v866 = vpack.c.b16 %v837, %v836
      %v867 = vpack.c.b16 %v839, %v838
      %v868 = vpack.c.b16 %v841, %v840
      %v869 = vpack.c.b16 %v843, %v842
      %v870 = vpack.c.b16 %v845, %v844
      %v871 = vpack.c.b16 %v847, %v846
      %v872 = vpack.c.b16 %v849, %v848
      %v873 = vpack.c.b16 %v851, %v850
      %v874 = vpack.c.b16 %v853, %v852
      %v875 = vpack.c.b16 %v855, %v854
      %v876 = vpack.c.b16 %v857, %v856
      %v877 = vpack.c.b16 %v859, %v858
      %v878 = vpack.c.b16 %v861, %v860
      %v879 = vpack.c.b16 %v863, %v862
      %v881 = vsel %vm658, %v864, 0
      %v884 = vsel %vm658, %v865, 0
      %v887 = vsel %vm658, %v866, 0
      %v890 = vsel %vm658, %v867, 0
      %v893 = vsel %vm658, %v868, 0
      %v896 = vsel %vm658, %v869, 0
      %v899 = vsel %vm658, %v870, 0
      %v902 = vsel %vm658, %v871, 0
      %v905 = vsel %vm658, %v872, 0
      %v908 = vsel %vm658, %v873, 0
      %v911 = vsel %vm658, %v874, 0
      %v914 = vsel %vm658, %v875, 0
      %v917 = vsel %vm658, %v876, 0
      %v920 = vsel %vm658, %v877, 0
      %v923 = vsel %vm658, %v878, 0
      %v926 = vsel %vm658, %v879, 0
      %v929 = vsel %vm707, %v204, 0
      %931 = vmatpush.bf16.msra.mxu0 0
      %932 = vmatpush.bf16.msra.mxu0 0
      %933 = vmatpush.bf16.msra.mxu0 0
      %934 = vmatpush.bf16.msra.mxu0 0
      %935 = vmatpush.bf16.msra.mxu0 0
      %936 = vmatpush.bf16.msra.mxu0 0
      %937 = vmatpush.bf16.msra.mxu0 0
      %938 = vmatpush.bf16.msra.mxu0 %v929
      %939 = vmatmul.bf16.gmra.mxu0 %v881
      %v940 = vpop.f32.mrf.mxu0
      %v941 = vadd.f32 %v721, %v940
      %v942 = vpop.f32.mrf.mxu0
      %v943 = vadd.f32 %v723, %v942
      %944 = vmatmul.bf16.gmra.mxu0 %v884
      %v945 = vpop.f32.mrf.mxu0
      %v946 = vadd.f32 %v726, %v945
      %v947 = vpop.f32.mrf.mxu0
      %v948 = vadd.f32 %v728, %v947
      %949 = vmatmul.bf16.gmra.mxu0 %v887
      %v950 = vpop.f32.mrf.mxu0
      %v951 = vadd.f32 %v731, %v950
      %v952 = vpop.f32.mrf.mxu0
      %v953 = vadd.f32 %v733, %v952
      %954 = vmatmul.bf16.gmra.mxu0 %v890
      %v955 = vpop.f32.mrf.mxu0
      %v956 = vadd.f32 %v736, %v955
      %v957 = vpop.f32.mrf.mxu0
      %v958 = vadd.f32 %v738, %v957
      %959 = vmatmul.bf16.gmra.mxu0 %v893
      %v960 = vpop.f32.mrf.mxu0
      %v961 = vadd.f32 %v741, %v960
      %v962 = vpop.f32.mrf.mxu0
      %v963 = vadd.f32 %v743, %v962
      %964 = vmatmul.bf16.gmra.mxu0 %v896
      %v965 = vpop.f32.mrf.mxu0
      %v966 = vadd.f32 %v746, %v965
      %v967 = vpop.f32.mrf.mxu0
      %v968 = vadd.f32 %v748, %v967
      %969 = vmatmul.bf16.gmra.mxu0 %v899
      %v970 = vpop.f32.mrf.mxu0
      %v971 = vadd.f32 %v751, %v970
      %v972 = vpop.f32.mrf.mxu0
      %v973 = vadd.f32 %v753, %v972
      %974 = vmatmul.bf16.gmra.mxu0 %v902
      %v975 = vpop.f32.mrf.mxu0
      %v976 = vadd.f32 %v756, %v975
      %v977 = vpop.f32.mrf.mxu0
      %v978 = vadd.f32 %v758, %v977
      %979 = vmatmul.bf16.gmra.mxu0 %v905
      %v980 = vpop.f32.mrf.mxu0
      %v981 = vadd.f32 %v761, %v980
      %v982 = vpop.f32.mrf.mxu0
      %v983 = vadd.f32 %v763, %v982
      %984 = vmatmul.bf16.gmra.mxu0 %v908
      %v985 = vpop.f32.mrf.mxu0
      %v986 = vadd.f32 %v766, %v985
      %v987 = vpop.f32.mrf.mxu0
      %v988 = vadd.f32 %v768, %v987
      %989 = vmatmul.bf16.gmra.mxu0 %v911
      %v990 = vpop.f32.mrf.mxu0
      %v991 = vadd.f32 %v771, %v990
      %v992 = vpop.f32.mrf.mxu0
      %v993 = vadd.f32 %v773, %v992
      %994 = vmatmul.bf16.gmra.mxu0 %v914
      %v995 = vpop.f32.mrf.mxu0
      %v996 = vadd.f32 %v776, %v995
      %v997 = vpop.f32.mrf.mxu0
      %v998 = vadd.f32 %v778, %v997
      %999 = vmatmul.bf16.gmra.mxu0 %v917
      %v1000 = vpop.f32.mrf.mxu0
      %v1001 = vadd.f32 %v781, %v1000
      %v1002 = vpop.f32.mrf.mxu0
      %v1003 = vadd.f32 %v783, %v1002
      %1004 = vmatmul.bf16.gmra.mxu0 %v920
      %v1005 = vpop.f32.mrf.mxu0
      %v1006 = vadd.f32 %v786, %v1005
      %v1007 = vpop.f32.mrf.mxu0
      %v1008 = vadd.f32 %v788, %v1007
      %1009 = vmatmul.bf16.gmra.mxu0 %v923
      %v1010 = vpop.f32.mrf.mxu0
      %v1011 = vadd.f32 %v791, %v1010
      %v1012 = vpop.f32.mrf.mxu0
      %v1013 = vadd.f32 %v793, %v1012
      %1014 = vmatmul.bf16.gmra.mxu0 %v926
      %v1015 = vpop.f32.mrf.mxu0
      %v1016 = vadd.f32 %v796, %v1015
      %v1017 = vpop.f32.mrf.mxu0
      %v1018 = vadd.f32 %v798, %v1017
      %1019 = vdwg.mxu0
      %v1020 = vld [vmem:[%s165] sm:$0xe]
      %v1021 = vld [vmem:[%s165 + $0xc] sm:$0xe]
      %v1022 = vld [vmem:[%s165 + $0x18] sm:$0xe]
      %v1023 = vld [vmem:[%s165 + $0x24] sm:$0xe]
      %v1024 = vld [vmem:[%s165 + $0x30] sm:$0xe]
      %v1025 = vld [vmem:[%s165 + $0x3c] sm:$0xe]
      %v1026 = vld [vmem:[%s165 + $0x48] sm:$0xe]
      %v1027 = vld [vmem:[%s165 + $0x54] sm:$0xe]
      %v1028 = vld [vmem:[%s165 + $0x60] sm:$0xe]
      %v1029 = vld [vmem:[%s165 + $0x6c] sm:$0xe]
      %v1030 = vld [vmem:[%s165 + $0x78] sm:$0xe]
      %v1031 = vld [vmem:[%s165 + $0x84] sm:$0xe]
      %v1032 = vld [vmem:[%s165 + $0x90] sm:$0xe]
      %v1033 = vld [vmem:[%s165 + $0x9c] sm:$0xe]
      %v1034 = vld [vmem:[%s165 + $0xa8] sm:$0xe]
      %v1035 = vld [vmem:[%s165 + $0xb4] sm:$0xe]
      %vm1068 = vcmask 1042432
      %vm1069 = vcmask 1046532
      %vm1070 = vmor %vm1068, %vm1069
      %v1071 = vrot.slane %v1020, 5
      %v1072 = vrot.slane %v1071, 4
      %v1073 = vrot.slane %v173, 5
      %v1074 = vsel %vm1070, %v1072, %v1073
      %v1075 = vrot.slane %v1073, 4
      %v1076 = vrot.slane %v205, 5
      %v1077 = vsel %vm1070, %v1075, %v1076
      %v1078 = vrot.slane %v1021, 5
      %v1079 = vrot.slane %v1078, 4
      %v1080 = vrot.slane %v175, 5
      %v1081 = vsel %vm1070, %v1079, %v1080
      %v1082 = vrot.slane %v1080, 4
      %v1083 = vrot.slane %v206, 5
      %v1084 = vsel %vm1070, %v1082, %v1083
      %v1085 = vrot.slane %v1022, 5
      %v1086 = vrot.slane %v1085, 4
      %v1087 = vrot.slane %v177, 5
      %v1088 = vsel %vm1070, %v1086, %v1087
      %v1089 = vrot.slane %v1087, 4
      %v1090 = vrot.slane %v207, 5
      %v1091 = vsel %vm1070, %v1089, %v1090
      %v1092 = vrot.slane %v1023, 5
      %v1093 = vrot.slane %v1092, 4
      %v1094 = vrot.slane %v179, 5
      %v1095 = vsel %vm1070, %v1093, %v1094
      %v1096 = vrot.slane %v1094, 4
      %v1097 = vrot.slane %v208, 5
      %v1098 = vsel %vm1070, %v1096, %v1097
      %v1099 = vrot.slane %v1024, 5
      %v1100 = vrot.slane %v1099, 4
      %v1101 = vrot.slane %v181, 5
      %v1102 = vsel %vm1070, %v1100, %v1101
      %v1103 = vrot.slane %v1101, 4
      %v1104 = vrot.slane %v209, 5
      %v1105 = vsel %vm1070, %v1103, %v1104
      %v1106 = vrot.slane %v1025, 5
      %v1107 = vrot.slane %v1106, 4
      %v1108 = vrot.slane %v183, 5
      %v1109 = vsel %vm1070, %v1107, %v1108
      %v1110 = vrot.slane %v1108, 4
      %v1111 = vrot.slane %v210, 5
      %v1112 = vsel %vm1070, %v1110, %v1111
      %v1113 = vrot.slane %v1026, 5
      %v1114 = vrot.slane %v1113, 4
      %v1115 = vrot.slane %v185, 5
      %v1116 = vsel %vm1070, %v1114, %v1115
      %v1117 = vrot.slane %v1115, 4
      %v1118 = vrot.slane %v211, 5
      %v1119 = vsel %vm1070, %v1117, %v1118
      %v1120 = vrot.slane %v1027, 5
      %v1121 = vrot.slane %v1120, 4
      %v1122 = vrot.slane %v187, 5
      %v1123 = vsel %vm1070, %v1121, %v1122
      %v1124 = vrot.slane %v1122, 4
      %v1125 = vrot.slane %v212, 5
      %v1126 = vsel %vm1070, %v1124, %v1125
      %v1127 = vrot.slane %v1028, 5
      %v1128 = vrot.slane %v1127, 4
      %v1129 = vrot.slane %v189, 5
      %v1130 = vsel %vm1070, %v1128, %v1129
      %v1131 = vrot.slane %v1129, 4
      %v1132 = vrot.slane %v213, 5
      %v1133 = vsel %vm1070, %v1131, %v1132
      %v1134 = vrot.slane %v1029, 5
      %v1135 = vrot.slane %v1134, 4
      %v1136 = vrot.slane %v191, 5
      %v1137 = vsel %vm1070, %v1135, %v1136
      %v1138 = vrot.slane %v1136, 4
      %v1139 = vrot.slane %v214, 5
      %v1140 = vsel %vm1070, %v1138, %v1139
      %v1141 = vrot.slane %v1030, 5
      %v1142 = vrot.slane %v1141, 4
      %v1143 = vrot.slane %v193, 5
      %v1144 = vsel %vm1070, %v1142, %v1143
      %v1145 = vrot.slane %v1143, 4
      %v1146 = vrot.slane %v215, 5
      %v1147 = vsel %vm1070, %v1145, %v1146
      %v1148 = vrot.slane %v1031, 5
      %v1149 = vrot.slane %v1148, 4
      %v1150 = vrot.slane %v195, 5
      %v1151 = vsel %vm1070, %v1149, %v1150
      %v1152 = vrot.slane %v1150, 4
      %v1153 = vrot.slane %v216, 5
      %v1154 = vsel %vm1070, %v1152, %v1153
      %v1155 = vrot.slane %v1032, 5
      %v1156 = vrot.slane %v1155, 4
      %v1157 = vrot.slane %v197, 5
      %v1158 = vsel %vm1070, %v1156, %v1157
      %v1159 = vrot.slane %v1157, 4
      %v1160 = vrot.slane %v217, 5
      %v1161 = vsel %vm1070, %v1159, %v1160
      %v1162 = vrot.slane %v1033, 5
      %v1163 = vrot.slane %v1162, 4
      %v1164 = vrot.slane %v199, 5
      %v1165 = vsel %vm1070, %v1163, %v1164
      %v1166 = vrot.slane %v1164, 4
      %v1167 = vrot.slane %v218, 5
      %v1168 = vsel %vm1070, %v1166, %v1167
      %v1169 = vrot.slane %v1034, 5
      %v1170 = vrot.slane %v1169, 4
      %v1171 = vrot.slane %v201, 5
      %v1172 = vsel %vm1070, %v1170, %v1171
      %v1173 = vrot.slane %v1171, 4
      %v1174 = vrot.slane %v219, 5
      %v1175 = vsel %vm1070, %v1173, %v1174
      %v1176 = vrot.slane %v1035, 5
      %v1177 = vrot.slane %v1176, 4
      %v1178 = vrot.slane %v203, 5
      %v1179 = vsel %vm1070, %v1177, %v1178
      %v1180 = vrot.slane %v1178, 4
      %v1181 = vrot.slane %v220, 5
      %v1182 = vsel %vm1070, %v1180, %v1181
      %s1183 = scalar_lea.vmem %s1, 4
      %v1184 = vld [vmem:[%s1183] sm:$0x3]
      %v1185 = vunpack.c.l.b16 %v1074
      %v1186 = vunpack.c.l.b16 %v1077
      %v1187 = vunpack.c.l.b16 %v1081
      %v1188 = vunpack.c.l.b16 %v1084
      %v1189 = vunpack.c.l.b16 %v1088
      %v1190 = vunpack.c.l.b16 %v1091
      %v1191 = vunpack.c.l.b16 %v1095
      %v1192 = vunpack.c.l.b16 %v1098
      %v1193 = vunpack.c.l.b16 %v1102
      %v1194 = vunpack.c.l.b16 %v1105
      %v1195 = vunpack.c.l.b16 %v1109
      %v1196 = vunpack.c.l.b16 %v1112
      %v1197 = vunpack.c.l.b16 %v1116
      %v1198 = vunpack.c.l.b16 %v1119
      %v1199 = vunpack.c.l.b16 %v1123
      %v1200 = vunpack.c.l.b16 %v1126
      %v1201 = vunpack.c.l.b16 %v1130
      %v1202 = vunpack.c.l.b16 %v1133
      %v1203 = vunpack.c.l.b16 %v1137
      %v1204 = vunpack.c.l.b16 %v1140
      %v1205 = vunpack.c.l.b16 %v1144
      %v1206 = vunpack.c.l.b16 %v1147
      %v1207 = vunpack.c.l.b16 %v1151
      %v1208 = vunpack.c.l.b16 %v1154
      %v1209 = vunpack.c.l.b16 %v1158
      %v1210 = vunpack.c.l.b16 %v1161
      %v1211 = vunpack.c.l.b16 %v1165
      %v1212 = vunpack.c.l.b16 %v1168
      %v1213 = vunpack.c.l.b16 %v1172
      %v1214 = vunpack.c.l.b16 %v1175
      %v1215 = vunpack.c.l.b16 %v1179
      %v1216 = vunpack.c.l.b16 %v1182
      %v1217 = vpack.c.b16 %v1186, %v1185
      %v1218 = vpack.c.b16 %v1188, %v1187
      %v1219 = vpack.c.b16 %v1190, %v1189
      %v1220 = vpack.c.b16 %v1192, %v1191
      %v1221 = vpack.c.b16 %v1194, %v1193
      %v1222 = vpack.c.b16 %v1196, %v1195
      %v1223 = vpack.c.b16 %v1198, %v1197
      %v1224 = vpack.c.b16 %v1200, %v1199
      %v1225 = vpack.c.b16 %v1202, %v1201
      %v1226 = vpack.c.b16 %v1204, %v1203
      %v1227 = vpack.c.b16 %v1206, %v1205
      %v1228 = vpack.c.b16 %v1208, %v1207
      %v1229 = vpack.c.b16 %v1210, %v1209
      %v1230 = vpack.c.b16 %v1212, %v1211
      %v1231 = vpack.c.b16 %v1214, %v1213
      %v1232 = vpack.c.b16 %v1216, %v1215
      %v1234 = vsel %vm658, %v1217, 0
      %v1237 = vsel %vm658, %v1218, 0
      %v1240 = vsel %vm658, %v1219, 0
      %v1243 = vsel %vm658, %v1220, 0
      %v1246 = vsel %vm658, %v1221, 0
      %v1249 = vsel %vm658, %v1222, 0
      %v1252 = vsel %vm658, %v1223, 0
      %v1255 = vsel %vm658, %v1224, 0
      %v1258 = vsel %vm658, %v1225, 0
      %v1261 = vsel %vm658, %v1226, 0
      %v1264 = vsel %vm658, %v1227, 0
      %v1267 = vsel %vm658, %v1228, 0
      %v1270 = vsel %vm658, %v1229, 0
      %v1273 = vsel %vm658, %v1230, 0
      %v1276 = vsel %vm658, %v1231, 0
      %v1279 = vsel %vm658, %v1232, 0
      %v1282 = vsel %vm707, %v1184, 0
      %1284 = vmatpush.bf16.msra.mxu0 0
      %1285 = vmatpush.bf16.msra.mxu0 0
      %1286 = vmatpush.bf16.msra.mxu0 0
      %1287 = vmatpush.bf16.msra.mxu0 0
      %1288 = vmatpush.bf16.msra.mxu0 0
      %1289 = vmatpush.bf16.msra.mxu0 0
      %1290 = vmatpush.bf16.msra.mxu0 0
      %1291 = vmatpush.bf16.msra.mxu0 %v1282
      %1292 = vmatmul.bf16.gmra.mxu0 %v1234
      %v1293 = vpop.f32.mrf.mxu0
      %v1294 = vadd.f32 0.0, %v1293
      %v1295 = vpop.f32.mrf.mxu0
      %v1296 = vadd.f32 0.0, %v1295
      %1297 = vmatmul.bf16.gmra.mxu0 %v1237
      %v1298 = vpop.f32.mrf.mxu0
      %v1299 = vadd.f32 0.0, %v1298
      %v1300 = vpop.f32.mrf.mxu0
      %v1301 = vadd.f32 0.0, %v1300
      %1302 = vmatmul.bf16.gmra.mxu0 %v1240
      %v1303 = vpop.f32.mrf.mxu0
      %v1304 = vadd.f32 0.0, %v1303
      %v1305 = vpop.f32.mrf.mxu0
      %v1306 = vadd.f32 0.0, %v1305
      %1307 = vmatmul.bf16.gmra.mxu0 %v1243
      %v1308 = vpop.f32.mrf.mxu0
      %v1309 = vadd.f32 0.0, %v1308
      %v1310 = vpop.f32.mrf.mxu0
      %v1311 = vadd.f32 0.0, %v1310
      %1312 = vmatmul.bf16.gmra.mxu0 %v1246
      %v1313 = vpop.f32.mrf.mxu0
      %v1314 = vadd.f32 0.0, %v1313
      %v1315 = vpop.f32.mrf.mxu0
      %v1316 = vadd.f32 0.0, %v1315
      %1317 = vmatmul.bf16.gmra.mxu0 %v1249
      %v1318 = vpop.f32.mrf.mxu0
      %v1319 = vadd.f32 0.0, %v1318
      %v1320 = vpop.f32.mrf.mxu0
      %v1321 = vadd.f32 0.0, %v1320
      %1322 = vmatmul.bf16.gmra.mxu0 %v1252
      %v1323 = vpop.f32.mrf.mxu0
      %v1324 = vadd.f32 0.0, %v1323
      %v1325 = vpop.f32.mrf.mxu0
      %v1326 = vadd.f32 0.0, %v1325
      %1327 = vmatmul.bf16.gmra.mxu0 %v1255
      %v1328 = vpop.f32.mrf.mxu0
      %v1329 = vadd.f32 0.0, %v1328
      %v1330 = vpop.f32.mrf.mxu0
      %v1331 = vadd.f32 0.0, %v1330
      %1332 = vmatmul.bf16.gmra.mxu0 %v1258
      %v1333 = vpop.f32.mrf.mxu0
      %v1334 = vadd.f32 0.0, %v1333
      %v1335 = vpop.f32.mrf.mxu0
      %v1336 = vadd.f32 0.0, %v1335
      %1337 = vmatmul.bf16.gmra.mxu0 %v1261
      %v1338 = vpop.f32.mrf.mxu0
      %v1339 = vadd.f32 0.0, %v1338
      %v1340 = vpop.f32.mrf.mxu0
      %v1341 = vadd.f32 0.0, %v1340
      %1342 = vmatmul.bf16.gmra.mxu0 %v1264
      %v1343 = vpop.f32.mrf.mxu0
      %v1344 = vadd.f32 0.0, %v1343
      %v1345 = vpop.f32.mrf.mxu0
      %v1346 = vadd.f32 0.0, %v1345
      %1347 = vmatmul.bf16.gmra.mxu0 %v1267
      %v1348 = vpop.f32.mrf.mxu0
      %v1349 = vadd.f32 0.0, %v1348
      %v1350 = vpop.f32.mrf.mxu0
      %v1351 = vadd.f32 0.0, %v1350
      %1352 = vmatmul.bf16.gmra.mxu0 %v1270
      %v1353 = vpop.f32.mrf.mxu0
      %v1354 = vadd.f32 0.0, %v1353
      %v1355 = vpop.f32.mrf.mxu0
      %v1356 = vadd.f32 0.0, %v1355
      %1357 = vmatmul.bf16.gmra.mxu0 %v1273
      %v1358 = vpop.f32.mrf.mxu0
      %v1359 = vadd.f32 0.0, %v1358
      %v1360 = vpop.f32.mrf.mxu0
      %v1361 = vadd.f32 0.0, %v1360
      %1362 = vmatmul.bf16.gmra.mxu0 %v1276
      %v1363 = vpop.f32.mrf.mxu0
      %v1364 = vadd.f32 0.0, %v1363
      %v1365 = vpop.f32.mrf.mxu0
      %v1366 = vadd.f32 0.0, %v1365
      %1367 = vmatmul.bf16.gmra.mxu0 %v1279
      %v1368 = vpop.f32.mrf.mxu0
      %v1369 = vadd.f32 0.0, %v1368
      %v1370 = vpop.f32.mrf.mxu0
      %v1371 = vadd.f32 0.0, %v1370
      %1372 = vdwg.mxu0
      %v1373 = vadd.f32 %v941, %v1294
      %v1374 = vadd.f32 %v943, %v1296
      %v1375 = vadd.f32 %v946, %v1299
      %v1376 = vadd.f32 %v948, %v1301
      %v1377 = vadd.f32 %v951, %v1304
      %v1378 = vadd.f32 %v953, %v1306
      %v1379 = vadd.f32 %v956, %v1309
      %v1380 = vadd.f32 %v958, %v1311
      %v1381 = vadd.f32 %v961, %v1314
      %v1382 = vadd.f32 %v963, %v1316
      %v1383 = vadd.f32 %v966, %v1319
      %v1384 = vadd.f32 %v968, %v1321
      %v1385 = vadd.f32 %v971, %v1324
      %v1386 = vadd.f32 %v973, %v1326
      %v1387 = vadd.f32 %v976, %v1329
      %v1388 = vadd.f32 %v978, %v1331
      %v1389 = vadd.f32 %v981, %v1334
      %v1390 = vadd.f32 %v983, %v1336
      %v1391 = vadd.f32 %v986, %v1339
      %v1392 = vadd.f32 %v988, %v1341
      %v1393 = vadd.f32 %v991, %v1344
      %v1394 = vadd.f32 %v993, %v1346
      %v1395 = vadd.f32 %v996, %v1349
      %v1396 = vadd.f32 %v998, %v1351
      %v1397 = vadd.f32 %v1001, %v1354
      %v1398 = vadd.f32 %v1003, %v1356
      %v1399 = vadd.f32 %v1006, %v1359
      %v1400 = vadd.f32 %v1008, %v1361
      %v1401 = vadd.f32 %v1011, %v1364
      %v1402 = vadd.f32 %v1013, %v1366
      %v1403 = vadd.f32 %v1016, %v1369
      %v1404 = vadd.f32 %v1018, %v1371
      %s1405 = scalar_lea.vmem %s165, 12
      %v1406 = vld [vmem:[%s1405] sm:$0xf]
      %v1407 = vld [vmem:[%s1405 + $0x4] sm:$0xf]
      %v1408 = vld [vmem:[%s1405 + $0xc] sm:$0xf]
      %v1409 = vld [vmem:[%s1405 + $0x10] sm:$0xf]
      %v1410 = vld [vmem:[%s1405 + $0x18] sm:$0xf]
      %v1411 = vld [vmem:[%s1405 + $0x1c] sm:$0xf]
      %v1412 = vld [vmem:[%s1405 + $0x24] sm:$0xf]
      %v1413 = vld [vmem:[%s1405 + $0x28] sm:$0xf]
      %v1414 = vld [vmem:[%s1405 + $0x30] sm:$0xf]
      %v1415 = vld [vmem:[%s1405 + $0x34] sm:$0xf]
      %v1416 = vld [vmem:[%s1405 + $0x3c] sm:$0xf]
      %v1417 = vld [vmem:[%s1405 + $0x40] sm:$0xf]
      %v1418 = vld [vmem:[%s1405 + $0x48] sm:$0xf]
      %v1419 = vld [vmem:[%s1405 + $0x4c] sm:$0xf]
      %v1420 = vld [vmem:[%s1405 + $0x54] sm:$0xf]
      %v1421 = vld [vmem:[%s1405 + $0x58] sm:$0xf]
      %v1422 = vld [vmem:[%s1405 + $0x60] sm:$0xf]
      %v1423 = vld [vmem:[%s1405 + $0x64] sm:$0xf]
      %v1424 = vld [vmem:[%s1405 + $0x6c] sm:$0xf]
      %v1425 = vld [vmem:[%s1405 + $0x70] sm:$0xf]
      %v1426 = vld [vmem:[%s1405 + $0x78] sm:$0xf]
      %v1427 = vld [vmem:[%s1405 + $0x7c] sm:$0xf]
      %v1428 = vld [vmem:[%s1405 + $0x84] sm:$0xf]
      %v1429 = vld [vmem:[%s1405 + $0x88] sm:$0xf]
      %v1430 = vld [vmem:[%s1405 + $0x90] sm:$0xf]
      %v1431 = vld [vmem:[%s1405 + $0x94] sm:$0xf]
      %v1432 = vld [vmem:[%s1405 + $0x9c] sm:$0xf]
      %v1433 = vld [vmem:[%s1405 + $0xa0] sm:$0xf]
      %v1434 = vld [vmem:[%s1405 + $0xa8] sm:$0xf]
      %v1435 = vld [vmem:[%s1405 + $0xac] sm:$0xf]
      %v1436 = vld [vmem:[%s1405 + $0xb4] sm:$0xf]
      %v1437 = vld [vmem:[%s1405 + $0xb8] sm:$0xf]
      %s1438 = scalar_lea.vmem %s1, 6
      %v1439 = vld [vmem:[%s1438] sm:$0x3]
      %v1472 = vunpack.c.l.b16 %v1406
      %v1473 = vunpack.c.l.b16 %v1407
      %v1474 = vunpack.c.l.b16 %v1408
      %v1475 = vunpack.c.l.b16 %v1409
      %v1476 = vunpack.c.l.b16 %v1410
      %v1477 = vunpack.c.l.b16 %v1411
      %v1478 = vunpack.c.l.b16 %v1412
      %v1479 = vunpack.c.l.b16 %v1413
      %v1480 = vunpack.c.l.b16 %v1414
      %v1481 = vunpack.c.l.b16 %v1415
      %v1482 = vunpack.c.l.b16 %v1416
      %v1483 = vunpack.c.l.b16 %v1417
      %v1484 = vunpack.c.l.b16 %v1418
      %v1485 = vunpack.c.l.b16 %v1419
      %v1486 = vunpack.c.l.b16 %v1420
      %v1487 = vunpack.c.l.b16 %v1421
      %v1488 = vunpack.c.l.b16 %v1422
      %v1489 = vunpack.c.l.b16 %v1423
      %v1490 = vunpack.c.l.b16 %v1424
      %v1491 = vunpack.c.l.b16 %v1425
      %v1492 = vunpack.c.l.b16 %v1426
      %v1493 = vunpack.c.l.b16 %v1427
      %v1494 = vunpack.c.l.b16 %v1428
      %v1495 = vunpack.c.l.b16 %v1429
      %v1496 = vunpack.c.l.b16 %v1430
      %v1497 = vunpack.c.l.b16 %v1431
      %v1498 = vunpack.c.l.b16 %v1432
      %v1499 = vunpack.c.l.b16 %v1433
      %v1500 = vunpack.c.l.b16 %v1434
      %v1501 = vunpack.c.l.b16 %v1435
      %v1502 = vunpack.c.l.b16 %v1436
      %v1503 = vunpack.c.l.b16 %v1437
      %v1504 = vpack.c.b16 %v1473, %v1472
      %v1505 = vpack.c.b16 %v1475, %v1474
      %v1506 = vpack.c.b16 %v1477, %v1476
      %v1507 = vpack.c.b16 %v1479, %v1478
      %v1508 = vpack.c.b16 %v1481, %v1480
      %v1509 = vpack.c.b16 %v1483, %v1482
      %v1510 = vpack.c.b16 %v1485, %v1484
      %v1511 = vpack.c.b16 %v1487, %v1486
      %v1512 = vpack.c.b16 %v1489, %v1488
      %v1513 = vpack.c.b16 %v1491, %v1490
      %v1514 = vpack.c.b16 %v1493, %v1492
      %v1515 = vpack.c.b16 %v1495, %v1494
      %v1516 = vpack.c.b16 %v1497, %v1496
      %v1517 = vpack.c.b16 %v1499, %v1498
      %v1518 = vpack.c.b16 %v1501, %v1500
      %v1519 = vpack.c.b16 %v1503, %v1502
      %v1521 = vsel %vm658, %v1504, 0
      %v1524 = vsel %vm658, %v1505, 0
      %v1527 = vsel %vm658, %v1506, 0
      %v1530 = vsel %vm658, %v1507, 0
      %v1533 = vsel %vm658, %v1508, 0
      %v1536 = vsel %vm658, %v1509, 0
      %v1539 = vsel %vm658, %v1510, 0
      %v1542 = vsel %vm658, %v1511, 0
      %v1545 = vsel %vm658, %v1512, 0
      %v1548 = vsel %vm658, %v1513, 0
      %v1551 = vsel %vm658, %v1514, 0
      %v1554 = vsel %vm658, %v1515, 0
      %v1557 = vsel %vm658, %v1516, 0
      %v1560 = vsel %vm658, %v1517, 0
      %v1563 = vsel %vm658, %v1518, 0
      %v1566 = vsel %vm658, %v1519, 0
      %v1569 = vsel %vm707, %v1439, 0
      %1571 = vmatpush.bf16.msra.mxu0 0
      %1572 = vmatpush.bf16.msra.mxu0 0
      %1573 = vmatpush.bf16.msra.mxu0 0
      %1574 = vmatpush.bf16.msra.mxu0 0
      %1575 = vmatpush.bf16.msra.mxu0 0
      %1576 = vmatpush.bf16.msra.mxu0 0
      %1577 = vmatpush.bf16.msra.mxu0 0
      %1578 = vmatpush.bf16.msra.mxu0 %v1569
      %1579 = vmatmul.bf16.gmra.mxu0 %v1521
      %v1580 = vpop.f32.mrf.mxu0
      %v1581 = vadd.f32 0.0, %v1580
      %v1582 = vpop.f32.mrf.mxu0
      %v1583 = vadd.f32 0.0, %v1582
      %1584 = vmatmul.bf16.gmra.mxu0 %v1524
      %v1585 = vpop.f32.mrf.mxu0
      %v1586 = vadd.f32 0.0, %v1585
      %v1587 = vpop.f32.mrf.mxu0
      %v1588 = vadd.f32 0.0, %v1587
      %1589 = vmatmul.bf16.gmra.mxu0 %v1527
      %v1590 = vpop.f32.mrf.mxu0
      %v1591 = vadd.f32 0.0, %v1590
      %v1592 = vpop.f32.mrf.mxu0
      %v1593 = vadd.f32 0.0, %v1592
      %1594 = vmatmul.bf16.gmra.mxu0 %v1530
      %v1595 = vpop.f32.mrf.mxu0
      %v1596 = vadd.f32 0.0, %v1595
      %v1597 = vpop.f32.mrf.mxu0
      %v1598 = vadd.f32 0.0, %v1597
      %1599 = vmatmul.bf16.gmra.mxu0 %v1533
      %v1600 = vpop.f32.mrf.mxu0
      %v1601 = vadd.f32 0.0, %v1600
      %v1602 = vpop.f32.mrf.mxu0
      %v1603 = vadd.f32 0.0, %v1602
      %1604 = vmatmul.bf16.gmra.mxu0 %v1536
      %v1605 = vpop.f32.mrf.mxu0
      %v1606 = vadd.f32 0.0, %v1605
      %v1607 = vpop.f32.mrf.mxu0
      %v1608 = vadd.f32 0.0, %v1607
      %1609 = vmatmul.bf16.gmra.mxu0 %v1539
      %v1610 = vpop.f32.mrf.mxu0
      %v1611 = vadd.f32 0.0, %v1610
      %v1612 = vpop.f32.mrf.mxu0
      %v1613 = vadd.f32 0.0, %v1612
      %1614 = vmatmul.bf16.gmra.mxu0 %v1542
      %v1615 = vpop.f32.mrf.mxu0
      %v1616 = vadd.f32 0.0, %v1615
      %v1617 = vpop.f32.mrf.mxu0
      %v1618 = vadd.f32 0.0, %v1617
      %1619 = vmatmul.bf16.gmra.mxu0 %v1545
      %v1620 = vpop.f32.mrf.mxu0
      %v1621 = vadd.f32 0.0, %v1620
      %v1622 = vpop.f32.mrf.mxu0
      %v1623 = vadd.f32 0.0, %v1622
      %1624 = vmatmul.bf16.gmra.mxu0 %v1548
      %v1625 = vpop.f32.mrf.mxu0
      %v1626 = vadd.f32 0.0, %v1625
      %v1627 = vpop.f32.mrf.mxu0
      %v1628 = vadd.f32 0.0, %v1627
      %1629 = vmatmul.bf16.gmra.mxu0 %v1551
      %v1630 = vpop.f32.mrf.mxu0
      %v1631 = vadd.f32 0.0, %v1630
      %v1632 = vpop.f32.mrf.mxu0
      %v1633 = vadd.f32 0.0, %v1632
      %1634 = vmatmul.bf16.gmra.mxu0 %v1554
      %v1635 = vpop.f32.mrf.mxu0
      %v1636 = vadd.f32 0.0, %v1635
      %v1637 = vpop.f32.mrf.mxu0
      %v1638 = vadd.f32 0.0, %v1637
      %1639 = vmatmul.bf16.gmra.mxu0 %v1557
      %v1640 = vpop.f32.mrf.mxu0
      %v1641 = vadd.f32 0.0, %v1640
      %v1642 = vpop.f32.mrf.mxu0
      %v1643 = vadd.f32 0.0, %v1642
      %1644 = vmatmul.bf16.gmra.mxu0 %v1560
      %v1645 = vpop.f32.mrf.mxu0
      %v1646 = vadd.f32 0.0, %v1645
      %v1647 = vpop.f32.mrf.mxu0
      %v1648 = vadd.f32 0.0, %v1647
      %1649 = vmatmul.bf16.gmra.mxu0 %v1563
      %v1650 = vpop.f32.mrf.mxu0
      %v1651 = vadd.f32 0.0, %v1650
      %v1652 = vpop.f32.mrf.mxu0
      %v1653 = vadd.f32 0.0, %v1652
      %1654 = vmatmul.bf16.gmra.mxu0 %v1566
      %v1655 = vpop.f32.mrf.mxu0
      %v1656 = vadd.f32 0.0, %v1655
      %v1657 = vpop.f32.mrf.mxu0
      %v1658 = vadd.f32 0.0, %v1657
      %1659 = vdwg.mxu0
      %v1660 = vadd.f32 %v1373, %v1581
      %v1661 = vadd.f32 %v1374, %v1583
      %v1662 = vadd.f32 %v1375, %v1586
      %v1663 = vadd.f32 %v1376, %v1588
      %v1664 = vadd.f32 %v1377, %v1591
      %v1665 = vadd.f32 %v1378, %v1593
      %v1666 = vadd.f32 %v1379, %v1596
      %v1667 = vadd.f32 %v1380, %v1598
      %v1668 = vadd.f32 %v1381, %v1601
      %v1669 = vadd.f32 %v1382, %v1603
      %v1670 = vadd.f32 %v1383, %v1606
      %v1671 = vadd.f32 %v1384, %v1608
      %v1672 = vadd.f32 %v1385, %v1611
      %v1673 = vadd.f32 %v1386, %v1613
      %v1674 = vadd.f32 %v1387, %v1616
      %v1675 = vadd.f32 %v1388, %v1618
      %v1676 = vadd.f32 %v1389, %v1621
      %v1677 = vadd.f32 %v1390, %v1623
      %v1678 = vadd.f32 %v1391, %v1626
      %v1679 = vadd.f32 %v1392, %v1628
      %v1680 = vadd.f32 %v1393, %v1631
      %v1681 = vadd.f32 %v1394, %v1633
      %v1682 = vadd.f32 %v1395, %v1636
      %v1683 = vadd.f32 %v1396, %v1638
      %v1684 = vadd.f32 %v1397, %v1641
      %v1685 = vadd.f32 %v1398, %v1643
      %v1686 = vadd.f32 %v1399, %v1646
      %v1687 = vadd.f32 %v1400, %v1648
      %v1688 = vadd.f32 %v1401, %v1651
      %v1689 = vadd.f32 %v1402, %v1653
      %v1690 = vadd.f32 %v1403, %v1656
      %v1691 = vadd.f32 %v1404, %v1658
      %v1692 = vld [vmem:[%s1405] sm:$0xf]
      %v1693 = vld [vmem:[%s1405 + $0x4] sm:$0xf]
      %v1694 = vld [vmem:[%s1405 + $0x8] sm:$0x1]
      %v1695 = vld [vmem:[%s1405 + $0xc] sm:$0xf]
      %v1696 = vld [vmem:[%s1405 + $0x10] sm:$0xf]
      %v1697 = vld [vmem:[%s1405 + $0x14] sm:$0x1]
      %v1698 = vld [vmem:[%s1405 + $0x18] sm:$0xf]
      %v1699 = vld [vmem:[%s1405 + $0x1c] sm:$0xf]
      %v1700 = vld [vmem:[%s1405 + $0x20] sm:$0x1]
      %v1701 = vld [vmem:[%s1405 + $0x24] sm:$0xf]
      %v1702 = vld [vmem:[%s1405 + $0x28] sm:$0xf]
      %v1703 = vld [vmem:[%s1405 + $0x2c] sm:$0x1]
      %v1704 = vld [vmem:[%s1405 + $0x30] sm:$0xf]
      %v1705 = vld [vmem:[%s1405 + $0x34] sm:$0xf]
      %v1706 = vld [vmem:[%s1405 + $0x38] sm:$0x1]
      %v1707 = vld [vmem:[%s1405 + $0x3c] sm:$0xf]
      %v1708 = vld [vmem:[%s1405 + $0x40] sm:$0xf]
      %v1709 = vld [vmem:[%s1405 + $0x44] sm:$0x1]
      %v1710 = vld [vmem:[%s1405 + $0x48] sm:$0xf]
      %v1711 = vld [vmem:[%s1405 + $0x4c] sm:$0xf]
      %v1712 = vld [vmem:[%s1405 + $0x50] sm:$0x1]
      %v1713 = vld [vmem:[%s1405 + $0x54] sm:$0xf]
      %v1714 = vld [vmem:[%s1405 + $0x58] sm:$0xf]
      %v1715 = vld [vmem:[%s1405 + $0x5c] sm:$0x1]
      %v1716 = vld [vmem:[%s1405 + $0x60] sm:$0xf]
      %v1717 = vld [vmem:[%s1405 + $0x64] sm:$0xf]
      %v1718 = vld [vmem:[%s1405 + $0x68] sm:$0x1]
      %v1719 = vld [vmem:[%s1405 + $0x6c] sm:$0xf]
      %v1720 = vld [vmem:[%s1405 + $0x70] sm:$0xf]
      %v1721 = vld [vmem:[%s1405 + $0x74] sm:$0x1]
      %v1722 = vld [vmem:[%s1405 + $0x78] sm:$0xf]
      %v1723 = vld [vmem:[%s1405 + $0x7c] sm:$0xf]
      %v1724 = vld [vmem:[%s1405 + $0x80] sm:$0x1]
      %v1725 = vld [vmem:[%s1405 + $0x84] sm:$0xf]
      %v1726 = vld [vmem:[%s1405 + $0x88] sm:$0xf]
      %v1727 = vld [vmem:[%s1405 + $0x8c] sm:$0x1]
      %v1728 = vld [vmem:[%s1405 + $0x90] sm:$0xf]
      %v1729 = vld [vmem:[%s1405 + $0x94] sm:$0xf]
      %v1730 = vld [vmem:[%s1405 + $0x98] sm:$0x1]
      %v1731 = vld [vmem:[%s1405 + $0x9c] sm:$0xf]
      %v1732 = vld [vmem:[%s1405 + $0xa0] sm:$0xf]
      %v1733 = vld [vmem:[%s1405 + $0xa4] sm:$0x1]
      %v1734 = vld [vmem:[%s1405 + $0xa8] sm:$0xf]
      %v1735 = vld [vmem:[%s1405 + $0xac] sm:$0xf]
      %v1736 = vld [vmem:[%s1405 + $0xb0] sm:$0x1]
      %v1737 = vld [vmem:[%s1405 + $0xb4] sm:$0xf]
      %v1738 = vld [vmem:[%s1405 + $0xb8] sm:$0xf]
      %v1739 = vld [vmem:[%s1405 + $0xbc] sm:$0x1]
      %v1741 = vshrl.u32 %v1692, 16
      %v1743 = vrot.slane %v1741, 4
      %v1744 = vshll.u32 %v1692, 16
      %v1746 = vrot.slane %v1744, 5
      %v1747 = vor.u32 %v1743, %v1746
      %v1748 = vrot.slane %v1747, 4
      %v1750 = vshll.u32 %v1693, 16
      %v1752 = vrot.slane %v1750, 5
      %v1753 = vsel %vm223, %v1748, %v1752
      %v1754 = vshrl.u32 %v1693, 16
      %v1756 = vrot.slane %v1754, 4
      %v1757 = vor.u32 %v1756, %v1752
      %v1758 = vrot.slane %v1757, 4
      %v1760 = vshll.u32 %v1694, 16
      %v1762 = vrot.slane %v1760, 5
      %v1763 = vsel %vm223, %v1758, %v1762
      %v1765 = vshrl.u32 %v1695, 16
      %v1767 = vrot.slane %v1765, 4
      %v1768 = vshll.u32 %v1695, 16
      %v1770 = vrot.slane %v1768, 5
      %v1771 = vor.u32 %v1767, %v1770
      %v1772 = vrot.slane %v1771, 4
      %v1774 = vshll.u32 %v1696, 16
      %v1776 = vrot.slane %v1774, 5
      %v1777 = vsel %vm223, %v1772, %v1776
      %v1778 = vshrl.u32 %v1696, 16
      %v1780 = vrot.slane %v1778, 4
      %v1781 = vor.u32 %v1780, %v1776
      %v1782 = vrot.slane %v1781, 4
      %v1784 = vshll.u32 %v1697, 16
      %v1786 = vrot.slane %v1784, 5
      %v1787 = vsel %vm223, %v1782, %v1786
      %v1789 = vshrl.u32 %v1698, 16
      %v1791 = vrot.slane %v1789, 4
      %v1792 = vshll.u32 %v1698, 16
      %v1794 = vrot.slane %v1792, 5
      %v1795 = vor.u32 %v1791, %v1794
      %v1796 = vrot.slane %v1795, 4
      %v1798 = vshll.u32 %v1699, 16
      %v1800 = vrot.slane %v1798, 5
      %v1801 = vsel %vm223, %v1796, %v1800
      %v1802 = vshrl.u32 %v1699, 16
      %v1804 = vrot.slane %v1802, 4
      %v1805 = vor.u32 %v1804, %v1800
      %v1806 = vrot.slane %v1805, 4
      %v1808 = vshll.u32 %v1700, 16
      %v1810 = vrot.slane %v1808, 5
      %v1811 = vsel %vm223, %v1806, %v1810
      %v1813 = vshrl.u32 %v1701, 16
      %v1815 = vrot.slane %v1813, 4
      %v1816 = vshll.u32 %v1701, 16
      %v1818 = vrot.slane %v1816, 5
      %v1819 = vor.u32 %v1815, %v1818
      %v1820 = vrot.slane %v1819, 4
      %v1822 = vshll.u32 %v1702, 16
      %v1824 = vrot.slane %v1822, 5
      %v1825 = vsel %vm223, %v1820, %v1824
      %v1826 = vshrl.u32 %v1702, 16
      %v1828 = vrot.slane %v1826, 4
      %v1829 = vor.u32 %v1828, %v1824
      %v1830 = vrot.slane %v1829, 4
      %v1832 = vshll.u32 %v1703, 16
      %v1834 = vrot.slane %v1832, 5
      %v1835 = vsel %vm223, %v1830, %v1834
      %v1837 = vshrl.u32 %v1704, 16
      %v1839 = vrot.slane %v1837, 4
      %v1840 = vshll.u32 %v1704, 16
      %v1842 = vrot.slane %v1840, 5
      %v1843 = vor.u32 %v1839, %v1842
      %v1844 = vrot.slane %v1843, 4
      %v1846 = vshll.u32 %v1705, 16
      %v1848 = vrot.slane %v1846, 5
      %v1849 = vsel %vm223, %v1844, %v1848
      %v1850 = vshrl.u32 %v1705, 16
      %v1852 = vrot.slane %v1850, 4
      %v1853 = vor.u32 %v1852, %v1848
      %v1854 = vrot.slane %v1853, 4
      %v1856 = vshll.u32 %v1706, 16
      %v1858 = vrot.slane %v1856, 5
      %v1859 = vsel %vm223, %v1854, %v1858
      %v1861 = vshrl.u32 %v1707, 16
      %v1863 = vrot.slane %v1861, 4
      %v1864 = vshll.u32 %v1707, 16
      %v1866 = vrot.slane %v1864, 5
      %v1867 = vor.u32 %v1863, %v1866
      %v1868 = vrot.slane %v1867, 4
      %v1870 = vshll.u32 %v1708, 16
      %v1872 = vrot.slane %v1870, 5
      %v1873 = vsel %vm223, %v1868, %v1872
      %v1874 = vshrl.u32 %v1708, 16
      %v1876 = vrot.slane %v1874, 4
      %v1877 = vor.u32 %v1876, %v1872
      %v1878 = vrot.slane %v1877, 4
      %v1880 = vshll.u32 %v1709, 16
      %v1882 = vrot.slane %v1880, 5
      %v1883 = vsel %vm223, %v1878, %v1882
      %v1885 = vshrl.u32 %v1710, 16
      %v1887 = vrot.slane %v1885, 4
      %v1888 = vshll.u32 %v1710, 16
      %v1890 = vrot.slane %v1888, 5
      %v1891 = vor.u32 %v1887, %v1890
      %v1892 = vrot.slane %v1891, 4
      %v1894 = vshll.u32 %v1711, 16
      %v1896 = vrot.slane %v1894, 5
      %v1897 = vsel %vm223, %v1892, %v1896
      %v1898 = vshrl.u32 %v1711, 16
      %v1900 = vrot.slane %v1898, 4
      %v1901 = vor.u32 %v1900, %v1896
      %v1902 = vrot.slane %v1901, 4
      %v1904 = vshll.u32 %v1712, 16
      %v1906 = vrot.slane %v1904, 5
      %v1907 = vsel %vm223, %v1902, %v1906
      %v1909 = vshrl.u32 %v1713, 16
      %v1911 = vrot.slane %v1909, 4
      %v1912 = vshll.u32 %v1713, 16
      %v1914 = vrot.slane %v1912, 5
      %v1915 = vor.u32 %v1911, %v1914
      %v1916 = vrot.slane %v1915, 4
      %v1918 = vshll.u32 %v1714, 16
      %v1920 = vrot.slane %v1918, 5
      %v1921 = vsel %vm223, %v1916, %v1920
      %v1922 = vshrl.u32 %v1714, 16
      %v1924 = vrot.slane %v1922, 4
      %v1925 = vor.u32 %v1924, %v1920
      %v1926 = vrot.slane %v1925, 4
      %v1928 = vshll.u32 %v1715, 16
      %v1930 = vrot.slane %v1928, 5
      %v1931 = vsel %vm223, %v1926, %v1930
      %v1933 = vshrl.u32 %v1716, 16
      %v1935 = vrot.slane %v1933, 4
      %v1936 = vshll.u32 %v1716, 16
      %v1938 = vrot.slane %v1936, 5
      %v1939 = vor.u32 %v1935, %v1938
      %v1940 = vrot.slane %v1939, 4
      %v1942 = vshll.u32 %v1717, 16
      %v1944 = vrot.slane %v1942, 5
      %v1945 = vsel %vm223, %v1940, %v1944
      %v1946 = vshrl.u32 %v1717, 16
      %v1948 = vrot.slane %v1946, 4
      %v1949 = vor.u32 %v1948, %v1944
      %v1950 = vrot.slane %v1949, 4
      %v1952 = vshll.u32 %v1718, 16
      %v1954 = vrot.slane %v1952, 5
      %v1955 = vsel %vm223, %v1950, %v1954
      %v1957 = vshrl.u32 %v1719, 16
      %v1959 = vrot.slane %v1957, 4
      %v1960 = vshll.u32 %v1719, 16
      %v1962 = vrot.slane %v1960, 5
      %v1963 = vor.u32 %v1959, %v1962
      %v1964 = vrot.slane %v1963, 4
      %v1966 = vshll.u32 %v1720, 16
      %v1968 = vrot.slane %v1966, 5
      %v1969 = vsel %vm223, %v1964, %v1968
      %v1970 = vshrl.u32 %v1720, 16
      %v1972 = vrot.slane %v1970, 4
      %v1973 = vor.u32 %v1972, %v1968
      %v1974 = vrot.slane %v1973, 4
      %v1976 = vshll.u32 %v1721, 16
      %v1978 = vrot.slane %v1976, 5
      %v1979 = vsel %vm223, %v1974, %v1978
      %v1981 = vshrl.u32 %v1722, 16
      %v1983 = vrot.slane %v1981, 4
      %v1984 = vshll.u32 %v1722, 16
      %v1986 = vrot.slane %v1984, 5
      %v1987 = vor.u32 %v1983, %v1986
      %v1988 = vrot.slane %v1987, 4
      %v1990 = vshll.u32 %v1723, 16
      %v1992 = vrot.slane %v1990, 5
      %v1993 = vsel %vm223, %v1988, %v1992
      %v1994 = vshrl.u32 %v1723, 16
      %v1996 = vrot.slane %v1994, 4
      %v1997 = vor.u32 %v1996, %v1992
      %v1998 = vrot.slane %v1997, 4
      %v2000 = vshll.u32 %v1724, 16
      %v2002 = vrot.slane %v2000, 5
      %v2003 = vsel %vm223, %v1998, %v2002
      %v2005 = vshrl.u32 %v1725, 16
      %v2007 = vrot.slane %v2005, 4
      %v2008 = vshll.u32 %v1725, 16
      %v2010 = vrot.slane %v2008, 5
      %v2011 = vor.u32 %v2007, %v2010
      %v2012 = vrot.slane %v2011, 4
      %v2014 = vshll.u32 %v1726, 16
      %v2016 = vrot.slane %v2014, 5
      %v2017 = vsel %vm223, %v2012, %v2016
      %v2018 = vshrl.u32 %v1726, 16
      %v2020 = vrot.slane %v2018, 4
      %v2021 = vor.u32 %v2020, %v2016
      %v2022 = vrot.slane %v2021, 4
      %v2024 = vshll.u32 %v1727, 16
      %v2026 = vrot.slane %v2024, 5
      %v2027 = vsel %vm223, %v2022, %v2026
      %v2029 = vshrl.u32 %v1728, 16
      %v2031 = vrot.slane %v2029, 4
      %v2032 = vshll.u32 %v1728, 16
      %v2034 = vrot.slane %v2032, 5
      %v2035 = vor.u32 %v2031, %v2034
      %v2036 = vrot.slane %v2035, 4
      %v2038 = vshll.u32 %v1729, 16
      %v2040 = vrot.slane %v2038, 5
      %v2041 = vsel %vm223, %v2036, %v2040
      %v2042 = vshrl.u32 %v1729, 16
      %v2044 = vrot.slane %v2042, 4
      %v2045 = vor.u32 %v2044, %v2040
      %v2046 = vrot.slane %v2045, 4
      %v2048 = vshll.u32 %v1730, 16
      %v2050 = vrot.slane %v2048, 5
      %v2051 = vsel %vm223, %v2046, %v2050
      %v2053 = vshrl.u32 %v1731, 16
      %v2055 = vrot.slane %v2053, 4
      %v2056 = vshll.u32 %v1731, 16
      %v2058 = vrot.slane %v2056, 5
      %v2059 = vor.u32 %v2055, %v2058
      %v2060 = vrot.slane %v2059, 4
      %v2062 = vshll.u32 %v1732, 16
      %v2064 = vrot.slane %v2062, 5
      %v2065 = vsel %vm223, %v2060, %v2064
      %v2066 = vshrl.u32 %v1732, 16
      %v2068 = vrot.slane %v2066, 4
      %v2069 = vor.u32 %v2068, %v2064
      %v2070 = vrot.slane %v2069, 4
      %v2072 = vshll.u32 %v1733, 16
      %v2074 = vrot.slane %v2072, 5
      %v2075 = vsel %vm223, %v2070, %v2074
      %v2077 = vshrl.u32 %v1734, 16
      %v2079 = vrot.slane %v2077, 4
      %v2080 = vshll.u32 %v1734, 16
      %v2082 = vrot.slane %v2080, 5
      %v2083 = vor.u32 %v2079, %v2082
      %v2084 = vrot.slane %v2083, 4
      %v2086 = vshll.u32 %v1735, 16
      %v2088 = vrot.slane %v2086, 5
      %v2089 = vsel %vm223, %v2084, %v2088
      %v2090 = vshrl.u32 %v1735, 16
      %v2092 = vrot.slane %v2090, 4
      %v2093 = vor.u32 %v2092, %v2088
      %v2094 = vrot.slane %v2093, 4
      %v2096 = vshll.u32 %v1736, 16
      %v2098 = vrot.slane %v2096, 5
      %v2099 = vsel %vm223, %v2094, %v2098
      %v2101 = vshrl.u32 %v1737, 16
      %v2103 = vrot.slane %v2101, 4
      %v2104 = vshll.u32 %v1737, 16
      %v2106 = vrot.slane %v2104, 5
      %v2107 = vor.u32 %v2103, %v2106
      %v2108 = vrot.slane %v2107, 4
      %v2110 = vshll.u32 %v1738, 16
      %v2112 = vrot.slane %v2110, 5
      %v2113 = vsel %vm223, %v2108, %v2112
      %v2114 = vshrl.u32 %v1738, 16
      %v2116 = vrot.slane %v2114, 4
      %v2117 = vor.u32 %v2116, %v2112
      %v2118 = vrot.slane %v2117, 4
      %v2120 = vshll.u32 %v1739, 16
      %v2122 = vrot.slane %v2120, 5
      %v2123 = vsel %vm223, %v2118, %v2122
      %s2124 = scalar_lea.vmem %s1, 8
      %v2125 = vld [vmem:[%s2124] sm:$0x3]
      %v2126 = vunpack.c.l.b16 %v1753
      %v2127 = vunpack.c.l.b16 %v1763
      %v2128 = vunpack.c.l.b16 %v1777
      %v2129 = vunpack.c.l.b16 %v1787
      %v2130 = vunpack.c.l.b16 %v1801
      %v2131 = vunpack.c.l.b16 %v1811
      %v2132 = vunpack.c.l.b16 %v1825
      %v2133 = vunpack.c.l.b16 %v1835
      %v2134 = vunpack.c.l.b16 %v1849
      %v2135 = vunpack.c.l.b16 %v1859
      %v2136 = vunpack.c.l.b16 %v1873
      %v2137 = vunpack.c.l.b16 %v1883
      %v2138 = vunpack.c.l.b16 %v1897
      %v2139 = vunpack.c.l.b16 %v1907
      %v2140 = vunpack.c.l.b16 %v1921
      %v2141 = vunpack.c.l.b16 %v1931
      %v2142 = vunpack.c.l.b16 %v1945
      %v2143 = vunpack.c.l.b16 %v1955
      %v2144 = vunpack.c.l.b16 %v1969
      %v2145 = vunpack.c.l.b16 %v1979
      %v2146 = vunpack.c.l.b16 %v1993
      %v2147 = vunpack.c.l.b16 %v2003
      %v2148 = vunpack.c.l.b16 %v2017
      %v2149 = vunpack.c.l.b16 %v2027
      %v2150 = vunpack.c.l.b16 %v2041
      %v2151 = vunpack.c.l.b16 %v2051
      %v2152 = vunpack.c.l.b16 %v2065
      %v2153 = vunpack.c.l.b16 %v2075
      %v2154 = vunpack.c.l.b16 %v2089
      %v2155 = vunpack.c.l.b16 %v2099
      %v2156 = vunpack.c.l.b16 %v2113
      %v2157 = vunpack.c.l.b16 %v2123
      %v2158 = vpack.c.b16 %v2127, %v2126
      %v2159 = vpack.c.b16 %v2129, %v2128
      %v2160 = vpack.c.b16 %v2131, %v2130
      %v2161 = vpack.c.b16 %v2133, %v2132
      %v2162 = vpack.c.b16 %v2135, %v2134
      %v2163 = vpack.c.b16 %v2137, %v2136
      %v2164 = vpack.c.b16 %v2139, %v2138
      %v2165 = vpack.c.b16 %v2141, %v2140
      %v2166 = vpack.c.b16 %v2143, %v2142
      %v2167 = vpack.c.b16 %v2145, %v2144
      %v2168 = vpack.c.b16 %v2147, %v2146
      %v2169 = vpack.c.b16 %v2149, %v2148
      %v2170 = vpack.c.b16 %v2151, %v2150
      %v2171 = vpack.c.b16 %v2153, %v2152
      %v2172 = vpack.c.b16 %v2155, %v2154
      %v2173 = vpack.c.b16 %v2157, %v2156
      %v2175 = vsel %vm658, %v2158, 0
      %v2178 = vsel %vm658, %v2159, 0
      %v2181 = vsel %vm658, %v2160, 0
      %v2184 = vsel %vm658, %v2161, 0
      %v2187 = vsel %vm658, %v2162, 0
      %v2190 = vsel %vm658, %v2163, 0
      %v2193 = vsel %vm658, %v2164, 0
      %v2196 = vsel %vm658, %v2165, 0
      %v2199 = vsel %vm658, %v2166, 0
      %v2202 = vsel %vm658, %v2167, 0
      %v2205 = vsel %vm658, %v2168, 0
      %v2208 = vsel %vm658, %v2169, 0
      %v2211 = vsel %vm658, %v2170, 0
      %v2214 = vsel %vm658, %v2171, 0
      %v2217 = vsel %vm658, %v2172, 0
      %v2220 = vsel %vm658, %v2173, 0
      %v2223 = vsel %vm707, %v2125, 0
      %2225 = vmatpush.bf16.msra.mxu0 0
      %2226 = vmatpush.bf16.msra.mxu0 0
      %2227 = vmatpush.bf16.msra.mxu0 0
      %2228 = vmatpush.bf16.msra.mxu0 0
      %2229 = vmatpush.bf16.msra.mxu0 0
      %2230 = vmatpush.bf16.msra.mxu0 0
      %2231 = vmatpush.bf16.msra.mxu0 0
      %2232 = vmatpush.bf16.msra.mxu0 %v2223
      %2233 = vmatmul.bf16.gmra.mxu0 %v2175
      %v2234 = vpop.f32.mrf.mxu0
      %v2235 = vadd.f32 0.0, %v2234
      %v2236 = vpop.f32.mrf.mxu0
      %v2237 = vadd.f32 0.0, %v2236
      %2238 = vmatmul.bf16.gmra.mxu0 %v2178
      %v2239 = vpop.f32.mrf.mxu0
      %v2240 = vadd.f32 0.0, %v2239
      %v2241 = vpop.f32.mrf.mxu0
      %v2242 = vadd.f32 0.0, %v2241
      %2243 = vmatmul.bf16.gmra.mxu0 %v2181
      %v2244 = vpop.f32.mrf.mxu0
      %v2245 = vadd.f32 0.0, %v2244
      %v2246 = vpop.f32.mrf.mxu0
      %v2247 = vadd.f32 0.0, %v2246
      %2248 = vmatmul.bf16.gmra.mxu0 %v2184
      %v2249 = vpop.f32.mrf.mxu0
      %v2250 = vadd.f32 0.0, %v2249
      %v2251 = vpop.f32.mrf.mxu0
      %v2252 = vadd.f32 0.0, %v2251
      %2253 = vmatmul.bf16.gmra.mxu0 %v2187
      %v2254 = vpop.f32.mrf.mxu0
      %v2255 = vadd.f32 0.0, %v2254
      %v2256 = vpop.f32.mrf.mxu0
      %v2257 = vadd.f32 0.0, %v2256
      %2258 = vmatmul.bf16.gmra.mxu0 %v2190
      %v2259 = vpop.f32.mrf.mxu0
      %v2260 = vadd.f32 0.0, %v2259
      %v2261 = vpop.f32.mrf.mxu0
      %v2262 = vadd.f32 0.0, %v2261
      %2263 = vmatmul.bf16.gmra.mxu0 %v2193
      %v2264 = vpop.f32.mrf.mxu0
      %v2265 = vadd.f32 0.0, %v2264
      %v2266 = vpop.f32.mrf.mxu0
      %v2267 = vadd.f32 0.0, %v2266
      %2268 = vmatmul.bf16.gmra.mxu0 %v2196
      %v2269 = vpop.f32.mrf.mxu0
      %v2270 = vadd.f32 0.0, %v2269
      %v2271 = vpop.f32.mrf.mxu0
      %v2272 = vadd.f32 0.0, %v2271
      %2273 = vmatmul.bf16.gmra.mxu0 %v2199
      %v2274 = vpop.f32.mrf.mxu0
      %v2275 = vadd.f32 0.0, %v2274
      %v2276 = vpop.f32.mrf.mxu0
      %v2277 = vadd.f32 0.0, %v2276
      %2278 = vmatmul.bf16.gmra.mxu0 %v2202
      %v2279 = vpop.f32.mrf.mxu0
      %v2280 = vadd.f32 0.0, %v2279
      %v2281 = vpop.f32.mrf.mxu0
      %v2282 = vadd.f32 0.0, %v2281
      %2283 = vmatmul.bf16.gmra.mxu0 %v2205
      %v2284 = vpop.f32.mrf.mxu0
      %v2285 = vadd.f32 0.0, %v2284
      %v2286 = vpop.f32.mrf.mxu0
      %v2287 = vadd.f32 0.0, %v2286
      %2288 = vmatmul.bf16.gmra.mxu0 %v2208
      %v2289 = vpop.f32.mrf.mxu0
      %v2290 = vadd.f32 0.0, %v2289
      %v2291 = vpop.f32.mrf.mxu0
      %v2292 = vadd.f32 0.0, %v2291
      %2293 = vmatmul.bf16.gmra.mxu0 %v2211
      %v2294 = vpop.f32.mrf.mxu0
      %v2295 = vadd.f32 0.0, %v2294
      %v2296 = vpop.f32.mrf.mxu0
      %v2297 = vadd.f32 0.0, %v2296
      %2298 = vmatmul.bf16.gmra.mxu0 %v2214
      %v2299 = vpop.f32.mrf.mxu0
      %v2300 = vadd.f32 0.0, %v2299
      %v2301 = vpop.f32.mrf.mxu0
      %v2302 = vadd.f32 0.0, %v2301
      %2303 = vmatmul.bf16.gmra.mxu0 %v2217
      %v2304 = vpop.f32.mrf.mxu0
      %v2305 = vadd.f32 0.0, %v2304
      %v2306 = vpop.f32.mrf.mxu0
      %v2307 = vadd.f32 0.0, %v2306
      %2308 = vmatmul.bf16.gmra.mxu0 %v2220
      %v2309 = vpop.f32.mrf.mxu0
      %v2310 = vadd.f32 0.0, %v2309
      %v2311 = vpop.f32.mrf.mxu0
      %v2312 = vadd.f32 0.0, %v2311
      %2313 = vdwg.mxu0
      %v2314 = vadd.f32 %v1660, %v2235
      %v2315 = vadd.f32 %v1661, %v2237
      %v2316 = vadd.f32 %v1662, %v2240
      %v2317 = vadd.f32 %v1663, %v2242
      %v2318 = vadd.f32 %v1664, %v2245
      %v2319 = vadd.f32 %v1665, %v2247
      %v2320 = vadd.f32 %v1666, %v2250
      %v2321 = vadd.f32 %v1667, %v2252
      %v2322 = vadd.f32 %v1668, %v2255
      %v2323 = vadd.f32 %v1669, %v2257
      %v2324 = vadd.f32 %v1670, %v2260
      %v2325 = vadd.f32 %v1671, %v2262
      %v2326 = vadd.f32 %v1672, %v2265
      %v2327 = vadd.f32 %v1673, %v2267
      %v2328 = vadd.f32 %v1674, %v2270
      %v2329 = vadd.f32 %v1675, %v2272
      %v2330 = vadd.f32 %v1676, %v2275
      %v2331 = vadd.f32 %v1677, %v2277
      %v2332 = vadd.f32 %v1678, %v2280
      %v2333 = vadd.f32 %v1679, %v2282
      %v2334 = vadd.f32 %v1680, %v2285
      %v2335 = vadd.f32 %v1681, %v2287
      %v2336 = vadd.f32 %v1682, %v2290
      %v2337 = vadd.f32 %v1683, %v2292
      %v2338 = vadd.f32 %v1684, %v2295
      %v2339 = vadd.f32 %v1685, %v2297
      %v2340 = vadd.f32 %v1686, %v2300
      %v2341 = vadd.f32 %v1687, %v2302
      %v2342 = vadd.f32 %v1688, %v2305
      %v2343 = vadd.f32 %v1689, %v2307
      %v2344 = vadd.f32 %v1690, %v2310
      %v2345 = vadd.f32 %v1691, %v2312
      %v2346 = vld [vmem:[%s1405] sm:$0xe]
      %v2347 = vld [vmem:[%s1405 + $0xc] sm:$0xe]
      %v2348 = vld [vmem:[%s1405 + $0x18] sm:$0xe]
      %v2349 = vld [vmem:[%s1405 + $0x24] sm:$0xe]
      %v2350 = vld [vmem:[%s1405 + $0x30] sm:$0xe]
      %v2351 = vld [vmem:[%s1405 + $0x3c] sm:$0xe]
      %v2352 = vld [vmem:[%s1405 + $0x48] sm:$0xe]
      %v2353 = vld [vmem:[%s1405 + $0x54] sm:$0xe]
      %v2354 = vld [vmem:[%s1405 + $0x60] sm:$0xe]
      %v2355 = vld [vmem:[%s1405 + $0x6c] sm:$0xe]
      %v2356 = vld [vmem:[%s1405 + $0x78] sm:$0xe]
      %v2357 = vld [vmem:[%s1405 + $0x84] sm:$0xe]
      %v2358 = vld [vmem:[%s1405 + $0x90] sm:$0xe]
      %v2359 = vld [vmem:[%s1405 + $0x9c] sm:$0xe]
      %v2360 = vld [vmem:[%s1405 + $0xa8] sm:$0xe]
      %v2361 = vld [vmem:[%s1405 + $0xb4] sm:$0xe]
      %v2410 = vrot.slane %v2346, 5
      %v2411 = vrot.slane %v2410, 4
      %v2412 = vrot.slane %v1693, 5
      %v2413 = vsel %vm1070, %v2411, %v2412
      %v2414 = vrot.slane %v2412, 4
      %v2415 = vrot.slane %v1694, 5
      %v2416 = vsel %vm1070, %v2414, %v2415
      %v2417 = vrot.slane %v2347, 5
      %v2418 = vrot.slane %v2417, 4
      %v2419 = vrot.slane %v1696, 5
      %v2420 = vsel %vm1070, %v2418, %v2419
      %v2421 = vrot.slane %v2419, 4
      %v2422 = vrot.slane %v1697, 5
      %v2423 = vsel %vm1070, %v2421, %v2422
      %v2424 = vrot.slane %v2348, 5
      %v2425 = vrot.slane %v2424, 4
      %v2426 = vrot.slane %v1699, 5
      %v2427 = vsel %vm1070, %v2425, %v2426
      %v2428 = vrot.slane %v2426, 4
      %v2429 = vrot.slane %v1700, 5
      %v2430 = vsel %vm1070, %v2428, %v2429
      %v2431 = vrot.slane %v2349, 5
      %v2432 = vrot.slane %v2431, 4
      %v2433 = vrot.slane %v1702, 5
      %v2434 = vsel %vm1070, %v2432, %v2433
      %v2435 = vrot.slane %v2433, 4
      %v2436 = vrot.slane %v1703, 5
      %v2437 = vsel %vm1070, %v2435, %v2436
      %v2438 = vrot.slane %v2350, 5
      %v2439 = vrot.slane %v2438, 4
      %v2440 = vrot.slane %v1705, 5
      %v2441 = vsel %vm1070, %v2439, %v2440
      %v2442 = vrot.slane %v2440, 4
      %v2443 = vrot.slane %v1706, 5
      %v2444 = vsel %vm1070, %v2442, %v2443
      %v2445 = vrot.slane %v2351, 5
      %v2446 = vrot.slane %v2445, 4
      %v2447 = vrot.slane %v1708, 5
      %v2448 = vsel %vm1070, %v2446, %v2447
      %v2449 = vrot.slane %v2447, 4
      %v2450 = vrot.slane %v1709, 5
      %v2451 = vsel %vm1070, %v2449, %v2450
      %v2452 = vrot.slane %v2352, 5
      %v2453 = vrot.slane %v2452, 4
      %v2454 = vrot.slane %v1711, 5
      %v2455 = vsel %vm1070, %v2453, %v2454
      %v2456 = vrot.slane %v2454, 4
      %v2457 = vrot.slane %v1712, 5
      %v2458 = vsel %vm1070, %v2456, %v2457
      %v2459 = vrot.slane %v2353, 5
      %v2460 = vrot.slane %v2459, 4
      %v2461 = vrot.slane %v1714, 5
      %v2462 = vsel %vm1070, %v2460, %v2461
      %v2463 = vrot.slane %v2461, 4
      %v2464 = vrot.slane %v1715, 5
      %v2465 = vsel %vm1070, %v2463, %v2464
      %v2466 = vrot.slane %v2354, 5
      %v2467 = vrot.slane %v2466, 4
      %v2468 = vrot.slane %v1717, 5
      %v2469 = vsel %vm1070, %v2467, %v2468
      %v2470 = vrot.slane %v2468, 4
      %v2471 = vrot.slane %v1718, 5
      %v2472 = vsel %vm1070, %v2470, %v2471
      %v2473 = vrot.slane %v2355, 5
      %v2474 = vrot.slane %v2473, 4
      %v2475 = vrot.slane %v1720, 5
      %v2476 = vsel %vm1070, %v2474, %v2475
      %v2477 = vrot.slane %v2475, 4
      %v2478 = vrot.slane %v1721, 5
      %v2479 = vsel %vm1070, %v2477, %v2478
      %v2480 = vrot.slane %v2356, 5
      %v2481 = vrot.slane %v2480, 4
      %v2482 = vrot.slane %v1723, 5
      %v2483 = vsel %vm1070, %v2481, %v2482
      %v2484 = vrot.slane %v2482, 4
      %v2485 = vrot.slane %v1724, 5
      %v2486 = vsel %vm1070, %v2484, %v2485
      %v2487 = vrot.slane %v2357, 5
      %v2488 = vrot.slane %v2487, 4
      %v2489 = vrot.slane %v1726, 5
      %v2490 = vsel %vm1070, %v2488, %v2489
      %v2491 = vrot.slane %v2489, 4
      %v2492 = vrot.slane %v1727, 5
      %v2493 = vsel %vm1070, %v2491, %v2492
      %v2494 = vrot.slane %v2358, 5
      %v2495 = vrot.slane %v2494, 4
      %v2496 = vrot.slane %v1729, 5
      %v2497 = vsel %vm1070, %v2495, %v2496
      %v2498 = vrot.slane %v2496, 4
      %v2499 = vrot.slane %v1730, 5
      %v2500 = vsel %vm1070, %v2498, %v2499
      %v2501 = vrot.slane %v2359, 5
      %v2502 = vrot.slane %v2501, 4
      %v2503 = vrot.slane %v1732, 5
      %v2504 = vsel %vm1070, %v2502, %v2503
      %v2505 = vrot.slane %v2503, 4
      %v2506 = vrot.slane %v1733, 5
      %v2507 = vsel %vm1070, %v2505, %v2506
      %v2508 = vrot.slane %v2360, 5
      %v2509 = vrot.slane %v2508, 4
      %v2510 = vrot.slane %v1735, 5
      %v2511 = vsel %vm1070, %v2509, %v2510
      %v2512 = vrot.slane %v2510, 4
      %v2513 = vrot.slane %v1736, 5
      %v2514 = vsel %vm1070, %v2512, %v2513
      %v2515 = vrot.slane %v2361, 5
      %v2516 = vrot.slane %v2515, 4
      %v2517 = vrot.slane %v1738, 5
      %v2518 = vsel %vm1070, %v2516, %v2517
      %v2519 = vrot.slane %v2517, 4
      %v2520 = vrot.slane %v1739, 5
      %v2521 = vsel %vm1070, %v2519, %v2520
      %s2522 = scalar_lea.vmem %s1, 10
      %v2523 = vld [vmem:[%s2522] sm:$0x3]
      %v2524 = vunpack.c.l.b16 %v2413
      %v2525 = vunpack.c.l.b16 %v2416
      %v2526 = vunpack.c.l.b16 %v2420
      %v2527 = vunpack.c.l.b16 %v2423
      %v2528 = vunpack.c.l.b16 %v2427
      %v2529 = vunpack.c.l.b16 %v2430
      %v2530 = vunpack.c.l.b16 %v2434
      %v2531 = vunpack.c.l.b16 %v2437
      %v2532 = vunpack.c.l.b16 %v2441
      %v2533 = vunpack.c.l.b16 %v2444
      %v2534 = vunpack.c.l.b16 %v2448
      %v2535 = vunpack.c.l.b16 %v2451
      %v2536 = vunpack.c.l.b16 %v2455
      %v2537 = vunpack.c.l.b16 %v2458
      %v2538 = vunpack.c.l.b16 %v2462
      %v2539 = vunpack.c.l.b16 %v2465
      %v2540 = vunpack.c.l.b16 %v2469
      %v2541 = vunpack.c.l.b16 %v2472
      %v2542 = vunpack.c.l.b16 %v2476
      %v2543 = vunpack.c.l.b16 %v2479
      %v2544 = vunpack.c.l.b16 %v2483
      %v2545 = vunpack.c.l.b16 %v2486
      %v2546 = vunpack.c.l.b16 %v2490
      %v2547 = vunpack.c.l.b16 %v2493
      %v2548 = vunpack.c.l.b16 %v2497
      %v2549 = vunpack.c.l.b16 %v2500
      %v2550 = vunpack.c.l.b16 %v2504
      %v2551 = vunpack.c.l.b16 %v2507
      %v2552 = vunpack.c.l.b16 %v2511
      %v2553 = vunpack.c.l.b16 %v2514
      %v2554 = vunpack.c.l.b16 %v2518
      %v2555 = vunpack.c.l.b16 %v2521
      %v2556 = vpack.c.b16 %v2525, %v2524
      %v2557 = vpack.c.b16 %v2527, %v2526
      %v2558 = vpack.c.b16 %v2529, %v2528
      %v2559 = vpack.c.b16 %v2531, %v2530
      %v2560 = vpack.c.b16 %v2533, %v2532
      %v2561 = vpack.c.b16 %v2535, %v2534
      %v2562 = vpack.c.b16 %v2537, %v2536
      %v2563 = vpack.c.b16 %v2539, %v2538
      %v2564 = vpack.c.b16 %v2541, %v2540
      %v2565 = vpack.c.b16 %v2543, %v2542
      %v2566 = vpack.c.b16 %v2545, %v2544
      %v2567 = vpack.c.b16 %v2547, %v2546
      %v2568 = vpack.c.b16 %v2549, %v2548
      %v2569 = vpack.c.b16 %v2551, %v2550
      %v2570 = vpack.c.b16 %v2553, %v2552
      %v2571 = vpack.c.b16 %v2555, %v2554
      %v2573 = vsel %vm658, %v2556, 0
      %v2576 = vsel %vm658, %v2557, 0
      %v2579 = vsel %vm658, %v2558, 0
      %v2582 = vsel %vm658, %v2559, 0
      %v2585 = vsel %vm658, %v2560, 0
      %v2588 = vsel %vm658, %v2561, 0
      %v2591 = vsel %vm658, %v2562, 0
      %v2594 = vsel %vm658, %v2563, 0
      %v2597 = vsel %vm658, %v2564, 0
      %v2600 = vsel %vm658, %v2565, 0
      %v2603 = vsel %vm658, %v2566, 0
      %v2606 = vsel %vm658, %v2567, 0
      %v2609 = vsel %vm658, %v2568, 0
      %v2612 = vsel %vm658, %v2569, 0
      %v2615 = vsel %vm658, %v2570, 0
      %v2618 = vsel %vm658, %v2571, 0
      %v2621 = vsel %vm707, %v2523, 0
      %2623 = vmatpush.bf16.msra.mxu0 0
      %2624 = vmatpush.bf16.msra.mxu0 0
      %2625 = vmatpush.bf16.msra.mxu0 0
      %2626 = vmatpush.bf16.msra.mxu0 0
      %2627 = vmatpush.bf16.msra.mxu0 0
      %2628 = vmatpush.bf16.msra.mxu0 0
      %2629 = vmatpush.bf16.msra.mxu0 0
      %2630 = vmatpush.bf16.msra.mxu0 %v2621
      %2631 = vmatmul.bf16.gmra.mxu0 %v2573
      %v2632 = vpop.f32.mrf.mxu0
      %v2633 = vadd.f32 0.0, %v2632
      %v2634 = vpop.f32.mrf.mxu0
      %v2635 = vadd.f32 0.0, %v2634
      %2636 = vmatmul.bf16.gmra.mxu0 %v2576
      %v2637 = vpop.f32.mrf.mxu0
      %v2638 = vadd.f32 0.0, %v2637
      %v2639 = vpop.f32.mrf.mxu0
      %v2640 = vadd.f32 0.0, %v2639
      %2641 = vmatmul.bf16.gmra.mxu0 %v2579
      %v2642 = vpop.f32.mrf.mxu0
      %v2643 = vadd.f32 0.0, %v2642
      %v2644 = vpop.f32.mrf.mxu0
      %v2645 = vadd.f32 0.0, %v2644
      %2646 = vmatmul.bf16.gmra.mxu0 %v2582
      %v2647 = vpop.f32.mrf.mxu0
      %v2648 = vadd.f32 0.0, %v2647
      %v2649 = vpop.f32.mrf.mxu0
      %v2650 = vadd.f32 0.0, %v2649
      %2651 = vmatmul.bf16.gmra.mxu0 %v2585
      %v2652 = vpop.f32.mrf.mxu0
      %v2653 = vadd.f32 0.0, %v2652
      %v2654 = vpop.f32.mrf.mxu0
      %v2655 = vadd.f32 0.0, %v2654
      %2656 = vmatmul.bf16.gmra.mxu0 %v2588
      %v2657 = vpop.f32.mrf.mxu0
      %v2658 = vadd.f32 0.0, %v2657
      %v2659 = vpop.f32.mrf.mxu0
      %v2660 = vadd.f32 0.0, %v2659
      %2661 = vmatmul.bf16.gmra.mxu0 %v2591
      %v2662 = vpop.f32.mrf.mxu0
      %v2663 = vadd.f32 0.0, %v2662
      %v2664 = vpop.f32.mrf.mxu0
      %v2665 = vadd.f32 0.0, %v2664
      %2666 = vmatmul.bf16.gmra.mxu0 %v2594
      %v2667 = vpop.f32.mrf.mxu0
      %v2668 = vadd.f32 0.0, %v2667
      %v2669 = vpop.f32.mrf.mxu0
      %v2670 = vadd.f32 0.0, %v2669
      %2671 = vmatmul.bf16.gmra.mxu0 %v2597
      %v2672 = vpop.f32.mrf.mxu0
      %v2673 = vadd.f32 0.0, %v2672
      %v2674 = vpop.f32.mrf.mxu0
      %v2675 = vadd.f32 0.0, %v2674
      %2676 = vmatmul.bf16.gmra.mxu0 %v2600
      %v2677 = vpop.f32.mrf.mxu0
      %v2678 = vadd.f32 0.0, %v2677
      %v2679 = vpop.f32.mrf.mxu0
      %v2680 = vadd.f32 0.0, %v2679
      %2681 = vmatmul.bf16.gmra.mxu0 %v2603
      %v2682 = vpop.f32.mrf.mxu0
      %v2683 = vadd.f32 0.0, %v2682
      %v2684 = vpop.f32.mrf.mxu0
      %v2685 = vadd.f32 0.0, %v2684
      %2686 = vmatmul.bf16.gmra.mxu0 %v2606
      %v2687 = vpop.f32.mrf.mxu0
      %v2688 = vadd.f32 0.0, %v2687
      %v2689 = vpop.f32.mrf.mxu0
      %v2690 = vadd.f32 0.0, %v2689
      %2691 = vmatmul.bf16.gmra.mxu0 %v2609
      %v2692 = vpop.f32.mrf.mxu0
      %v2693 = vadd.f32 0.0, %v2692
      %v2694 = vpop.f32.mrf.mxu0
      %v2695 = vadd.f32 0.0, %v2694
      %2696 = vmatmul.bf16.gmra.mxu0 %v2612
      %v2697 = vpop.f32.mrf.mxu0
      %v2698 = vadd.f32 0.0, %v2697
      %v2699 = vpop.f32.mrf.mxu0
      %v2700 = vadd.f32 0.0, %v2699
      %2701 = vmatmul.bf16.gmra.mxu0 %v2615
      %v2702 = vpop.f32.mrf.mxu0
      %v2703 = vadd.f32 0.0, %v2702
      %v2704 = vpop.f32.mrf.mxu0
      %v2705 = vadd.f32 0.0, %v2704
      %2706 = vmatmul.bf16.gmra.mxu0 %v2618
      %v2707 = vpop.f32.mrf.mxu0
      %v2708 = vadd.f32 0.0, %v2707
      %v2709 = vpop.f32.mrf.mxu0
      %v2710 = vadd.f32 0.0, %v2709
      %2711 = vdwg.mxu0
      %v2712 = vadd.f32 %v2314, %v2633
      %v2713 = vadd.f32 %v2315, %v2635
      %v2714 = vadd.f32 %v2316, %v2638
      %v2715 = vadd.f32 %v2317, %v2640
      %v2716 = vadd.f32 %v2318, %v2643
      %v2717 = vadd.f32 %v2319, %v2645
      %v2718 = vadd.f32 %v2320, %v2648
      %v2719 = vadd.f32 %v2321, %v2650
      %v2720 = vadd.f32 %v2322, %v2653
      %v2721 = vadd.f32 %v2323, %v2655
      %v2722 = vadd.f32 %v2324, %v2658
      %v2723 = vadd.f32 %v2325, %v2660
      %v2724 = vadd.f32 %v2326, %v2663
      %v2725 = vadd.f32 %v2327, %v2665
      %v2726 = vadd.f32 %v2328, %v2668
      %v2727 = vadd.f32 %v2329, %v2670
      %v2728 = vadd.f32 %v2330, %v2673
      %v2729 = vadd.f32 %v2331, %v2675
      %v2730 = vadd.f32 %v2332, %v2678
      %v2731 = vadd.f32 %v2333, %v2680
      %v2732 = vadd.f32 %v2334, %v2683
      %v2733 = vadd.f32 %v2335, %v2685
      %v2734 = vadd.f32 %v2336, %v2688
      %v2735 = vadd.f32 %v2337, %v2690
      %v2736 = vadd.f32 %v2338, %v2693
      %v2737 = vadd.f32 %v2339, %v2695
      %v2738 = vadd.f32 %v2340, %v2698
      %v2739 = vadd.f32 %v2341, %v2700
      %v2740 = vadd.f32 %v2342, %v2703
      %v2741 = vadd.f32 %v2343, %v2705
      %v2742 = vadd.f32 %v2344, %v2708
      %v2743 = vadd.f32 %v2345, %v2710
      %s2744 = scalar_lea.vmem %s165, 24
      %v2745 = vld [vmem:[%s2744] sm:$0xf]
      %v2746 = vld [vmem:[%s2744 + $0x4] sm:$0xf]
      %v2747 = vld [vmem:[%s2744 + $0xc] sm:$0xf]
      %v2748 = vld [vmem:[%s2744 + $0x10] sm:$0xf]
      %v2749 = vld [vmem:[%s2744 + $0x18] sm:$0xf]
      %v2750 = vld [vmem:[%s2744 + $0x1c] sm:$0xf]
      %v2751 = vld [vmem:[%s2744 + $0x24] sm:$0xf]
      %v2752 = vld [vmem:[%s2744 + $0x28] sm:$0xf]
      %v2753 = vld [vmem:[%s2744 + $0x30] sm:$0xf]
      %v2754 = vld [vmem:[%s2744 + $0x34] sm:$0xf]
      %v2755 = vld [vmem:[%s2744 + $0x3c] sm:$0xf]
      %v2756 = vld [vmem:[%s2744 + $0x40] sm:$0xf]
      %v2757 = vld [vmem:[%s2744 + $0x48] sm:$0xf]
      %v2758 = vld [vmem:[%s2744 + $0x4c] sm:$0xf]
      %v2759 = vld [vmem:[%s2744 + $0x54] sm:$0xf]
      %v2760 = vld [vmem:[%s2744 + $0x58] sm:$0xf]
      %v2761 = vld [vmem:[%s2744 + $0x60] sm:$0xf]
      %v2762 = vld [vmem:[%s2744 + $0x64] sm:$0xf]
      %v2763 = vld [vmem:[%s2744 + $0x6c] sm:$0xf]
      %v2764 = vld [vmem:[%s2744 + $0x70] sm:$0xf]
      %v2765 = vld [vmem:[%s2744 + $0x78] sm:$0xf]
      %v2766 = vld [vmem:[%s2744 + $0x7c] sm:$0xf]
      %v2767 = vld [vmem:[%s2744 + $0x84] sm:$0xf]
      %v2768 = vld [vmem:[%s2744 + $0x88] sm:$0xf]
      %v2769 = vld [vmem:[%s2744 + $0x90] sm:$0xf]
      %v2770 = vld [vmem:[%s2744 + $0x94] sm:$0xf]
      %v2771 = vld [vmem:[%s2744 + $0x9c] sm:$0xf]
      %v2772 = vld [vmem:[%s2744 + $0xa0] sm:$0xf]
      %v2773 = vld [vmem:[%s2744 + $0xa8] sm:$0xf]
      %v2774 = vld [vmem:[%s2744 + $0xac] sm:$0xf]
      %v2775 = vld [vmem:[%s2744 + $0xb4] sm:$0xf]
      %v2776 = vld [vmem:[%s2744 + $0xb8] sm:$0xf]
      %s2777 = scalar_lea.vmem %s1, 12
      %v2778 = vld [vmem:[%s2777] sm:$0x3]
      %v2811 = vunpack.c.l.b16 %v2745
      %v2812 = vunpack.c.l.b16 %v2746
      %v2813 = vunpack.c.l.b16 %v2747
      %v2814 = vunpack.c.l.b16 %v2748
      %v2815 = vunpack.c.l.b16 %v2749
      %v2816 = vunpack.c.l.b16 %v2750
      %v2817 = vunpack.c.l.b16 %v2751
      %v2818 = vunpack.c.l.b16 %v2752
      %v2819 = vunpack.c.l.b16 %v2753
      %v2820 = vunpack.c.l.b16 %v2754
      %v2821 = vunpack.c.l.b16 %v2755
      %v2822 = vunpack.c.l.b16 %v2756
      %v2823 = vunpack.c.l.b16 %v2757
      %v2824 = vunpack.c.l.b16 %v2758
      %v2825 = vunpack.c.l.b16 %v2759
      %v2826 = vunpack.c.l.b16 %v2760
      %v2827 = vunpack.c.l.b16 %v2761
      %v2828 = vunpack.c.l.b16 %v2762
      %v2829 = vunpack.c.l.b16 %v2763
      %v2830 = vunpack.c.l.b16 %v2764
      %v2831 = vunpack.c.l.b16 %v2765
      %v2832 = vunpack.c.l.b16 %v2766
      %v2833 = vunpack.c.l.b16 %v2767
      %v2834 = vunpack.c.l.b16 %v2768
      %v2835 = vunpack.c.l.b16 %v2769
      %v2836 = vunpack.c.l.b16 %v2770
      %v2837 = vunpack.c.l.b16 %v2771
      %v2838 = vunpack.c.l.b16 %v2772
      %v2839 = vunpack.c.l.b16 %v2773
      %v2840 = vunpack.c.l.b16 %v2774
      %v2841 = vunpack.c.l.b16 %v2775
      %v2842 = vunpack.c.l.b16 %v2776
      %v2843 = vpack.c.b16 %v2812, %v2811
      %v2844 = vpack.c.b16 %v2814, %v2813
      %v2845 = vpack.c.b16 %v2816, %v2815
      %v2846 = vpack.c.b16 %v2818, %v2817
      %v2847 = vpack.c.b16 %v2820, %v2819
      %v2848 = vpack.c.b16 %v2822, %v2821
      %v2849 = vpack.c.b16 %v2824, %v2823
      %v2850 = vpack.c.b16 %v2826, %v2825
      %v2851 = vpack.c.b16 %v2828, %v2827
      %v2852 = vpack.c.b16 %v2830, %v2829
      %v2853 = vpack.c.b16 %v2832, %v2831
      %v2854 = vpack.c.b16 %v2834, %v2833
      %v2855 = vpack.c.b16 %v2836, %v2835
      %v2856 = vpack.c.b16 %v2838, %v2837
      %v2857 = vpack.c.b16 %v2840, %v2839
      %v2858 = vpack.c.b16 %v2842, %v2841
      %v2860 = vsel %vm658, %v2843, 0
      %v2863 = vsel %vm658, %v2844, 0
      %v2866 = vsel %vm658, %v2845, 0
      %v2869 = vsel %vm658, %v2846, 0
      %v2872 = vsel %vm658, %v2847, 0
      %v2875 = vsel %vm658, %v2848, 0
      %v2878 = vsel %vm658, %v2849, 0
      %v2881 = vsel %vm658, %v2850, 0
      %v2884 = vsel %vm658, %v2851, 0
      %v2887 = vsel %vm658, %v2852, 0
      %v2890 = vsel %vm658, %v2853, 0
      %v2893 = vsel %vm658, %v2854, 0
      %v2896 = vsel %vm658, %v2855, 0
      %v2899 = vsel %vm658, %v2856, 0
      %v2902 = vsel %vm658, %v2857, 0
      %v2905 = vsel %vm658, %v2858, 0
      %v2908 = vsel %vm707, %v2778, 0
      %2910 = vmatpush.bf16.msra.mxu0 0
      %2911 = vmatpush.bf16.msra.mxu0 0
      %2912 = vmatpush.bf16.msra.mxu0 0
      %2913 = vmatpush.bf16.msra.mxu0 0
      %2914 = vmatpush.bf16.msra.mxu0 0
      %2915 = vmatpush.bf16.msra.mxu0 0
      %2916 = vmatpush.bf16.msra.mxu0 0
      %2917 = vmatpush.bf16.msra.mxu0 %v2908
      %2918 = vmatmul.bf16.gmra.mxu0 %v2860
      %v2919 = vpop.f32.mrf.mxu0
      %v2920 = vadd.f32 0.0, %v2919
      %v2921 = vpop.f32.mrf.mxu0
      %v2922 = vadd.f32 0.0, %v2921
      %2923 = vmatmul.bf16.gmra.mxu0 %v2863
      %v2924 = vpop.f32.mrf.mxu0
      %v2925 = vadd.f32 0.0, %v2924
      %v2926 = vpop.f32.mrf.mxu0
      %v2927 = vadd.f32 0.0, %v2926
      %2928 = vmatmul.bf16.gmra.mxu0 %v2866
      %v2929 = vpop.f32.mrf.mxu0
      %v2930 = vadd.f32 0.0, %v2929
      %v2931 = vpop.f32.mrf.mxu0
      %v2932 = vadd.f32 0.0, %v2931
      %2933 = vmatmul.bf16.gmra.mxu0 %v2869
      %v2934 = vpop.f32.mrf.mxu0
      %v2935 = vadd.f32 0.0, %v2934
      %v2936 = vpop.f32.mrf.mxu0
      %v2937 = vadd.f32 0.0, %v2936
      %2938 = vmatmul.bf16.gmra.mxu0 %v2872
      %v2939 = vpop.f32.mrf.mxu0
      %v2940 = vadd.f32 0.0, %v2939
      %v2941 = vpop.f32.mrf.mxu0
      %v2942 = vadd.f32 0.0, %v2941
      %2943 = vmatmul.bf16.gmra.mxu0 %v2875
      %v2944 = vpop.f32.mrf.mxu0
      %v2945 = vadd.f32 0.0, %v2944
      %v2946 = vpop.f32.mrf.mxu0
      %v2947 = vadd.f32 0.0, %v2946
      %2948 = vmatmul.bf16.gmra.mxu0 %v2878
      %v2949 = vpop.f32.mrf.mxu0
      %v2950 = vadd.f32 0.0, %v2949
      %v2951 = vpop.f32.mrf.mxu0
      %v2952 = vadd.f32 0.0, %v2951
      %2953 = vmatmul.bf16.gmra.mxu0 %v2881
      %v2954 = vpop.f32.mrf.mxu0
      %v2955 = vadd.f32 0.0, %v2954
      %v2956 = vpop.f32.mrf.mxu0
      %v2957 = vadd.f32 0.0, %v2956
      %2958 = vmatmul.bf16.gmra.mxu0 %v2884
      %v2959 = vpop.f32.mrf.mxu0
      %v2960 = vadd.f32 0.0, %v2959
      %v2961 = vpop.f32.mrf.mxu0
      %v2962 = vadd.f32 0.0, %v2961
      %2963 = vmatmul.bf16.gmra.mxu0 %v2887
      %v2964 = vpop.f32.mrf.mxu0
      %v2965 = vadd.f32 0.0, %v2964
      %v2966 = vpop.f32.mrf.mxu0
      %v2967 = vadd.f32 0.0, %v2966
      %2968 = vmatmul.bf16.gmra.mxu0 %v2890
      %v2969 = vpop.f32.mrf.mxu0
      %v2970 = vadd.f32 0.0, %v2969
      %v2971 = vpop.f32.mrf.mxu0
      %v2972 = vadd.f32 0.0, %v2971
      %2973 = vmatmul.bf16.gmra.mxu0 %v2893
      %v2974 = vpop.f32.mrf.mxu0
      %v2975 = vadd.f32 0.0, %v2974
      %v2976 = vpop.f32.mrf.mxu0
      %v2977 = vadd.f32 0.0, %v2976
      %2978 = vmatmul.bf16.gmra.mxu0 %v2896
      %v2979 = vpop.f32.mrf.mxu0
      %v2980 = vadd.f32 0.0, %v2979
      %v2981 = vpop.f32.mrf.mxu0
      %v2982 = vadd.f32 0.0, %v2981
      %2983 = vmatmul.bf16.gmra.mxu0 %v2899
      %v2984 = vpop.f32.mrf.mxu0
      %v2985 = vadd.f32 0.0, %v2984
      %v2986 = vpop.f32.mrf.mxu0
      %v2987 = vadd.f32 0.0, %v2986
      %2988 = vmatmul.bf16.gmra.mxu0 %v2902
      %v2989 = vpop.f32.mrf.mxu0
      %v2990 = vadd.f32 0.0, %v2989
      %v2991 = vpop.f32.mrf.mxu0
      %v2992 = vadd.f32 0.0, %v2991
      %2993 = vmatmul.bf16.gmra.mxu0 %v2905
      %v2994 = vpop.f32.mrf.mxu0
      %v2995 = vadd.f32 0.0, %v2994
      %v2996 = vpop.f32.mrf.mxu0
      %v2997 = vadd.f32 0.0, %v2996
      %2998 = vdwg.mxu0
      %v2999 = vadd.f32 %v2712, %v2920
      %v3000 = vadd.f32 %v2713, %v2922
      %v3001 = vadd.f32 %v2714, %v2925
      %v3002 = vadd.f32 %v2715, %v2927
      %v3003 = vadd.f32 %v2716, %v2930
      %v3004 = vadd.f32 %v2717, %v2932
      %v3005 = vadd.f32 %v2718, %v2935
      %v3006 = vadd.f32 %v2719, %v2937
      %v3007 = vadd.f32 %v2720, %v2940
      %v3008 = vadd.f32 %v2721, %v2942
      %v3009 = vadd.f32 %v2722, %v2945
      %v3010 = vadd.f32 %v2723, %v2947
      %v3011 = vadd.f32 %v2724, %v2950
      %v3012 = vadd.f32 %v2725, %v2952
      %v3013 = vadd.f32 %v2726, %v2955
      %v3014 = vadd.f32 %v2727, %v2957
      %v3015 = vadd.f32 %v2728, %v2960
      %v3016 = vadd.f32 %v2729, %v2962
      %v3017 = vadd.f32 %v2730, %v2965
      %v3018 = vadd.f32 %v2731, %v2967
      %v3019 = vadd.f32 %v2732, %v2970
      %v3020 = vadd.f32 %v2733, %v2972
      %v3021 = vadd.f32 %v2734, %v2975
      %v3022 = vadd.f32 %v2735, %v2977
      %v3023 = vadd.f32 %v2736, %v2980
      %v3024 = vadd.f32 %v2737, %v2982
      %v3025 = vadd.f32 %v2738, %v2985
      %v3026 = vadd.f32 %v2739, %v2987
      %v3027 = vadd.f32 %v2740, %v2990
      %v3028 = vadd.f32 %v2741, %v2992
      %v3029 = vadd.f32 %v2742, %v2995
      %v3030 = vadd.f32 %v2743, %v2997
      %v3031 = vld [vmem:[%s2744] sm:$0xf]
      %v3032 = vld [vmem:[%s2744 + $0x4] sm:$0xf]
      %v3033 = vld [vmem:[%s2744 + $0x8] sm:$0x1]
      %v3034 = vld [vmem:[%s2744 + $0xc] sm:$0xf]
      %v3035 = vld [vmem:[%s2744 + $0x10] sm:$0xf]
      %v3036 = vld [vmem:[%s2744 + $0x14] sm:$0x1]
      %v3037 = vld [vmem:[%s2744 + $0x18] sm:$0xf]
      %v3038 = vld [vmem:[%s2744 + $0x1c] sm:$0xf]
      %v3039 = vld [vmem:[%s2744 + $0x20] sm:$0x1]
      %v3040 = vld [vmem:[%s2744 + $0x24] sm:$0xf]
      %v3041 = vld [vmem:[%s2744 + $0x28] sm:$0xf]
      %v3042 = vld [vmem:[%s2744 + $0x2c] sm:$0x1]
      %v3043 = vld [vmem:[%s2744 + $0x30] sm:$0xf]
      %v3044 = vld [vmem:[%s2744 + $0x34] sm:$0xf]
      %v3045 = vld [vmem:[%s2744 + $0x38] sm:$0x1]
      %v3046 = vld [vmem:[%s2744 + $0x3c] sm:$0xf]
      %v3047 = vld [vmem:[%s2744 + $0x40] sm:$0xf]
      %v3048 = vld [vmem:[%s2744 + $0x44] sm:$0x1]
      %v3049 = vld [vmem:[%s2744 + $0x48] sm:$0xf]
      %v3050 = vld [vmem:[%s2744 + $0x4c] sm:$0xf]
      %v3051 = vld [vmem:[%s2744 + $0x50] sm:$0x1]
      %v3052 = vld [vmem:[%s2744 + $0x54] sm:$0xf]
      %v3053 = vld [vmem:[%s2744 + $0x58] sm:$0xf]
      %v3054 = vld [vmem:[%s2744 + $0x5c] sm:$0x1]
      %v3055 = vld [vmem:[%s2744 + $0x60] sm:$0xf]
      %v3056 = vld [vmem:[%s2744 + $0x64] sm:$0xf]
      %v3057 = vld [vmem:[%s2744 + $0x68] sm:$0x1]
      %v3058 = vld [vmem:[%s2744 + $0x6c] sm:$0xf]
      %v3059 = vld [vmem:[%s2744 + $0x70] sm:$0xf]
      %v3060 = vld [vmem:[%s2744 + $0x74] sm:$0x1]
      %v3061 = vld [vmem:[%s2744 + $0x78] sm:$0xf]
      %v3062 = vld [vmem:[%s2744 + $0x7c] sm:$0xf]
      %v3063 = vld [vmem:[%s2744 + $0x80] sm:$0x1]
      %v3064 = vld [vmem:[%s2744 + $0x84] sm:$0xf]
      %v3065 = vld [vmem:[%s2744 + $0x88] sm:$0xf]
      %v3066 = vld [vmem:[%s2744 + $0x8c] sm:$0x1]
      %v3067 = vld [vmem:[%s2744 + $0x90] sm:$0xf]
      %v3068 = vld [vmem:[%s2744 + $0x94] sm:$0xf]
      %v3069 = vld [vmem:[%s2744 + $0x98] sm:$0x1]
      %v3070 = vld [vmem:[%s2744 + $0x9c] sm:$0xf]
      %v3071 = vld [vmem:[%s2744 + $0xa0] sm:$0xf]
      %v3072 = vld [vmem:[%s2744 + $0xa4] sm:$0x1]
      %v3073 = vld [vmem:[%s2744 + $0xa8] sm:$0xf]
      %v3074 = vld [vmem:[%s2744 + $0xac] sm:$0xf]
      %v3075 = vld [vmem:[%s2744 + $0xb0] sm:$0x1]
      %v3076 = vld [vmem:[%s2744 + $0xb4] sm:$0xf]
      %v3077 = vld [vmem:[%s2744 + $0xb8] sm:$0xf]
      %v3078 = vld [vmem:[%s2744 + $0xbc] sm:$0x1]
      %v3080 = vshrl.u32 %v3031, 16
      %v3082 = vrot.slane %v3080, 4
      %v3083 = vshll.u32 %v3031, 16
      %v3085 = vrot.slane %v3083, 5
      %v3086 = vor.u32 %v3082, %v3085
      %v3087 = vrot.slane %v3086, 4
      %v3089 = vshll.u32 %v3032, 16
      %v3091 = vrot.slane %v3089, 5
      %v3092 = vsel %vm223, %v3087, %v3091
      %v3093 = vshrl.u32 %v3032, 16
      %v3095 = vrot.slane %v3093, 4
      %v3096 = vor.u32 %v3095, %v3091
      %v3097 = vrot.slane %v3096, 4
      %v3099 = vshll.u32 %v3033, 16
      %v3101 = vrot.slane %v3099, 5
      %v3102 = vsel %vm223, %v3097, %v3101
      %v3104 = vshrl.u32 %v3034, 16
      %v3106 = vrot.slane %v3104, 4
      %v3107 = vshll.u32 %v3034, 16
      %v3109 = vrot.slane %v3107, 5
      %v3110 = vor.u32 %v3106, %v3109
      %v3111 = vrot.slane %v3110, 4
      %v3113 = vshll.u32 %v3035, 16
      %v3115 = vrot.slane %v3113, 5
      %v3116 = vsel %vm223, %v3111, %v3115
      %v3117 = vshrl.u32 %v3035, 16
      %v3119 = vrot.slane %v3117, 4
      %v3120 = vor.u32 %v3119, %v3115
      %v3121 = vrot.slane %v3120, 4
      %v3123 = vshll.u32 %v3036, 16
      %v3125 = vrot.slane %v3123, 5
      %v3126 = vsel %vm223, %v3121, %v3125
      %v3128 = vshrl.u32 %v3037, 16
      %v3130 = vrot.slane %v3128, 4
      %v3131 = vshll.u32 %v3037, 16
      %v3133 = vrot.slane %v3131, 5
      %v3134 = vor.u32 %v3130, %v3133
      %v3135 = vrot.slane %v3134, 4
      %v3137 = vshll.u32 %v3038, 16
      %v3139 = vrot.slane %v3137, 5
      %v3140 = vsel %vm223, %v3135, %v3139
      %v3141 = vshrl.u32 %v3038, 16
      %v3143 = vrot.slane %v3141, 4
      %v3144 = vor.u32 %v3143, %v3139
      %v3145 = vrot.slane %v3144, 4
      %v3147 = vshll.u32 %v3039, 16
      %v3149 = vrot.slane %v3147, 5
      %v3150 = vsel %vm223, %v3145, %v3149
      %v3152 = vshrl.u32 %v3040, 16
      %v3154 = vrot.slane %v3152, 4
      %v3155 = vshll.u32 %v3040, 16
      %v3157 = vrot.slane %v3155, 5
      %v3158 = vor.u32 %v3154, %v3157
      %v3159 = vrot.slane %v3158, 4
      %v3161 = vshll.u32 %v3041, 16
      %v3163 = vrot.slane %v3161, 5
      %v3164 = vsel %vm223, %v3159, %v3163
      %v3165 = vshrl.u32 %v3041, 16
      %v3167 = vrot.slane %v3165, 4
      %v3168 = vor.u32 %v3167, %v3163
      %v3169 = vrot.slane %v3168, 4
      %v3171 = vshll.u32 %v3042, 16
      %v3173 = vrot.slane %v3171, 5
      %v3174 = vsel %vm223, %v3169, %v3173
      %v3176 = vshrl.u32 %v3043, 16
      %v3178 = vrot.slane %v3176, 4
      %v3179 = vshll.u32 %v3043, 16
      %v3181 = vrot.slane %v3179, 5
      %v3182 = vor.u32 %v3178, %v3181
      %v3183 = vrot.slane %v3182, 4
      %v3185 = vshll.u32 %v3044, 16
      %v3187 = vrot.slane %v3185, 5
      %v3188 = vsel %vm223, %v3183, %v3187
      %v3189 = vshrl.u32 %v3044, 16
      %v3191 = vrot.slane %v3189, 4
      %v3192 = vor.u32 %v3191, %v3187
      %v3193 = vrot.slane %v3192, 4
      %v3195 = vshll.u32 %v3045, 16
      %v3197 = vrot.slane %v3195, 5
      %v3198 = vsel %vm223, %v3193, %v3197
      %v3200 = vshrl.u32 %v3046, 16
      %v3202 = vrot.slane %v3200, 4
      %v3203 = vshll.u32 %v3046, 16
      %v3205 = vrot.slane %v3203, 5
      %v3206 = vor.u32 %v3202, %v3205
      %v3207 = vrot.slane %v3206, 4
      %v3209 = vshll.u32 %v3047, 16
      %v3211 = vrot.slane %v3209, 5
      %v3212 = vsel %vm223, %v3207, %v3211
      %v3213 = vshrl.u32 %v3047, 16
      %v3215 = vrot.slane %v3213, 4
      %v3216 = vor.u32 %v3215, %v3211
      %v3217 = vrot.slane %v3216, 4
      %v3219 = vshll.u32 %v3048, 16
      %v3221 = vrot.slane %v3219, 5
      %v3222 = vsel %vm223, %v3217, %v3221
      %v3224 = vshrl.u32 %v3049, 16
      %v3226 = vrot.slane %v3224, 4
      %v3227 = vshll.u32 %v3049, 16
      %v3229 = vrot.slane %v3227, 5
      %v3230 = vor.u32 %v3226, %v3229
      %v3231 = vrot.slane %v3230, 4
      %v3233 = vshll.u32 %v3050, 16
      %v3235 = vrot.slane %v3233, 5
      %v3236 = vsel %vm223, %v3231, %v3235
      %v3237 = vshrl.u32 %v3050, 16
      %v3239 = vrot.slane %v3237, 4
      %v3240 = vor.u32 %v3239, %v3235
      %v3241 = vrot.slane %v3240, 4
      %v3243 = vshll.u32 %v3051, 16
      %v3245 = vrot.slane %v3243, 5
      %v3246 = vsel %vm223, %v3241, %v3245
      %v3248 = vshrl.u32 %v3052, 16
      %v3250 = vrot.slane %v3248, 4
      %v3251 = vshll.u32 %v3052, 16
      %v3253 = vrot.slane %v3251, 5
      %v3254 = vor.u32 %v3250, %v3253
      %v3255 = vrot.slane %v3254, 4
      %v3257 = vshll.u32 %v3053, 16
      %v3259 = vrot.slane %v3257, 5
      %v3260 = vsel %vm223, %v3255, %v3259
      %v3261 = vshrl.u32 %v3053, 16
      %v3263 = vrot.slane %v3261, 4
      %v3264 = vor.u32 %v3263, %v3259
      %v3265 = vrot.slane %v3264, 4
      %v3267 = vshll.u32 %v3054, 16
      %v3269 = vrot.slane %v3267, 5
      %v3270 = vsel %vm223, %v3265, %v3269
      %v3272 = vshrl.u32 %v3055, 16
      %v3274 = vrot.slane %v3272, 4
      %v3275 = vshll.u32 %v3055, 16
      %v3277 = vrot.slane %v3275, 5
      %v3278 = vor.u32 %v3274, %v3277
      %v3279 = vrot.slane %v3278, 4
      %v3281 = vshll.u32 %v3056, 16
      %v3283 = vrot.slane %v3281, 5
      %v3284 = vsel %vm223, %v3279, %v3283
      %v3285 = vshrl.u32 %v3056, 16
      %v3287 = vrot.slane %v3285, 4
      %v3288 = vor.u32 %v3287, %v3283
      %v3289 = vrot.slane %v3288, 4
      %v3291 = vshll.u32 %v3057, 16
      %v3293 = vrot.slane %v3291, 5
      %v3294 = vsel %vm223, %v3289, %v3293
      %v3296 = vshrl.u32 %v3058, 16
      %v3298 = vrot.slane %v3296, 4
      %v3299 = vshll.u32 %v3058, 16
      %v3301 = vrot.slane %v3299, 5
      %v3302 = vor.u32 %v3298, %v3301
      %v3303 = vrot.slane %v3302, 4
      %v3305 = vshll.u32 %v3059, 16
      %v3307 = vrot.slane %v3305, 5
      %v3308 = vsel %vm223, %v3303, %v3307
      %v3309 = vshrl.u32 %v3059, 16
      %v3311 = vrot.slane %v3309, 4
      %v3312 = vor.u32 %v3311, %v3307
      %v3313 = vrot.slane %v3312, 4
      %v3315 = vshll.u32 %v3060, 16
      %v3317 = vrot.slane %v3315, 5
      %v3318 = vsel %vm223, %v3313, %v3317
      %v3320 = vshrl.u32 %v3061, 16
      %v3322 = vrot.slane %v3320, 4
      %v3323 = vshll.u32 %v3061, 16
      %v3325 = vrot.slane %v3323, 5
      %v3326 = vor.u32 %v3322, %v3325
      %v3327 = vrot.slane %v3326, 4
      %v3329 = vshll.u32 %v3062, 16
      %v3331 = vrot.slane %v3329, 5
      %v3332 = vsel %vm223, %v3327, %v3331
      %v3333 = vshrl.u32 %v3062, 16
      %v3335 = vrot.slane %v3333, 4
      %v3336 = vor.u32 %v3335, %v3331
      %v3337 = vrot.slane %v3336, 4
      %v3339 = vshll.u32 %v3063, 16
      %v3341 = vrot.slane %v3339, 5
      %v3342 = vsel %vm223, %v3337, %v3341
      %v3344 = vshrl.u32 %v3064, 16
      %v3346 = vrot.slane %v3344, 4
      %v3347 = vshll.u32 %v3064, 16
      %v3349 = vrot.slane %v3347, 5
      %v3350 = vor.u32 %v3346, %v3349
      %v3351 = vrot.slane %v3350, 4
      %v3353 = vshll.u32 %v3065, 16
      %v3355 = vrot.slane %v3353, 5
      %v3356 = vsel %vm223, %v3351, %v3355
      %v3357 = vshrl.u32 %v3065, 16
      %v3359 = vrot.slane %v3357, 4
      %v3360 = vor.u32 %v3359, %v3355
      %v3361 = vrot.slane %v3360, 4
      %v3363 = vshll.u32 %v3066, 16
      %v3365 = vrot.slane %v3363, 5
      %v3366 = vsel %vm223, %v3361, %v3365
      %v3368 = vshrl.u32 %v3067, 16
      %v3370 = vrot.slane %v3368, 4
      %v3371 = vshll.u32 %v3067, 16
      %v3373 = vrot.slane %v3371, 5
      %v3374 = vor.u32 %v3370, %v3373
      %v3375 = vrot.slane %v3374, 4
      %v3377 = vshll.u32 %v3068, 16
      %v3379 = vrot.slane %v3377, 5
      %v3380 = vsel %vm223, %v3375, %v3379
      %v3381 = vshrl.u32 %v3068, 16
      %v3383 = vrot.slane %v3381, 4
      %v3384 = vor.u32 %v3383, %v3379
      %v3385 = vrot.slane %v3384, 4
      %v3387 = vshll.u32 %v3069, 16
      %v3389 = vrot.slane %v3387, 5
      %v3390 = vsel %vm223, %v3385, %v3389
      %v3392 = vshrl.u32 %v3070, 16
      %v3394 = vrot.slane %v3392, 4
      %v3395 = vshll.u32 %v3070, 16
      %v3397 = vrot.slane %v3395, 5
      %v3398 = vor.u32 %v3394, %v3397
      %v3399 = vrot.slane %v3398, 4
      %v3401 = vshll.u32 %v3071, 16
      %v3403 = vrot.slane %v3401, 5
      %v3404 = vsel %vm223, %v3399, %v3403
      %v3405 = vshrl.u32 %v3071, 16
      %v3407 = vrot.slane %v3405, 4
      %v3408 = vor.u32 %v3407, %v3403
      %v3409 = vrot.slane %v3408, 4
      %v3411 = vshll.u32 %v3072, 16
      %v3413 = vrot.slane %v3411, 5
      %v3414 = vsel %vm223, %v3409, %v3413
      %v3416 = vshrl.u32 %v3073, 16
      %v3418 = vrot.slane %v3416, 4
      %v3419 = vshll.u32 %v3073, 16
      %v3421 = vrot.slane %v3419, 5
      %v3422 = vor.u32 %v3418, %v3421
      %v3423 = vrot.slane %v3422, 4
      %v3425 = vshll.u32 %v3074, 16
      %v3427 = vrot.slane %v3425, 5
      %v3428 = vsel %vm223, %v3423, %v3427
      %v3429 = vshrl.u32 %v3074, 16
      %v3431 = vrot.slane %v3429, 4
      %v3432 = vor.u32 %v3431, %v3427
      %v3433 = vrot.slane %v3432, 4
      %v3435 = vshll.u32 %v3075, 16
      %v3437 = vrot.slane %v3435, 5
      %v3438 = vsel %vm223, %v3433, %v3437
      %v3440 = vshrl.u32 %v3076, 16
      %v3442 = vrot.slane %v3440, 4
      %v3443 = vshll.u32 %v3076, 16
      %v3445 = vrot.slane %v3443, 5
      %v3446 = vor.u32 %v3442, %v3445
      %v3447 = vrot.slane %v3446, 4
      %v3449 = vshll.u32 %v3077, 16
      %v3451 = vrot.slane %v3449, 5
      %v3452 = vsel %vm223, %v3447, %v3451
      %v3453 = vshrl.u32 %v3077, 16
      %v3455 = vrot.slane %v3453, 4
      %v3456 = vor.u32 %v3455, %v3451
      %v3457 = vrot.slane %v3456, 4
      %v3459 = vshll.u32 %v3078, 16
      %v3461 = vrot.slane %v3459, 5
      %v3462 = vsel %vm223, %v3457, %v3461
      %s3463 = scalar_lea.vmem %s1, 14
      %v3464 = vld [vmem:[%s3463] sm:$0x3]
      %v3465 = vunpack.c.l.b16 %v3092
      %v3466 = vunpack.c.l.b16 %v3102
      %v3467 = vunpack.c.l.b16 %v3116
      %v3468 = vunpack.c.l.b16 %v3126
      %v3469 = vunpack.c.l.b16 %v3140
      %v3470 = vunpack.c.l.b16 %v3150
      %v3471 = vunpack.c.l.b16 %v3164
      %v3472 = vunpack.c.l.b16 %v3174
      %v3473 = vunpack.c.l.b16 %v3188
      %v3474 = vunpack.c.l.b16 %v3198
      %v3475 = vunpack.c.l.b16 %v3212
      %v3476 = vunpack.c.l.b16 %v3222
      %v3477 = vunpack.c.l.b16 %v3236
      %v3478 = vunpack.c.l.b16 %v3246
      %v3479 = vunpack.c.l.b16 %v3260
      %v3480 = vunpack.c.l.b16 %v3270
      %v3481 = vunpack.c.l.b16 %v3284
      %v3482 = vunpack.c.l.b16 %v3294
      %v3483 = vunpack.c.l.b16 %v3308
      %v3484 = vunpack.c.l.b16 %v3318
      %v3485 = vunpack.c.l.b16 %v3332
      %v3486 = vunpack.c.l.b16 %v3342
      %v3487 = vunpack.c.l.b16 %v3356
      %v3488 = vunpack.c.l.b16 %v3366
      %v3489 = vunpack.c.l.b16 %v3380
      %v3490 = vunpack.c.l.b16 %v3390
      %v3491 = vunpack.c.l.b16 %v3404
      %v3492 = vunpack.c.l.b16 %v3414
      %v3493 = vunpack.c.l.b16 %v3428
      %v3494 = vunpack.c.l.b16 %v3438
      %v3495 = vunpack.c.l.b16 %v3452
      %v3496 = vunpack.c.l.b16 %v3462
      %v3497 = vpack.c.b16 %v3466, %v3465
      %v3498 = vpack.c.b16 %v3468, %v3467
      %v3499 = vpack.c.b16 %v3470, %v3469
      %v3500 = vpack.c.b16 %v3472, %v3471
      %v3501 = vpack.c.b16 %v3474, %v3473
      %v3502 = vpack.c.b16 %v3476, %v3475
      %v3503 = vpack.c.b16 %v3478, %v3477
      %v3504 = vpack.c.b16 %v3480, %v3479
      %v3505 = vpack.c.b16 %v3482, %v3481
      %v3506 = vpack.c.b16 %v3484, %v3483
      %v3507 = vpack.c.b16 %v3486, %v3485
      %v3508 = vpack.c.b16 %v3488, %v3487
      %v3509 = vpack.c.b16 %v3490, %v3489
      %v3510 = vpack.c.b16 %v3492, %v3491
      %v3511 = vpack.c.b16 %v3494, %v3493
      %v3512 = vpack.c.b16 %v3496, %v3495
      %v3514 = vsel %vm658, %v3497, 0
      %v3517 = vsel %vm658, %v3498, 0
      %v3520 = vsel %vm658, %v3499, 0
      %v3523 = vsel %vm658, %v3500, 0
      %v3526 = vsel %vm658, %v3501, 0
      %v3529 = vsel %vm658, %v3502, 0
      %v3532 = vsel %vm658, %v3503, 0
      %v3535 = vsel %vm658, %v3504, 0
      %v3538 = vsel %vm658, %v3505, 0
      %v3541 = vsel %vm658, %v3506, 0
      %v3544 = vsel %vm658, %v3507, 0
      %v3547 = vsel %vm658, %v3508, 0
      %v3550 = vsel %vm658, %v3509, 0
      %v3553 = vsel %vm658, %v3510, 0
      %v3556 = vsel %vm658, %v3511, 0
      %v3559 = vsel %vm658, %v3512, 0
      %v3562 = vsel %vm707, %v3464, 0
      %3564 = vmatpush.bf16.msra.mxu0 0
      %3565 = vmatpush.bf16.msra.mxu0 0
      %3566 = vmatpush.bf16.msra.mxu0 0
      %3567 = vmatpush.bf16.msra.mxu0 0
      %3568 = vmatpush.bf16.msra.mxu0 0
      %3569 = vmatpush.bf16.msra.mxu0 0
      %3570 = vmatpush.bf16.msra.mxu0 0
      %3571 = vmatpush.bf16.msra.mxu0 %v3562
      %3572 = vmatmul.bf16.gmra.mxu0 %v3514
      %v3573 = vpop.f32.mrf.mxu0
      %v3574 = vadd.f32 0.0, %v3573
      %v3575 = vpop.f32.mrf.mxu0
      %v3576 = vadd.f32 0.0, %v3575
      %3577 = vmatmul.bf16.gmra.mxu0 %v3517
      %v3578 = vpop.f32.mrf.mxu0
      %v3579 = vadd.f32 0.0, %v3578
      %v3580 = vpop.f32.mrf.mxu0
      %v3581 = vadd.f32 0.0, %v3580
      %3582 = vmatmul.bf16.gmra.mxu0 %v3520
      %v3583 = vpop.f32.mrf.mxu0
      %v3584 = vadd.f32 0.0, %v3583
      %v3585 = vpop.f32.mrf.mxu0
      %v3586 = vadd.f32 0.0, %v3585
      %3587 = vmatmul.bf16.gmra.mxu0 %v3523
      %v3588 = vpop.f32.mrf.mxu0
      %v3589 = vadd.f32 0.0, %v3588
      %v3590 = vpop.f32.mrf.mxu0
      %v3591 = vadd.f32 0.0, %v3590
      %3592 = vmatmul.bf16.gmra.mxu0 %v3526
      %v3593 = vpop.f32.mrf.mxu0
      %v3594 = vadd.f32 0.0, %v3593
      %v3595 = vpop.f32.mrf.mxu0
      %v3596 = vadd.f32 0.0, %v3595
      %3597 = vmatmul.bf16.gmra.mxu0 %v3529
      %v3598 = vpop.f32.mrf.mxu0
      %v3599 = vadd.f32 0.0, %v3598
      %v3600 = vpop.f32.mrf.mxu0
      %v3601 = vadd.f32 0.0, %v3600
      %3602 = vmatmul.bf16.gmra.mxu0 %v3532
      %v3603 = vpop.f32.mrf.mxu0
      %v3604 = vadd.f32 0.0, %v3603
      %v3605 = vpop.f32.mrf.mxu0
      %v3606 = vadd.f32 0.0, %v3605
      %3607 = vmatmul.bf16.gmra.mxu0 %v3535
      %v3608 = vpop.f32.mrf.mxu0
      %v3609 = vadd.f32 0.0, %v3608
      %v3610 = vpop.f32.mrf.mxu0
      %v3611 = vadd.f32 0.0, %v3610
      %3612 = vmatmul.bf16.gmra.mxu0 %v3538
      %v3613 = vpop.f32.mrf.mxu0
      %v3614 = vadd.f32 0.0, %v3613
      %v3615 = vpop.f32.mrf.mxu0
      %v3616 = vadd.f32 0.0, %v3615
      %3617 = vmatmul.bf16.gmra.mxu0 %v3541
      %v3618 = vpop.f32.mrf.mxu0
      %v3619 = vadd.f32 0.0, %v3618
      %v3620 = vpop.f32.mrf.mxu0
      %v3621 = vadd.f32 0.0, %v3620
      %3622 = vmatmul.bf16.gmra.mxu0 %v3544
      %v3623 = vpop.f32.mrf.mxu0
      %v3624 = vadd.f32 0.0, %v3623
      %v3625 = vpop.f32.mrf.mxu0
      %v3626 = vadd.f32 0.0, %v3625
      %3627 = vmatmul.bf16.gmra.mxu0 %v3547
      %v3628 = vpop.f32.mrf.mxu0
      %v3629 = vadd.f32 0.0, %v3628
      %v3630 = vpop.f32.mrf.mxu0
      %v3631 = vadd.f32 0.0, %v3630
      %3632 = vmatmul.bf16.gmra.mxu0 %v3550
      %v3633 = vpop.f32.mrf.mxu0
      %v3634 = vadd.f32 0.0, %v3633
      %v3635 = vpop.f32.mrf.mxu0
      %v3636 = vadd.f32 0.0, %v3635
      %3637 = vmatmul.bf16.gmra.mxu0 %v3553
      %v3638 = vpop.f32.mrf.mxu0
      %v3639 = vadd.f32 0.0, %v3638
      %v3640 = vpop.f32.mrf.mxu0
      %v3641 = vadd.f32 0.0, %v3640
      %3642 = vmatmul.bf16.gmra.mxu0 %v3556
      %v3643 = vpop.f32.mrf.mxu0
      %v3644 = vadd.f32 0.0, %v3643
      %v3645 = vpop.f32.mrf.mxu0
      %v3646 = vadd.f32 0.0, %v3645
      %3647 = vmatmul.bf16.gmra.mxu0 %v3559
      %v3648 = vpop.f32.mrf.mxu0
      %v3649 = vadd.f32 0.0, %v3648
      %v3650 = vpop.f32.mrf.mxu0
      %v3651 = vadd.f32 0.0, %v3650
      %3652 = vdwg.mxu0
      %v3653 = vadd.f32 %v2999, %v3574
      %v3654 = vadd.f32 %v3000, %v3576
      %v3655 = vadd.f32 %v3001, %v3579
      %v3656 = vadd.f32 %v3002, %v3581
      %v3657 = vadd.f32 %v3003, %v3584
      %v3658 = vadd.f32 %v3004, %v3586
      %v3659 = vadd.f32 %v3005, %v3589
      %v3660 = vadd.f32 %v3006, %v3591
      %v3661 = vadd.f32 %v3007, %v3594
      %v3662 = vadd.f32 %v3008, %v3596
      %v3663 = vadd.f32 %v3009, %v3599
      %v3664 = vadd.f32 %v3010, %v3601
      %v3665 = vadd.f32 %v3011, %v3604
      %v3666 = vadd.f32 %v3012, %v3606
      %v3667 = vadd.f32 %v3013, %v3609
      %v3668 = vadd.f32 %v3014, %v3611
      %v3669 = vadd.f32 %v3015, %v3614
      %v3670 = vadd.f32 %v3016, %v3616
      %v3671 = vadd.f32 %v3017, %v3619
      %v3672 = vadd.f32 %v3018, %v3621
      %v3673 = vadd.f32 %v3019, %v3624
      %v3674 = vadd.f32 %v3020, %v3626
      %v3675 = vadd.f32 %v3021, %v3629
      %v3676 = vadd.f32 %v3022, %v3631
      %v3677 = vadd.f32 %v3023, %v3634
      %v3678 = vadd.f32 %v3024, %v3636
      %v3679 = vadd.f32 %v3025, %v3639
      %v3680 = vadd.f32 %v3026, %v3641
      %v3681 = vadd.f32 %v3027, %v3644
      %v3682 = vadd.f32 %v3028, %v3646
      %v3683 = vadd.f32 %v3029, %v3649
      %v3684 = vadd.f32 %v3030, %v3651
      %v3685 = vld [vmem:[%s2744] sm:$0xe]
      %v3686 = vld [vmem:[%s2744 + $0xc] sm:$0xe]
      %v3687 = vld [vmem:[%s2744 + $0x18] sm:$0xe]
      %v3688 = vld [vmem:[%s2744 + $0x24] sm:$0xe]
      %v3689 = vld [vmem:[%s2744 + $0x30] sm:$0xe]
      %v3690 = vld [vmem:[%s2744 + $0x3c] sm:$0xe]
      %v3691 = vld [vmem:[%s2744 + $0x48] sm:$0xe]
      %v3692 = vld [vmem:[%s2744 + $0x54] sm:$0xe]
      %v3693 = vld [vmem:[%s2744 + $0x60] sm:$0xe]
      %v3694 = vld [vmem:[%s2744 + $0x6c] sm:$0xe]
      %v3695 = vld [vmem:[%s2744 + $0x78] sm:$0xe]
      %v3696 = vld [vmem:[%s2744 + $0x84] sm:$0xe]
      %v3697 = vld [vmem:[%s2744 + $0x90] sm:$0xe]
      %v3698 = vld [vmem:[%s2744 + $0x9c] sm:$0xe]
      %v3699 = vld [vmem:[%s2744 + $0xa8] sm:$0xe]
      %v3700 = vld [vmem:[%s2744 + $0xb4] sm:$0xe]
      %v3749 = vrot.slane %v3685, 5
      %v3750 = vrot.slane %v3749, 4
      %v3751 = vrot.slane %v3032, 5
      %v3752 = vsel %vm1070, %v3750, %v3751
      %v3753 = vrot.slane %v3751, 4
      %v3754 = vrot.slane %v3033, 5
      %v3755 = vsel %vm1070, %v3753, %v3754
      %v3756 = vrot.slane %v3686, 5
      %v3757 = vrot.slane %v3756, 4
      %v3758 = vrot.slane %v3035, 5
      %v3759 = vsel %vm1070, %v3757, %v3758
      %v3760 = vrot.slane %v3758, 4
      %v3761 = vrot.slane %v3036, 5
      %v3762 = vsel %vm1070, %v3760, %v3761
      %v3763 = vrot.slane %v3687, 5
      %v3764 = vrot.slane %v3763, 4
      %v3765 = vrot.slane %v3038, 5
      %v3766 = vsel %vm1070, %v3764, %v3765
      %v3767 = vrot.slane %v3765, 4
      %v3768 = vrot.slane %v3039, 5
      %v3769 = vsel %vm1070, %v3767, %v3768
      %v3770 = vrot.slane %v3688, 5
      %v3771 = vrot.slane %v3770, 4
      %v3772 = vrot.slane %v3041, 5
      %v3773 = vsel %vm1070, %v3771, %v3772
      %v3774 = vrot.slane %v3772, 4
      %v3775 = vrot.slane %v3042, 5
      %v3776 = vsel %vm1070, %v3774, %v3775
      %v3777 = vrot.slane %v3689, 5
      %v3778 = vrot.slane %v3777, 4
      %v3779 = vrot.slane %v3044, 5
      %v3780 = vsel %vm1070, %v3778, %v3779
      %v3781 = vrot.slane %v3779, 4
      %v3782 = vrot.slane %v3045, 5
      %v3783 = vsel %vm1070, %v3781, %v3782
      %v3784 = vrot.slane %v3690, 5
      %v3785 = vrot.slane %v3784, 4
      %v3786 = vrot.slane %v3047, 5
      %v3787 = vsel %vm1070, %v3785, %v3786
      %v3788 = vrot.slane %v3786, 4
      %v3789 = vrot.slane %v3048, 5
      %v3790 = vsel %vm1070, %v3788, %v3789
      %v3791 = vrot.slane %v3691, 5
      %v3792 = vrot.slane %v3791, 4
      %v3793 = vrot.slane %v3050, 5
      %v3794 = vsel %vm1070, %v3792, %v3793
      %v3795 = vrot.slane %v3793, 4
      %v3796 = vrot.slane %v3051, 5
      %v3797 = vsel %vm1070, %v3795, %v3796
      %v3798 = vrot.slane %v3692, 5
      %v3799 = vrot.slane %v3798, 4
      %v3800 = vrot.slane %v3053, 5
      %v3801 = vsel %vm1070, %v3799, %v3800
      %v3802 = vrot.slane %v3800, 4
      %v3803 = vrot.slane %v3054, 5
      %v3804 = vsel %vm1070, %v3802, %v3803
      %v3805 = vrot.slane %v3693, 5
      %v3806 = vrot.slane %v3805, 4
      %v3807 = vrot.slane %v3056, 5
      %v3808 = vsel %vm1070, %v3806, %v3807
      %v3809 = vrot.slane %v3807, 4
      %v3810 = vrot.slane %v3057, 5
      %v3811 = vsel %vm1070, %v3809, %v3810
      %v3812 = vrot.slane %v3694, 5
      %v3813 = vrot.slane %v3812, 4
      %v3814 = vrot.slane %v3059, 5
      %v3815 = vsel %vm1070, %v3813, %v3814
      %v3816 = vrot.slane %v3814, 4
      %v3817 = vrot.slane %v3060, 5
      %v3818 = vsel %vm1070, %v3816, %v3817
      %v3819 = vrot.slane %v3695, 5
      %v3820 = vrot.slane %v3819, 4
      %v3821 = vrot.slane %v3062, 5
      %v3822 = vsel %vm1070, %v3820, %v3821
      %v3823 = vrot.slane %v3821, 4
      %v3824 = vrot.slane %v3063, 5
      %v3825 = vsel %vm1070, %v3823, %v3824
      %v3826 = vrot.slane %v3696, 5
      %v3827 = vrot.slane %v3826, 4
      %v3828 = vrot.slane %v3065, 5
      %v3829 = vsel %vm1070, %v3827, %v3828
      %v3830 = vrot.slane %v3828, 4
      %v3831 = vrot.slane %v3066, 5
      %v3832 = vsel %vm1070, %v3830, %v3831
      %v3833 = vrot.slane %v3697, 5
      %v3834 = vrot.slane %v3833, 4
      %v3835 = vrot.slane %v3068, 5
      %v3836 = vsel %vm1070, %v3834, %v3835
      %v3837 = vrot.slane %v3835, 4
      %v3838 = vrot.slane %v3069, 5
      %v3839 = vsel %vm1070, %v3837, %v3838
      %v3840 = vrot.slane %v3698, 5
      %v3841 = vrot.slane %v3840, 4
      %v3842 = vrot.slane %v3071, 5
      %v3843 = vsel %vm1070, %v3841, %v3842
      %v3844 = vrot.slane %v3842, 4
      %v3845 = vrot.slane %v3072, 5
      %v3846 = vsel %vm1070, %v3844, %v3845
      %v3847 = vrot.slane %v3699, 5
      %v3848 = vrot.slane %v3847, 4
      %v3849 = vrot.slane %v3074, 5
      %v3850 = vsel %vm1070, %v3848, %v3849
      %v3851 = vrot.slane %v3849, 4
      %v3852 = vrot.slane %v3075, 5
      %v3853 = vsel %vm1070, %v3851, %v3852
      %v3854 = vrot.slane %v3700, 5
      %v3855 = vrot.slane %v3854, 4
      %v3856 = vrot.slane %v3077, 5
      %v3857 = vsel %vm1070, %v3855, %v3856
      %v3858 = vrot.slane %v3856, 4
      %v3859 = vrot.slane %v3078, 5
      %v3860 = vsel %vm1070, %v3858, %v3859
      %s3861 = scalar_lea.vmem %s1, 16
      %v3862 = vld [vmem:[%s3861] sm:$0x3]
      %v3863 = vunpack.c.l.b16 %v3752
      %v3864 = vunpack.c.l.b16 %v3755
      %v3865 = vunpack.c.l.b16 %v3759
      %v3866 = vunpack.c.l.b16 %v3762
      %v3867 = vunpack.c.l.b16 %v3766
      %v3868 = vunpack.c.l.b16 %v3769
      %v3869 = vunpack.c.l.b16 %v3773
      %v3870 = vunpack.c.l.b16 %v3776
      %v3871 = vunpack.c.l.b16 %v3780
      %v3872 = vunpack.c.l.b16 %v3783
      %v3873 = vunpack.c.l.b16 %v3787
      %v3874 = vunpack.c.l.b16 %v3790
      %v3875 = vunpack.c.l.b16 %v3794
      %v3876 = vunpack.c.l.b16 %v3797
      %v3877 = vunpack.c.l.b16 %v3801
      %v3878 = vunpack.c.l.b16 %v3804
      %v3879 = vunpack.c.l.b16 %v3808
      %v3880 = vunpack.c.l.b16 %v3811
      %v3881 = vunpack.c.l.b16 %v3815
      %v3882 = vunpack.c.l.b16 %v3818
      %v3883 = vunpack.c.l.b16 %v3822
      %v3884 = vunpack.c.l.b16 %v3825
      %v3885 = vunpack.c.l.b16 %v3829
      %v3886 = vunpack.c.l.b16 %v3832
      %v3887 = vunpack.c.l.b16 %v3836
      %v3888 = vunpack.c.l.b16 %v3839
      %v3889 = vunpack.c.l.b16 %v3843
      %v3890 = vunpack.c.l.b16 %v3846
      %v3891 = vunpack.c.l.b16 %v3850
      %v3892 = vunpack.c.l.b16 %v3853
      %v3893 = vunpack.c.l.b16 %v3857
      %v3894 = vunpack.c.l.b16 %v3860
      %v3895 = vpack.c.b16 %v3864, %v3863
      %v3896 = vpack.c.b16 %v3866, %v3865
      %v3897 = vpack.c.b16 %v3868, %v3867
      %v3898 = vpack.c.b16 %v3870, %v3869
      %v3899 = vpack.c.b16 %v3872, %v3871
      %v3900 = vpack.c.b16 %v3874, %v3873
      %v3901 = vpack.c.b16 %v3876, %v3875
      %v3902 = vpack.c.b16 %v3878, %v3877
      %v3903 = vpack.c.b16 %v3880, %v3879
      %v3904 = vpack.c.b16 %v3882, %v3881
      %v3905 = vpack.c.b16 %v3884, %v3883
      %v3906 = vpack.c.b16 %v3886, %v3885
      %v3907 = vpack.c.b16 %v3888, %v3887
      %v3908 = vpack.c.b16 %v3890, %v3889
      %v3909 = vpack.c.b16 %v3892, %v3891
      %v3910 = vpack.c.b16 %v3894, %v3893
      %v3912 = vsel %vm658, %v3895, 0
      %v3915 = vsel %vm658, %v3896, 0
      %v3918 = vsel %vm658, %v3897, 0
      %v3921 = vsel %vm658, %v3898, 0
      %v3924 = vsel %vm658, %v3899, 0
      %v3927 = vsel %vm658, %v3900, 0
      %v3930 = vsel %vm658, %v3901, 0
      %v3933 = vsel %vm658, %v3902, 0
      %v3936 = vsel %vm658, %v3903, 0
      %v3939 = vsel %vm658, %v3904, 0
      %v3942 = vsel %vm658, %v3905, 0
      %v3945 = vsel %vm658, %v3906, 0
      %v3948 = vsel %vm658, %v3907, 0
      %v3951 = vsel %vm658, %v3908, 0
      %v3954 = vsel %vm658, %v3909, 0
      %v3957 = vsel %vm658, %v3910, 0
      %v3960 = vsel %vm707, %v3862, 0
      %3962 = vmatpush.bf16.msra.mxu0 0
      %3963 = vmatpush.bf16.msra.mxu0 0
      %3964 = vmatpush.bf16.msra.mxu0 0
      %3965 = vmatpush.bf16.msra.mxu0 0
      %3966 = vmatpush.bf16.msra.mxu0 0
      %3967 = vmatpush.bf16.msra.mxu0 0
      %3968 = vmatpush.bf16.msra.mxu0 0
      %3969 = vmatpush.bf16.msra.mxu0 %v3960
      %3970 = vmatmul.bf16.gmra.mxu0 %v3912
      %v3971 = vpop.f32.mrf.mxu0
      %v3972 = vadd.f32 0.0, %v3971
      %v3973 = vpop.f32.mrf.mxu0
      %v3974 = vadd.f32 0.0, %v3973
      %3975 = vmatmul.bf16.gmra.mxu0 %v3915
      %v3976 = vpop.f32.mrf.mxu0
      %v3977 = vadd.f32 0.0, %v3976
      %v3978 = vpop.f32.mrf.mxu0
      %v3979 = vadd.f32 0.0, %v3978
      %3980 = vmatmul.bf16.gmra.mxu0 %v3918
      %v3981 = vpop.f32.mrf.mxu0
      %v3982 = vadd.f32 0.0, %v3981
      %v3983 = vpop.f32.mrf.mxu0
      %v3984 = vadd.f32 0.0, %v3983
      %3985 = vmatmul.bf16.gmra.mxu0 %v3921
      %v3986 = vpop.f32.mrf.mxu0
      %v3987 = vadd.f32 0.0, %v3986
      %v3988 = vpop.f32.mrf.mxu0
      %v3989 = vadd.f32 0.0, %v3988
      %3990 = vmatmul.bf16.gmra.mxu0 %v3924
      %v3991 = vpop.f32.mrf.mxu0
      %v3992 = vadd.f32 0.0, %v3991
      %v3993 = vpop.f32.mrf.mxu0
      %v3994 = vadd.f32 0.0, %v3993
      %3995 = vmatmul.bf16.gmra.mxu0 %v3927
      %v3996 = vpop.f32.mrf.mxu0
      %v3997 = vadd.f32 0.0, %v3996
      %v3998 = vpop.f32.mrf.mxu0
      %v3999 = vadd.f32 0.0, %v3998
      %4000 = vmatmul.bf16.gmra.mxu0 %v3930
      %v4001 = vpop.f32.mrf.mxu0
      %v4002 = vadd.f32 0.0, %v4001
      %v4003 = vpop.f32.mrf.mxu0
      %v4004 = vadd.f32 0.0, %v4003
      %4005 = vmatmul.bf16.gmra.mxu0 %v3933
      %v4006 = vpop.f32.mrf.mxu0
      %v4007 = vadd.f32 0.0, %v4006
      %v4008 = vpop.f32.mrf.mxu0
      %v4009 = vadd.f32 0.0, %v4008
      %4010 = vmatmul.bf16.gmra.mxu0 %v3936
      %v4011 = vpop.f32.mrf.mxu0
      %v4012 = vadd.f32 0.0, %v4011
      %v4013 = vpop.f32.mrf.mxu0
      %v4014 = vadd.f32 0.0, %v4013
      %4015 = vmatmul.bf16.gmra.mxu0 %v3939
      %v4016 = vpop.f32.mrf.mxu0
      %v4017 = vadd.f32 0.0, %v4016
      %v4018 = vpop.f32.mrf.mxu0
      %v4019 = vadd.f32 0.0, %v4018
      %4020 = vmatmul.bf16.gmra.mxu0 %v3942
      %v4021 = vpop.f32.mrf.mxu0
      %v4022 = vadd.f32 0.0, %v4021
      %v4023 = vpop.f32.mrf.mxu0
      %v4024 = vadd.f32 0.0, %v4023
      %4025 = vmatmul.bf16.gmra.mxu0 %v3945
      %v4026 = vpop.f32.mrf.mxu0
      %v4027 = vadd.f32 0.0, %v4026
      %v4028 = vpop.f32.mrf.mxu0
      %v4029 = vadd.f32 0.0, %v4028
      %4030 = vmatmul.bf16.gmra.mxu0 %v3948
      %v4031 = vpop.f32.mrf.mxu0
      %v4032 = vadd.f32 0.0, %v4031
      %v4033 = vpop.f32.mrf.mxu0
      %v4034 = vadd.f32 0.0, %v4033
      %4035 = vmatmul.bf16.gmra.mxu0 %v3951
      %v4036 = vpop.f32.mrf.mxu0
      %v4037 = vadd.f32 0.0, %v4036
      %v4038 = vpop.f32.mrf.mxu0
      %v4039 = vadd.f32 0.0, %v4038
      %4040 = vmatmul.bf16.gmra.mxu0 %v3954
      %v4041 = vpop.f32.mrf.mxu0
      %v4042 = vadd.f32 0.0, %v4041
      %v4043 = vpop.f32.mrf.mxu0
      %v4044 = vadd.f32 0.0, %v4043
      %4045 = vmatmul.bf16.gmra.mxu0 %v3957
      %v4046 = vpop.f32.mrf.mxu0
      %v4047 = vadd.f32 0.0, %v4046
      %v4048 = vpop.f32.mrf.mxu0
      %v4049 = vadd.f32 0.0, %v4048
      %4050 = vdwg.mxu0
      %v4051 = vadd.f32 %v3653, %v3972
      %v4052 = vadd.f32 %v3654, %v3974
      %v4053 = vadd.f32 %v3655, %v3977
      %v4054 = vadd.f32 %v3656, %v3979
      %v4055 = vadd.f32 %v3657, %v3982
      %v4056 = vadd.f32 %v3658, %v3984
      %v4057 = vadd.f32 %v3659, %v3987
      %v4058 = vadd.f32 %v3660, %v3989
      %v4059 = vadd.f32 %v3661, %v3992
      %v4060 = vadd.f32 %v3662, %v3994
      %v4061 = vadd.f32 %v3663, %v3997
      %v4062 = vadd.f32 %v3664, %v3999
      %v4063 = vadd.f32 %v3665, %v4002
      %v4064 = vadd.f32 %v3666, %v4004
      %v4065 = vadd.f32 %v3667, %v4007
      %v4066 = vadd.f32 %v3668, %v4009
      %v4067 = vadd.f32 %v3669, %v4012
      %v4068 = vadd.f32 %v3670, %v4014
      %v4069 = vadd.f32 %v3671, %v4017
      %v4070 = vadd.f32 %v3672, %v4019
      %v4071 = vadd.f32 %v3673, %v4022
      %v4072 = vadd.f32 %v3674, %v4024
      %v4073 = vadd.f32 %v3675, %v4027
      %v4074 = vadd.f32 %v3676, %v4029
      %v4075 = vadd.f32 %v3677, %v4032
      %v4076 = vadd.f32 %v3678, %v4034
      %v4077 = vadd.f32 %v3679, %v4037
      %v4078 = vadd.f32 %v3680, %v4039
      %v4079 = vadd.f32 %v3681, %v4042
      %v4080 = vadd.f32 %v3682, %v4044
      %v4081 = vadd.f32 %v3683, %v4047
      %v4082 = vadd.f32 %v3684, %v4049
      %v4083 = vld [vmem:[%s2] sm:$0x1]
      %v4085 = vperm.slane %v4083, 0
      %v4087 = vadd.f32 %v4051, %v4085
      %v4088 = vadd.f32 %v4052, %v4085
      %v4089 = vadd.f32 %v4053, %v4085
      %v4090 = vadd.f32 %v4054, %v4085
      %v4091 = vadd.f32 %v4055, %v4085
      %v4092 = vadd.f32 %v4056, %v4085
      %v4093 = vadd.f32 %v4057, %v4085
      %v4094 = vadd.f32 %v4058, %v4085
      %v4095 = vadd.f32 %v4059, %v4085
      %v4096 = vadd.f32 %v4060, %v4085
      %v4097 = vadd.f32 %v4061, %v4085
      %v4098 = vadd.f32 %v4062, %v4085
      %v4099 = vadd.f32 %v4063, %v4085
      %v4100 = vadd.f32 %v4064, %v4085
      %v4101 = vadd.f32 %v4065, %v4085
      %v4102 = vadd.f32 %v4066, %v4085
      %v4103 = vadd.f32 %v4067, %v4085
      %v4104 = vadd.f32 %v4068, %v4085
      %v4105 = vadd.f32 %v4069, %v4085
      %v4106 = vadd.f32 %v4070, %v4085
      %v4107 = vadd.f32 %v4071, %v4085
      %v4108 = vadd.f32 %v4072, %v4085
      %v4109 = vadd.f32 %v4073, %v4085
      %v4110 = vadd.f32 %v4074, %v4085
      %v4111 = vadd.f32 %v4075, %v4085
      %v4112 = vadd.f32 %v4076, %v4085
      %v4113 = vadd.f32 %v4077, %v4085
      %v4114 = vadd.f32 %v4078, %v4085
      %v4115 = vadd.f32 %v4079, %v4085
      %v4116 = vadd.f32 %v4080, %v4085
      %v4117 = vadd.f32 %v4081, %v4085
      %v4118 = vadd.f32 %v4082, %v4085
      %v4119 = vmax.f32 %v4087, 0.0
      %v4120 = vmax.f32 %v4088, 0.0
      %v4121 = vmax.f32 %v4089, 0.0
      %v4122 = vmax.f32 %v4090, 0.0
      %v4123 = vmax.f32 %v4091, 0.0
      %v4124 = vmax.f32 %v4092, 0.0
      %v4125 = vmax.f32 %v4093, 0.0
      %v4126 = vmax.f32 %v4094, 0.0
      %v4127 = vmax.f32 %v4095, 0.0
      %v4128 = vmax.f32 %v4096, 0.0
      %v4129 = vmax.f32 %v4097, 0.0
      %v4130 = vmax.f32 %v4098, 0.0
      %v4131 = vmax.f32 %v4099, 0.0
      %v4132 = vmax.f32 %v4100, 0.0
      %v4133 = vmax.f32 %v4101, 0.0
      %v4134 = vmax.f32 %v4102, 0.0
      %v4135 = vmax.f32 %v4103, 0.0
      %v4136 = vmax.f32 %v4104, 0.0
      %v4137 = vmax.f32 %v4105, 0.0
      %v4138 = vmax.f32 %v4106, 0.0
      %v4139 = vmax.f32 %v4107, 0.0
      %v4140 = vmax.f32 %v4108, 0.0
      %v4141 = vmax.f32 %v4109, 0.0
      %v4142 = vmax.f32 %v4110, 0.0
      %v4143 = vmax.f32 %v4111, 0.0
      %v4144 = vmax.f32 %v4112, 0.0
      %v4145 = vmax.f32 %v4113, 0.0
      %v4146 = vmax.f32 %v4114, 0.0
      %v4147 = vmax.f32 %v4115, 0.0
      %v4148 = vmax.f32 %v4116, 0.0
      %v4149 = vmax.f32 %v4117, 0.0
      %v4150 = vmax.f32 %v4118, 0.0
      %vm4151 = vcmask 64512
      %4152 = vst.msk [vmem:[%s170] sm:$0xff] %vm4151, %v4119
      %4153 = vst.msk [vmem:[%s170 + $0x8] sm:$0xff] %vm4151, %v4120
      %4154 = vst.msk [vmem:[%s170 + $0x10] sm:$0xff] %vm4151, %v4121
      %4155 = vst.msk [vmem:[%s170 + $0x18] sm:$0xff] %vm4151, %v4122
      %4156 = vst.msk [vmem:[%s170 + $0x20] sm:$0xff] %vm4151, %v4123
      %4157 = vst.msk [vmem:[%s170 + $0x28] sm:$0xff] %vm4151, %v4124
      %4158 = vst.msk [vmem:[%s170 + $0x30] sm:$0xff] %vm4151, %v4125
      %4159 = vst.msk [vmem:[%s170 + $0x38] sm:$0xff] %vm4151, %v4126
      %4160 = vst.msk [vmem:[%s170 + $0x40] sm:$0xff] %vm4151, %v4127
      %4161 = vst.msk [vmem:[%s170 + $0x48] sm:$0xff] %vm4151, %v4128
      %4162 = vst.msk [vmem:[%s170 + $0x50] sm:$0xff] %vm4151, %v4129
      %4163 = vst.msk [vmem:[%s170 + $0x58] sm:$0xff] %vm4151, %v4130
      %4164 = vst.msk [vmem:[%s170 + $0x60] sm:$0xff] %vm4151, %v4131
      %4165 = vst.msk [vmem:[%s170 + $0x68] sm:$0xff] %vm4151, %v4132
      %4166 = vst.msk [vmem:[%s170 + $0x70] sm:$0xff] %vm4151, %v4133
      %4167 = vst.msk [vmem:[%s170 + $0x78] sm:$0xff] %vm4151, %v4134
      %4168 = vst.msk [vmem:[%s170 + $0x80] sm:$0xff] %vm4151, %v4135
      %4169 = vst.msk [vmem:[%s170 + $0x88] sm:$0xff] %vm4151, %v4136
      %4170 = vst.msk [vmem:[%s170 + $0x90] sm:$0xff] %vm4151, %v4137
      %4171 = vst.msk [vmem:[%s170 + $0x98] sm:$0xff] %vm4151, %v4138
      %4172 = vst.msk [vmem:[%s170 + $0xa0] sm:$0xff] %vm4151, %v4139
      %4173 = vst.msk [vmem:[%s170 + $0xa8] sm:$0xff] %vm4151, %v4140
      %4174 = vst.msk [vmem:[%s170 + $0xb0] sm:$0xff] %vm4151, %v4141
      %4175 = vst.msk [vmem:[%s170 + $0xb8] sm:$0xff] %vm4151, %v4142
      %4176 = vst.msk [vmem:[%s170 + $0xc0] sm:$0xff] %vm4151, %v4143
      %4177 = vst.msk [vmem:[%s170 + $0xc8] sm:$0xff] %vm4151, %v4144
      %4178 = vst.msk [vmem:[%s170 + $0xd0] sm:$0xff] %vm4151, %v4145
      %4179 = vst.msk [vmem:[%s170 + $0xd8] sm:$0xff] %vm4151, %v4146
      %4180 = vst.msk [vmem:[%s170 + $0xe0] sm:$0xff] %vm4151, %v4147
      %4181 = vst.msk [vmem:[%s170 + $0xe8] sm:$0xff] %vm4151, %v4148
      %4182 = vst.msk [vmem:[%s170 + $0xf0] sm:$0xff] %vm4151, %v4149
      %4183 = vst.msk [vmem:[%s170 + $0xf8] sm:$0xff] %vm4151, %v4150
      %p4184 = scmp.lt.s32.totalorder %s14, 1
      %s4185 = scalar_select %p4184, %s14, 1
      %s4186 = smul.addr %s4185, 32
      %s4187 = smul.addr %s4186, 8
      %s4188 = scalar_lea.vmem %s3, %s4187
      // Predicated region
      $region33: #{conv2d_bn_relu.1} parent=31 // pred_check
        %p4189 = pneg %p100
      $region34: #{conv2d_bn_relu.1} parent=31 // pred_check_branch
        %4191 = sbr.rel (%p4189) target = $region36
      $region35: #{conv2d_bn_relu.1} parent=31 // pred_region
        _
      $region36: #{conv2d_bn_relu.1} parent=31 // pred_fallthru
        _
    $region32: #{conv2d_bn_relu.1} parent=5 // pred_fallthru
      _
    %p4192 = scmp.le.s32.totalorder 2, %s9
    // Predicated region
    $region37: #{conv2d_bn_relu.1} parent=5 // pred_check
      %p4193 = pneg %p4192
    $region38: #{conv2d_bn_relu.1} parent=5 // pred_check_branch
      %4195 = sbr.rel (%p4193) target = $region40
    $region39: #{conv2d_bn_relu.1} parent=5 // pred_region
      %s4196 = ssub.s32 %s9, 2
      // Predicated region
      $region41: #{conv2d_bn_relu.1} parent=39 // pred_check
        %p4197 = pneg %p106
      $region42: #{conv2d_bn_relu.1} parent=39 // pred_check_branch
        %4199 = sbr.rel (%p4197) target = $region44
      $region43: #{conv2d_bn_relu.1} parent=39 // pred_region
        %p4200 = scmp.lt.s32.totalorder %s15, 1
        %s4201 = scalar_select %p4200, %s15, 1
        %s4202 = smul.addr %s4201, 32
        %s4203 = smul.addr %s4202, 8
        %s4204 = scalar_lea.vmem %s3, %s4203
      $region44: #{conv2d_bn_relu.1} parent=39 // pred_fallthru
        _
    $region40: #{conv2d_bn_relu.1} parent=5 // pred_fallthru
      _
  $region6: #{conv2d_bn_relu.1} parent=0 // loop_footer
    %s13 = sadd.s32 1, %s9
  $region7: #{conv2d_bn_relu.1} parent=0 // loop_footer_branch
    %8 = sbr.rel target = $region3
  $region8: #{conv2d_bn_relu.1} parent=0 // loop_exit
    _

</llo_original>
